<compile_context>
chip_gen: v7x
topology: tpu7x:2x2x1
jax: 0.10.0
libtpu: 0.0.40
codegen_flags: <defaults>
</compile_context>

<pallas_src>
import functools

import jax
import jax.numpy as jnp
from jax.experimental import pallas as pl


BP = 8        # sublane-padded batch
LANES = 128   # lane width of every dense weight block / activation
GW = 128      # per-gate lane block width in the packed LSTM slab


# ----------------------------------------------------------------------------
# Fused Pallas kernel: whole Recommender forward pass
# ----------------------------------------------------------------------------
def _fused_recommender_kernel(x_ref, w_ref, lstm_ref, out_ref, *, cfg):
    T = cfg["T"]
    n_don = cfg["n_donor_linear"]
    n_proj = cfg["n_project_linear"]
    n_lstm = cfg["n_lstm_layers"]
    n_l1 = cfg["n_linear1"]
    bias_row0 = cfg["bias_row0"]
    lstm_bias_row0 = cfg["lstm_bias_row0"]

    def wblk(i):                       # i-th (128,128) dense weight block
        return w_ref[i * LANES:(i + 1) * LANES, :]

    def brow(i):                       # i-th (1,128) dense bias row
        return w_ref[bias_row0 + i:bias_row0 + i + 1, :]

    def dense(x, wi, bi, relu=True):
        y = jnp.dot(x, wblk(wi), preferred_element_type=jnp.float32) + brow(bi)
        return jnp.maximum(y, 0.0) if relu else y

    wi = 0
    bi = 0

    # ------------------------- donor tower -------------------------
    x = x_ref[0:BP, :]
    for _ in range(n_don):
        x = dense(x, wi, bi)
        wi += 1
        bi += 1
    d_emb = x

    # ------------------------ project tower ------------------------
    x = x_ref[BP:2 * BP, :]
    for _ in range(n_proj):
        x = dense(x, wi, bi)
        wi += 1
        bi += 1
    p_emb = x

    # --------------------- LSTM stack (unrolled) -------------------
    # Input sequence is time-major: row t*BP + b  (zero-padded to 128 lanes).
    x_all = x_ref[2 * BP:2 * BP + T * BP, :]          # (T*BP, 128)
    h = None
    for layer in range(n_lstm):
        w_ih = lstm_ref[layer * 2 * LANES:layer * 2 * LANES + LANES, :]
        w_hh = lstm_ref[layer * 2 * LANES + LANES:(layer + 1) * 2 * LANES, :]
        b_g = lstm_ref[lstm_bias_row0 + layer:lstm_bias_row0 + layer + 1, :]

        # One batched input->gate projection for ALL timesteps (not on the
        # serial recurrence chain); gate biases folded in once.
        pre = jnp.dot(x_all, w_ih, preferred_element_type=jnp.float32) + b_g

        h = jnp.zeros((BP, LANES), jnp.float32)
        c = jnp.zeros((BP, LANES), jnp.float32)
        outs = []
        for t in range(T):
            # Single fused recurrent matmul per step; gates packed [i|f|o|g]
            # in 128-lane blocks -> all slicing below is vreg-aligned (free).
            gates = pre[t * BP:(t + 1) * BP, :] + jnp.dot(
                h, w_hh, preferred_element_type=jnp.float32)
            sig = jax.nn.sigmoid(gates[:, :3 * GW])   # [i | f | o]
            g_gate = jnp.tanh(gates[:, 3 * GW:])      # [g]
            i_gate = sig[:, 0:GW]
            f_gate = sig[:, GW:2 * GW]
            o_gate = sig[:, 2 * GW:3 * GW]
            c = f_gate * c + i_gate * g_gate
            h = o_gate * jnp.tanh(c)
            outs.append(h)
        x_all = jnp.concatenate(outs, axis=0)         # feeds next LSTM layer
    hn = h                                            # hn[-1] of the stack

    # ---------------- head: torch.cat folded into 3 matmuls --------
    x = (jnp.dot(d_emb, wblk(wi), preferred_element_type=jnp.float32)
         + jnp.dot(p_emb, wblk(wi + 1), preferred_element_type=jnp.float32)
         + jnp.dot(hn, wblk(wi + 2), preferred_element_type=jnp.float32)
         + brow(bi))
    wi += 3
    bi += 1
    x = jnp.maximum(x, 0.0)
    for _ in range(n_l1 - 1):
        x = dense(x, wi, bi)
        wi += 1
        bi += 1
    # NOTE: the PyTorch module builds linear2_lst with range(n_linear1)
    # (not n_linear2) — reproduce that exactly.
    for _ in range(n_l1):
        x = dense(x, wi, bi)
        wi += 1
        bi += 1

    # Final sigmoid; only column 0 is real (wrapper slices it out).
    y = dense(x, wi, bi, relu=False)
    out_ref[...] = jax.nn.sigmoid(y).astype(out_ref.dtype)


# ----------------------------------------------------------------------------
# Parameter construction (PyTorch-default-style uniform init, raw layout)
# ----------------------------------------------------------------------------
def make_linear_params(key, fan_in, fan_out):
    k1, k2 = jax.random.split(key)
    bound = 1.0 / (fan_in ** 0.5)
    w = jax.random.uniform(k1, (fan_out, fan_in), jnp.float32, -bound, bound)
    b = jax.random.uniform(k2, (fan_out,), jnp.float32, -bound, bound)
    return {"w": jnp.transpose(w), "b": b}          # w: (fan_in, fan_out)


def make_lstm_params(key, input_size, hidden, num_layers):
    layers = []
    bound = 1.0 / (hidden ** 0.5)
    for l in range(num_layers):
        key, k1, k2, k3, k4 = jax.random.split(key, 5)
        in_l = input_size if l == 0 else hidden
        layers.append({
            "w_ih": jax.random.uniform(k1, (4 * hidden, in_l), jnp.float32, -bound, bound),
            "w_hh": jax.random.uniform(k2, (4 * hidden, hidden), jnp.float32, -bound, bound),
            "b_ih": jax.random.uniform(k3, (4 * hidden,), jnp.float32, -bound, bound),
            "b_hh": jax.random.uniform(k4, (4 * hidden,), jnp.float32, -bound, bound),
        })
    return layers


def make_recommender_params(key, *, n_donor_columns, donor_linear, n_donor_linear,
                            n_project_columns, project_linear, n_project_linear,
                            n_project_history, project_history_lstm_hidden,
                            n_project_history_lstm, linear1_dim, n_linear1,
                            linear2_dim, n_linear2):
    del n_linear2  # the module's forward never uses it (loops n_linear1)
    params = {}
    key, *ks = jax.random.split(key, n_donor_linear + 1)
    params["donor"] = [
        make_linear_params(ks[i], n_donor_columns if i == 0 else donor_linear,
                           donor_linear) for i in range(n_donor_linear)]
    key, *ks = jax.random.split(key, n_project_linear + 1)
    params["project"] = [
        make_linear_params(ks[i], n_project_columns if i == 0 else project_linear,
                           project_linear) for i in range(n_project_linear)]
    key, klstm = jax.random.split(key)
    params["lstm"] = make_lstm_params(klstm, n_project_history,
                                      project_history_lstm_hidden,
                                      n_project_history_lstm)
    concat_dim = donor_linear + project_linear + project_history_lstm_hidden
    key, *ks = jax.random.split(key, n_linear1 + 1)
    params["linear1"] = [
        make_linear_params(ks[i], concat_dim if i == 0 else linear1_dim,
                           linear1_dim) for i in range(n_linear1)]
    # PyTorch module quirk: linear2_lst is built with range(n_linear1).
    key, *ks = jax.random.split(key, n_linear1 + 1)
    params["linear2"] = [
        make_linear_params(ks[i], linear1_dim if i == 0 else linear2_dim,
                           linear2_dim) for i in range(n_linear1)]
    key, kf = jax.random.split(key)
    params["final"] = make_linear_params(kf, linear2_dim, 1)
    return params


# ----------------------------------------------------------------------------
# Host-side slab packing (done ONCE, outside jit)
# ----------------------------------------------------------------------------
def _pad_block(w, rows=LANES, cols=LANES):
    out = jnp.zeros((rows, cols), jnp.float32)
    return out.at[:w.shape[0], :w.shape[1]].set(w.astype(jnp.float32))


def pack_dense_slab(params, donor_linear, project_linear):
    """All non-LSTM weights/biases in one (N*128 + bias_rows, 128) slab."""
    blocks, bias_rows = [], []

    def add(w, b):
        blocks.append(_pad_block(w))
        bias_rows.append(_pad_block(b.reshape(1, -1), rows=1))

    for layer in params["donor"]:
        add(layer["w"], layer["b"])
    for layer in params["project"]:
        add(layer["w"], layer["b"])
    # First head layer: split the concat weight into its three row blocks so
    # the kernel folds torch.cat into three accumulating matmuls.
    w0 = params["linear1"][0]["w"]
    blocks.append(_pad_block(w0[:donor_linear]))
    blocks.append(_pad_block(w0[donor_linear:donor_linear + project_linear]))
    blocks.append(_pad_block(w0[donor_linear + project_linear:]))
    bias_rows.append(_pad_block(params["linear1"][0]["b"].reshape(1, -1), rows=1))
    for layer in params["linear1"][1:]:
        add(layer["w"], layer["b"])
    for layer in params["linear2"]:
        add(layer["w"], layer["b"])
    add(params["final"]["w"], params["final"]["b"])

    bias_row0 = len(blocks) * LANES
    pad = (-len(bias_rows)) % 8
    if pad:
        bias_rows.append(jnp.zeros((pad, LANES), jnp.float32))
    return jnp.concatenate(blocks + bias_rows, axis=0), bias_row0


_GATE_ORDER = (0, 1, 3, 2)   # PyTorch row order (i,f,g,o) -> packed (i,f,o,g)


def pack_lstm_slab(lstm_layers, hidden):
    """Per layer: W_ih (128,512), W_hh (128,512); gate biases as trailing rows."""
    w_rows = []
    for layer in lstm_layers:
        for w in (layer["w_ih"], layer["w_hh"]):       # (4H, in_dim)
            blk = jnp.zeros((LANES, 4 * GW), jnp.float32)
            for slot, g in enumerate(_GATE_ORDER):
                wg = jnp.transpose(w[g * hidden:(g + 1) * hidden, :])  # (in, H)
                blk = blk.at[:wg.shape[0], slot * GW:slot * GW + hidden].set(wg)
            w_rows.append(blk)
    lstm_bias_row0 = len(lstm_layers) * 2 * LANES
    bias_rows = []
    for layer in lstm_layers:
        b = layer["b_ih"] + layer["b_hh"]
        row = jnp.zeros((1, 4 * GW), jnp.float32)
        for slot, g in enumerate(_GATE_ORDER):
            row = row.at[0, slot * GW:slot * GW + hidden].set(
                b[g * hidden:(g + 1) * hidden])
        bias_rows.append(row)
    pad = (-len(bias_rows)) % 8
    if pad:
        bias_rows.append(jnp.zeros((pad, 4 * GW), jnp.float32))
    return jnp.concatenate(w_rows + bias_rows, axis=0), lstm_bias_row0


def pack_input_slab(donor, project, project_history):
    """donor / project / time-major history stacked into one (8+8+T*8, 128)."""
    def pad2(x):
        out = jnp.zeros((BP, LANES), jnp.float32)
        return out.at[:x.shape[0], :x.shape[1]].set(x.astype(jnp.float32))

    T = project_history.shape[1]
    ph_tm = jnp.transpose(project_history, (1, 0, 2))   # (T, B, I)
    rows = [pad2(donor), pad2(project)] + [pad2(ph_tm[t]) for t in range(T)]
    return jnp.concatenate(rows, axis=0)


# ----------------------------------------------------------------------------
# Forward pass: one fused pallas_call (grid-less, whole arrays in VMEM)
# ----------------------------------------------------------------------------
def recommender_forward(slabs, donor, project, project_history, *, cfg):
    B = donor.shape[0]
    assert B <= BP, "TODO(synk): add a parallel batch grid axis for B > 8"
    T = project_history.shape[1]
    x_slab = pack_input_slab(donor, project, project_history)
    full_cfg = dict(cfg, T=T)
    y_pad = pl.pallas_call(
        functools.partial(_fused_recommender_kernel, cfg=full_cfg),
        out_shape=jax.ShapeDtypeStruct((BP, LANES), jnp.float32),
    )(x_slab, slabs["dense"], slabs["lstm"])
    return y_pad[:B, :1]


# ----------------------------------------------------------------------------
# Pure-JAX reference (natural shapes, PyTorch semantics) for correctness
# ----------------------------------------------------------------------------
def reference_forward(params, donor, project, project_history, *, hidden):
    def relu(v):
        return jnp.maximum(v, 0.0)

    x = donor
    for layer in params["donor"]:
        x = relu(x @ layer["w"] + layer["b"])
    d_emb = x
    x = project
    for layer in params["project"]:
        x = relu(x @ layer["w"] + layer["b"])
    p_emb = x

    B, T, _ = project_history.shape
    H = hidden
    seq = [project_history[:, t, :] for t in range(T)]
    hn = None
    for layer in params["lstm"]:
        w_ih, w_hh = layer["w_ih"], layer["w_hh"]
        b = layer["b_ih"] + layer["b_hh"]
        h = jnp.zeros((B, H), jnp.float32)
        c = jnp.zeros((B, H), jnp.float32)
        outs = []
        for t in range(T):
            g = seq[t] @ w_ih.T + h @ w_hh.T + b
            i_g = jax.nn.sigmoid(g[:, 0:H])
            f_g = jax.nn.sigmoid(g[:, H:2 * H])
            g_g = jnp.tanh(g[:, 2 * H:3 * H])
            o_g = jax.nn.sigmoid(g[:, 3 * H:4 * H])
            c = f_g * c + i_g * g_g
            h = o_g * jnp.tanh(c)
            outs.append(h)
        seq = outs
        hn = h

    x = jnp.concatenate([d_emb, p_emb, hn], axis=1)
    for layer in params["linear1"]:
        x = relu(x @ layer["w"] + layer["b"])
    for layer in params["linear2"]:
        x = relu(x @ layer["w"] + layer["b"])
    final = params["final"]
    return jax.nn.sigmoid(x @ final["w"] + final["b"])


# ----------------------------------------------------------------------------
# Main
# ----------------------------------------------------------------------------
if __name__ == "__main__":
    n_donor_columns = 16
    donor_linear = 32
    n_donor_linear = 2
    n_project_columns = 12
    project_linear = 32
    n_project_linear = 2
    n_project_history = 8
    project_history_lstm_hidden = 16
    n_project_history_lstm = 2
    linear1_dim = 64
    n_linear1 = 2
    linear2_dim = 32
    n_linear2 = 2   # unused by the original module's forward (loops n_linear1)

    B, T = 4, 8

    key = jax.random.PRNGKey(0)
    kp, kd, kpr, kh = jax.random.split(key, 4)

    params = make_recommender_params(
        kp,
        n_donor_columns=n_donor_columns, donor_linear=donor_linear,
        n_donor_linear=n_donor_linear,
        n_project_columns=n_project_columns, project_linear=project_linear,
        n_project_linear=n_project_linear,
        n_project_history=n_project_history,
        project_history_lstm_hidden=project_history_lstm_hidden,
        n_project_history_lstm=n_project_history_lstm,
        linear1_dim=linear1_dim, n_linear1=n_linear1,
        linear2_dim=linear2_dim, n_linear2=n_linear2,
    )

    donor = jax.random.normal(kd, (B, n_donor_columns), jnp.float32)
    project = jax.random.normal(kpr, (B, n_project_columns), jnp.float32)
    project_history = jax.random.normal(
        kh, (B, T, n_project_history), jnp.float32)

    # Pack weights into slabs once (host side).
    dense_slab, bias_row0 = pack_dense_slab(params, donor_linear, project_linear)
    lstm_slab, lstm_bias_row0 = pack_lstm_slab(
        params["lstm"], project_history_lstm_hidden)
    slabs = {"dense": dense_slab, "lstm": lstm_slab}

    cfg = {
        "n_donor_linear": n_donor_linear,
        "n_project_linear": n_project_linear,
        "n_lstm_layers": n_project_history_lstm,
        "n_linear1": n_linear1,
        "bias_row0": int(bias_row0),
        "lstm_bias_row0": int(lstm_bias_row0),
    }

    fwd = jax.jit(functools.partial(recommender_forward, cfg=cfg))
    y = fwd(slabs, donor, project, project_history)
    y = jax.block_until_ready(y)

    y_ref = reference_forward(params, donor, project, project_history,
                              hidden=project_history_lstm_hidden)
    assert y.shape == (B, 1), y.shape
    assert jnp.allclose(y, y_ref, atol=1e-4, rtol=1e-4), (y, y_ref)

    print("KERNEL_OK")
</pallas_src>

<mosaic_0001>
module attributes {stable_mosaic.version = 11 : i64} {
  func.func @_fused_recommender_kernel(%arg0: memref<80x128xf32, #tpu.memory_space<vmem>>, %arg1: memref<1424x128xf32, #tpu.memory_space<vmem>>, %arg2: memref<520x512xf32, #tpu.memory_space<vmem>>, %arg3: memref<8x128xf32, #tpu.memory_space<vmem>>) attributes {dimension_semantics = [], scalar_prefetch = 0 : i64, scratch_operands = 0 : i64, tpu.core_type = #tpu.core_type<tc>} {
    %c0 = arith.constant 0 : index
    %c0_0 = arith.constant 0 : index
    %0 = vector.load %arg0[%c0, %c0_0] : memref<80x128xf32, #tpu.memory_space<vmem>>, vector<8x128xf32>
    %c0_1 = arith.constant 0 : index
    %c0_2 = arith.constant 0 : index
    %1 = vector.load %arg1[%c0_1, %c0_2] : memref<1424x128xf32, #tpu.memory_space<vmem>>, vector<128x128xf32>
    %cst = arith.constant dense<0.000000e+00> : vector<8x128xf32>
    %2 = tpu.matmul %0, %1, %cst {dimension_numbers = #tpu.dot_dimension_numbers<[1], [0], [0], [1], [0, 0, 1, 1], [], []>} : vector<8x128xf32>, vector<128x128xf32>, vector<8x128xf32> -> vector<8x128xf32>
    %c1408 = arith.constant 1408 : index
    %c0_3 = arith.constant 0 : index
    %3 = vector.load %arg1[%c1408, %c0_3] : memref<1424x128xf32, #tpu.memory_space<vmem>>, vector<1x128xf32>
    %4 = vector.broadcast %3 : vector<1x128xf32> to vector<8x128xf32>
    %5 = arith.addf %2, %4 : vector<8x128xf32>
    %cst_4 = arith.constant 0.000000e+00 : f32
    %6 = vector.broadcast %cst_4 : f32 to vector<8x128xf32>
    %7 = arith.maximumf %5, %6 : vector<8x128xf32>
    %c128 = arith.constant 128 : index
    %c0_5 = arith.constant 0 : index
    %8 = vector.load %arg1[%c128, %c0_5] : memref<1424x128xf32, #tpu.memory_space<vmem>>, vector<128x128xf32>
    %cst_6 = arith.constant dense<0.000000e+00> : vector<8x128xf32>
    %9 = tpu.matmul %7, %8, %cst_6 {dimension_numbers = #tpu.dot_dimension_numbers<[1], [0], [0], [1], [0, 0, 1, 1], [], []>} : vector<8x128xf32>, vector<128x128xf32>, vector<8x128xf32> -> vector<8x128xf32>
    %c1409 = arith.constant 1409 : index
    %c0_7 = arith.constant 0 : index
    %10 = vector.load %arg1[%c1409, %c0_7] : memref<1424x128xf32, #tpu.memory_space<vmem>>, vector<1x128xf32>
    %11 = vector.broadcast %10 : vector<1x128xf32> to vector<8x128xf32>
    %12 = arith.addf %9, %11 : vector<8x128xf32>
    %cst_8 = arith.constant 0.000000e+00 : f32
    %13 = vector.broadcast %cst_8 : f32 to vector<8x128xf32>
    %14 = arith.maximumf %12, %13 : vector<8x128xf32>
    %c8 = arith.constant 8 : index
    %c0_9 = arith.constant 0 : index
    %15 = vector.load %arg0[%c8, %c0_9] : memref<80x128xf32, #tpu.memory_space<vmem>>, vector<8x128xf32>
    %c256 = arith.constant 256 : index
    %c0_10 = arith.constant 0 : index
    %16 = vector.load %arg1[%c256, %c0_10] : memref<1424x128xf32, #tpu.memory_space<vmem>>, vector<128x128xf32>
    %cst_11 = arith.constant dense<0.000000e+00> : vector<8x128xf32>
    %17 = tpu.matmul %15, %16, %cst_11 {dimension_numbers = #tpu.dot_dimension_numbers<[1], [0], [0], [1], [0, 0, 1, 1], [], []>} : vector<8x128xf32>, vector<128x128xf32>, vector<8x128xf32> -> vector<8x128xf32>
    %c1410 = arith.constant 1410 : index
    %c0_12 = arith.constant 0 : index
    %18 = vector.load %arg1[%c1410, %c0_12] : memref<1424x128xf32, #tpu.memory_space<vmem>>, vector<1x128xf32>
    %19 = vector.broadcast %18 : vector<1x128xf32> to vector<8x128xf32>
    %20 = arith.addf %17, %19 : vector<8x128xf32>
    %cst_13 = arith.constant 0.000000e+00 : f32
    %21 = vector.broadcast %cst_13 : f32 to vector<8x128xf32>
    %22 = arith.maximumf %20, %21 : vector<8x128xf32>
    %c384 = arith.constant 384 : index
    %c0_14 = arith.constant 0 : index
    %23 = vector.load %arg1[%c384, %c0_14] : memref<1424x128xf32, #tpu.memory_space<vmem>>, vector<128x128xf32>
    %cst_15 = arith.constant dense<0.000000e+00> : vector<8x128xf32>
    %24 = tpu.matmul %22, %23, %cst_15 {dimension_numbers = #tpu.dot_dimension_numbers<[1], [0], [0], [1], [0, 0, 1, 1], [], []>} : vector<8x128xf32>, vector<128x128xf32>, vector<8x128xf32> -> vector<8x128xf32>
    %c1411 = arith.constant 1411 : index
    %c0_16 = arith.constant 0 : index
    %25 = vector.load %arg1[%c1411, %c0_16] : memref<1424x128xf32, #tpu.memory_space<vmem>>, vector<1x128xf32>
    %26 = vector.broadcast %25 : vector<1x128xf32> to vector<8x128xf32>
    %27 = arith.addf %24, %26 : vector<8x128xf32>
    %cst_17 = arith.constant 0.000000e+00 : f32
    %28 = vector.broadcast %cst_17 : f32 to vector<8x128xf32>
    %29 = arith.maximumf %27, %28 : vector<8x128xf32>
    %c16 = arith.constant 16 : index
    %c0_18 = arith.constant 0 : index
    %30 = vector.load %arg0[%c16, %c0_18] : memref<80x128xf32, #tpu.memory_space<vmem>>, vector<64x128xf32>
    %c0_19 = arith.constant 0 : index
    %c0_20 = arith.constant 0 : index
    %31 = vector.load %arg2[%c0_19, %c0_20] : memref<520x512xf32, #tpu.memory_space<vmem>>, vector<128x512xf32>
    %c128_21 = arith.constant 128 : index
    %c0_22 = arith.constant 0 : index
    %32 = vector.load %arg2[%c128_21, %c0_22] : memref<520x512xf32, #tpu.memory_space<vmem>>, vector<128x512xf32>
    %c512 = arith.constant 512 : index
    %c0_23 = arith.constant 0 : index
    %33 = vector.load %arg2[%c512, %c0_23] : memref<520x512xf32, #tpu.memory_space<vmem>>, vector<1x512xf32>
    %cst_24 = arith.constant dense<0.000000e+00> : vector<64x512xf32>
    %34 = tpu.matmul %30, %31, %cst_24 {dimension_numbers = #tpu.dot_dimension_numbers<[1], [0], [0], [1], [0, 0, 1, 1], [], []>} : vector<64x128xf32>, vector<128x512xf32>, vector<64x512xf32> -> vector<64x512xf32>
    %35 = vector.broadcast %33 : vector<1x512xf32> to vector<64x512xf32>
    %36 = arith.addf %34, %35 : vector<64x512xf32>
    %cst_25 = arith.constant 0.000000e+00 : f32
    %37 = vector.broadcast %cst_25 : f32 to vector<8x128xf32>
    %cst_26 = arith.constant 0.000000e+00 : f32
    %38 = vector.broadcast %cst_26 : f32 to vector<8x128xf32>
    %39 = vector.extract_strided_slice %36 {offsets = [0, 0], sizes = [8, 512], strides = [1, 1]} : vector<64x512xf32> to vector<8x512xf32>
    %cst_27 = arith.constant dense<0.000000e+00> : vector<8x512xf32>
    %40 = tpu.matmul %37, %32, %cst_27 {dimension_numbers = #tpu.dot_dimension_numbers<[1], [0], [0], [1], [0, 0, 1, 1], [], []>} : vector<8x128xf32>, vector<128x512xf32>, vector<8x512xf32> -> vector<8x512xf32>
    %41 = arith.addf %39, %40 : vector<8x512xf32>
    %42 = vector.extract_strided_slice %41 {offsets = [0, 0], sizes = [8, 384], strides = [1, 1]} : vector<8x512xf32> to vector<8x384xf32>
    %43 = arith.negf %42 : vector<8x384xf32>
    %44 = math.exp %43 : vector<8x384xf32>
    %cst_28 = arith.constant 1.000000e+00 : f32
    %45 = vector.broadcast %cst_28 : f32 to vector<8x384xf32>
    %46 = arith.addf %45, %44 : vector<8x384xf32>
    %47 = arith.divf %45, %46 : vector<8x384xf32>
    %48 = vector.extract_strided_slice %41 {offsets = [0, 384], sizes = [8, 128], strides = [1, 1]} : vector<8x512xf32> to vector<8x128xf32>
    %49 = math.tanh %48 : vector<8x128xf32>
    %50 = vector.extract_strided_slice %47 {offsets = [0, 0], sizes = [8, 128], strides = [1, 1]} : vector<8x384xf32> to vector<8x128xf32>
    %51 = vector.extract_strided_slice %47 {offsets = [0, 128], sizes = [8, 128], strides = [1, 1]} : vector<8x384xf32> to vector<8x128xf32>
    %52 = vector.extract_strided_slice %47 {offsets = [0, 256], sizes = [8, 128], strides = [1, 1]} : vector<8x384xf32> to vector<8x128xf32>
    %53 = arith.mulf %51, %38 : vector<8x128xf32>
    %54 = arith.mulf %50, %49 : vector<8x128xf32>
    %55 = arith.addf %53, %54 : vector<8x128xf32>
    %56 = math.tanh %55 : vector<8x128xf32>
    %57 = arith.mulf %52, %56 : vector<8x128xf32>
    %58 = vector.extract_strided_slice %36 {offsets = [8, 0], sizes = [8, 512], strides = [1, 1]} : vector<64x512xf32> to vector<8x512xf32>
    %cst_29 = arith.constant dense<0.000000e+00> : vector<8x512xf32>
    %59 = tpu.matmul %57, %32, %cst_29 {dimension_numbers = #tpu.dot_dimension_numbers<[1], [0], [0], [1], [0, 0, 1, 1], [], []>} : vector<8x128xf32>, vector<128x512xf32>, vector<8x512xf32> -> vector<8x512xf32>
    %60 = arith.addf %58, %59 : vector<8x512xf32>
    %61 = vector.extract_strided_slice %60 {offsets = [0, 0], sizes = [8, 384], strides = [1, 1]} : vector<8x512xf32> to vector<8x384xf32>
    %62 = arith.negf %61 : vector<8x384xf32>
    %63 = math.exp %62 : vector<8x384xf32>
    %cst_30 = arith.constant 1.000000e+00 : f32
    %64 = vector.broadcast %cst_30 : f32 to vector<8x384xf32>
    %65 = arith.addf %64, %63 : vector<8x384xf32>
    %66 = arith.divf %64, %65 : vector<8x384xf32>
    %67 = vector.extract_strided_slice %60 {offsets = [0, 384], sizes = [8, 128], strides = [1, 1]} : vector<8x512xf32> to vector<8x128xf32>
    %68 = math.tanh %67 : vector<8x128xf32>
    %69 = vector.extract_strided_slice %66 {offsets = [0, 0], sizes = [8, 128], strides = [1, 1]} : vector<8x384xf32> to vector<8x128xf32>
    %70 = vector.extract_strided_slice %66 {offsets = [0, 128], sizes = [8, 128], strides = [1, 1]} : vector<8x384xf32> to vector<8x128xf32>
    %71 = vector.extract_strided_slice %66 {offsets = [0, 256], sizes = [8, 128], strides = [1, 1]} : vector<8x384xf32> to vector<8x128xf32>
    %72 = arith.mulf %70, %55 : vector<8x128xf32>
    %73 = arith.mulf %69, %68 : vector<8x128xf32>
    %74 = arith.addf %72, %73 : vector<8x128xf32>
    %75 = math.tanh %74 : vector<8x128xf32>
    %76 = arith.mulf %71, %75 : vector<8x128xf32>
    %77 = vector.extract_strided_slice %36 {offsets = [16, 0], sizes = [8, 512], strides = [1, 1]} : vector<64x512xf32> to vector<8x512xf32>
    %cst_31 = arith.constant dense<0.000000e+00> : vector<8x512xf32>
    %78 = tpu.matmul %76, %32, %cst_31 {dimension_numbers = #tpu.dot_dimension_numbers<[1], [0], [0], [1], [0, 0, 1, 1], [], []>} : vector<8x128xf32>, vector<128x512xf32>, vector<8x512xf32> -> vector<8x512xf32>
    %79 = arith.addf %77, %78 : vector<8x512xf32>
    %80 = vector.extract_strided_slice %79 {offsets = [0, 0], sizes = [8, 384], strides = [1, 1]} : vector<8x512xf32> to vector<8x384xf32>
    %81 = arith.negf %80 : vector<8x384xf32>
    %82 = math.exp %81 : vector<8x384xf32>
    %cst_32 = arith.constant 1.000000e+00 : f32
    %83 = vector.broadcast %cst_32 : f32 to vector<8x384xf32>
    %84 = arith.addf %83, %82 : vector<8x384xf32>
    %85 = arith.divf %83, %84 : vector<8x384xf32>
    %86 = vector.extract_strided_slice %79 {offsets = [0, 384], sizes = [8, 128], strides = [1, 1]} : vector<8x512xf32> to vector<8x128xf32>
    %87 = math.tanh %86 : vector<8x128xf32>
    %88 = vector.extract_strided_slice %85 {offsets = [0, 0], sizes = [8, 128], strides = [1, 1]} : vector<8x384xf32> to vector<8x128xf32>
    %89 = vector.extract_strided_slice %85 {offsets = [0, 128], sizes = [8, 128], strides = [1, 1]} : vector<8x384xf32> to vector<8x128xf32>
    %90 = vector.extract_strided_slice %85 {offsets = [0, 256], sizes = [8, 128], strides = [1, 1]} : vector<8x384xf32> to vector<8x128xf32>
    %91 = arith.mulf %89, %74 : vector<8x128xf32>
    %92 = arith.mulf %88, %87 : vector<8x128xf32>
    %93 = arith.addf %91, %92 : vector<8x128xf32>
    %94 = math.tanh %93 : vector<8x128xf32>
    %95 = arith.mulf %90, %94 : vector<8x128xf32>
    %96 = vector.extract_strided_slice %36 {offsets = [24, 0], sizes = [8, 512], strides = [1, 1]} : vector<64x512xf32> to vector<8x512xf32>
    %cst_33 = arith.constant dense<0.000000e+00> : vector<8x512xf32>
    %97 = tpu.matmul %95, %32, %cst_33 {dimension_numbers = #tpu.dot_dimension_numbers<[1], [0], [0], [1], [0, 0, 1, 1], [], []>} : vector<8x128xf32>, vector<128x512xf32>, vector<8x512xf32> -> vector<8x512xf32>
    %98 = arith.addf %96, %97 : vector<8x512xf32>
    %99 = vector.extract_strided_slice %98 {offsets = [0, 0], sizes = [8, 384], strides = [1, 1]} : vector<8x512xf32> to vector<8x384xf32>
    %100 = arith.negf %99 : vector<8x384xf32>
    %101 = math.exp %100 : vector<8x384xf32>
    %cst_34 = arith.constant 1.000000e+00 : f32
    %102 = vector.broadcast %cst_34 : f32 to vector<8x384xf32>
    %103 = arith.addf %102, %101 : vector<8x384xf32>
    %104 = arith.divf %102, %103 : vector<8x384xf32>
    %105 = vector.extract_strided_slice %98 {offsets = [0, 384], sizes = [8, 128], strides = [1, 1]} : vector<8x512xf32> to vector<8x128xf32>
    %106 = math.tanh %105 : vector<8x128xf32>
    %107 = vector.extract_strided_slice %104 {offsets = [0, 0], sizes = [8, 128], strides = [1, 1]} : vector<8x384xf32> to vector<8x128xf32>
    %108 = vector.extract_strided_slice %104 {offsets = [0, 128], sizes = [8, 128], strides = [1, 1]} : vector<8x384xf32> to vector<8x128xf32>
    %109 = vector.extract_strided_slice %104 {offsets = [0, 256], sizes = [8, 128], strides = [1, 1]} : vector<8x384xf32> to vector<8x128xf32>
    %110 = arith.mulf %108, %93 : vector<8x128xf32>
    %111 = arith.mulf %107, %106 : vector<8x128xf32>
    %112 = arith.addf %110, %111 : vector<8x128xf32>
    %113 = math.tanh %112 : vector<8x128xf32>
    %114 = arith.mulf %109, %113 : vector<8x128xf32>
    %115 = vector.extract_strided_slice %36 {offsets = [32, 0], sizes = [8, 512], strides = [1, 1]} : vector<64x512xf32> to vector<8x512xf32>
    %cst_35 = arith.constant dense<0.000000e+00> : vector<8x512xf32>
    %116 = tpu.matmul %114, %32, %cst_35 {dimension_numbers = #tpu.dot_dimension_numbers<[1], [0], [0], [1], [0, 0, 1, 1], [], []>} : vector<8x128xf32>, vector<128x512xf32>, vector<8x512xf32> -> vector<8x512xf32>
    %117 = arith.addf %115, %116 : vector<8x512xf32>
    %118 = vector.extract_strided_slice %117 {offsets = [0, 0], sizes = [8, 384], strides = [1, 1]} : vector<8x512xf32> to vector<8x384xf32>
    %119 = arith.negf %118 : vector<8x384xf32>
    %120 = math.exp %119 : vector<8x384xf32>
    %cst_36 = arith.constant 1.000000e+00 : f32
    %121 = vector.broadcast %cst_36 : f32 to vector<8x384xf32>
    %122 = arith.addf %121, %120 : vector<8x384xf32>
    %123 = arith.divf %121, %122 : vector<8x384xf32>
    %124 = vector.extract_strided_slice %117 {offsets = [0, 384], sizes = [8, 128], strides = [1, 1]} : vector<8x512xf32> to vector<8x128xf32>
    %125 = math.tanh %124 : vector<8x128xf32>
    %126 = vector.extract_strided_slice %123 {offsets = [0, 0], sizes = [8, 128], strides = [1, 1]} : vector<8x384xf32> to vector<8x128xf32>
    %127 = vector.extract_strided_slice %123 {offsets = [0, 128], sizes = [8, 128], strides = [1, 1]} : vector<8x384xf32> to vector<8x128xf32>
    %128 = vector.extract_strided_slice %123 {offsets = [0, 256], sizes = [8, 128], strides = [1, 1]} : vector<8x384xf32> to vector<8x128xf32>
    %129 = arith.mulf %127, %112 : vector<8x128xf32>
    %130 = arith.mulf %126, %125 : vector<8x128xf32>
    %131 = arith.addf %129, %130 : vector<8x128xf32>
    %132 = math.tanh %131 : vector<8x128xf32>
    %133 = arith.mulf %128, %132 : vector<8x128xf32>
    %134 = vector.extract_strided_slice %36 {offsets = [40, 0], sizes = [8, 512], strides = [1, 1]} : vector<64x512xf32> to vector<8x512xf32>
    %cst_37 = arith.constant dense<0.000000e+00> : vector<8x512xf32>
    %135 = tpu.matmul %133, %32, %cst_37 {dimension_numbers = #tpu.dot_dimension_numbers<[1], [0], [0], [1], [0, 0, 1, 1], [], []>} : vector<8x128xf32>, vector<128x512xf32>, vector<8x512xf32> -> vector<8x512xf32>
    %136 = arith.addf %134, %135 : vector<8x512xf32>
    %137 = vector.extract_strided_slice %136 {offsets = [0, 0], sizes = [8, 384], strides = [1, 1]} : vector<8x512xf32> to vector<8x384xf32>
    %138 = arith.negf %137 : vector<8x384xf32>
    %139 = math.exp %138 : vector<8x384xf32>
    %cst_38 = arith.constant 1.000000e+00 : f32
    %140 = vector.broadcast %cst_38 : f32 to vector<8x384xf32>
    %141 = arith.addf %140, %139 : vector<8x384xf32>
    %142 = arith.divf %140, %141 : vector<8x384xf32>
    %143 = vector.extract_strided_slice %136 {offsets = [0, 384], sizes = [8, 128], strides = [1, 1]} : vector<8x512xf32> to vector<8x128xf32>
    %144 = math.tanh %143 : vector<8x128xf32>
    %145 = vector.extract_strided_slice %142 {offsets = [0, 0], sizes = [8, 128], strides = [1, 1]} : vector<8x384xf32> to vector<8x128xf32>
    %146 = vector.extract_strided_slice %142 {offsets = [0, 128], sizes = [8, 128], strides = [1, 1]} : vector<8x384xf32> to vector<8x128xf32>
    %147 = vector.extract_strided_slice %142 {offsets = [0, 256], sizes = [8, 128], strides = [1, 1]} : vector<8x384xf32> to vector<8x128xf32>
    %148 = arith.mulf %146, %131 : vector<8x128xf32>
    %149 = arith.mulf %145, %144 : vector<8x128xf32>
    %150 = arith.addf %148, %149 : vector<8x128xf32>
    %151 = math.tanh %150 : vector<8x128xf32>
    %152 = arith.mulf %147, %151 : vector<8x128xf32>
    %153 = vector.extract_strided_slice %36 {offsets = [48, 0], sizes = [8, 512], strides = [1, 1]} : vector<64x512xf32> to vector<8x512xf32>
    %cst_39 = arith.constant dense<0.000000e+00> : vector<8x512xf32>
    %154 = tpu.matmul %152, %32, %cst_39 {dimension_numbers = #tpu.dot_dimension_numbers<[1], [0], [0], [1], [0, 0, 1, 1], [], []>} : vector<8x128xf32>, vector<128x512xf32>, vector<8x512xf32> -> vector<8x512xf32>
    %155 = arith.addf %153, %154 : vector<8x512xf32>
    %156 = vector.extract_strided_slice %155 {offsets = [0, 0], sizes = [8, 384], strides = [1, 1]} : vector<8x512xf32> to vector<8x384xf32>
    %157 = arith.negf %156 : vector<8x384xf32>
    %158 = math.exp %157 : vector<8x384xf32>
    %cst_40 = arith.constant 1.000000e+00 : f32
    %159 = vector.broadcast %cst_40 : f32 to vector<8x384xf32>
    %160 = arith.addf %159, %158 : vector<8x384xf32>
    %161 = arith.divf %159, %160 : vector<8x384xf32>
    %162 = vector.extract_strided_slice %155 {offsets = [0, 384], sizes = [8, 128], strides = [1, 1]} : vector<8x512xf32> to vector<8x128xf32>
    %163 = math.tanh %162 : vector<8x128xf32>
    %164 = vector.extract_strided_slice %161 {offsets = [0, 0], sizes = [8, 128], strides = [1, 1]} : vector<8x384xf32> to vector<8x128xf32>
    %165 = vector.extract_strided_slice %161 {offsets = [0, 128], sizes = [8, 128], strides = [1, 1]} : vector<8x384xf32> to vector<8x128xf32>
    %166 = vector.extract_strided_slice %161 {offsets = [0, 256], sizes = [8, 128], strides = [1, 1]} : vector<8x384xf32> to vector<8x128xf32>
    %167 = arith.mulf %165, %150 : vector<8x128xf32>
    %168 = arith.mulf %164, %163 : vector<8x128xf32>
    %169 = arith.addf %167, %168 : vector<8x128xf32>
    %170 = math.tanh %169 : vector<8x128xf32>
    %171 = arith.mulf %166, %170 : vector<8x128xf32>
    %172 = vector.extract_strided_slice %36 {offsets = [56, 0], sizes = [8, 512], strides = [1, 1]} : vector<64x512xf32> to vector<8x512xf32>
    %cst_41 = arith.constant dense<0.000000e+00> : vector<8x512xf32>
    %173 = tpu.matmul %171, %32, %cst_41 {dimension_numbers = #tpu.dot_dimension_numbers<[1], [0], [0], [1], [0, 0, 1, 1], [], []>} : vector<8x128xf32>, vector<128x512xf32>, vector<8x512xf32> -> vector<8x512xf32>
    %174 = arith.addf %172, %173 : vector<8x512xf32>
    %175 = vector.extract_strided_slice %174 {offsets = [0, 0], sizes = [8, 384], strides = [1, 1]} : vector<8x512xf32> to vector<8x384xf32>
    %176 = arith.negf %175 : vector<8x384xf32>
    %177 = math.exp %176 : vector<8x384xf32>
    %cst_42 = arith.constant 1.000000e+00 : f32
    %178 = vector.broadcast %cst_42 : f32 to vector<8x384xf32>
    %179 = arith.addf %178, %177 : vector<8x384xf32>
    %180 = arith.divf %178, %179 : vector<8x384xf32>
    %181 = vector.extract_strided_slice %174 {offsets = [0, 384], sizes = [8, 128], strides = [1, 1]} : vector<8x512xf32> to vector<8x128xf32>
    %182 = math.tanh %181 : vector<8x128xf32>
    %183 = vector.extract_strided_slice %180 {offsets = [0, 0], sizes = [8, 128], strides = [1, 1]} : vector<8x384xf32> to vector<8x128xf32>
    %184 = vector.extract_strided_slice %180 {offsets = [0, 128], sizes = [8, 128], strides = [1, 1]} : vector<8x384xf32> to vector<8x128xf32>
    %185 = vector.extract_strided_slice %180 {offsets = [0, 256], sizes = [8, 128], strides = [1, 1]} : vector<8x384xf32> to vector<8x128xf32>
    %186 = arith.mulf %184, %169 : vector<8x128xf32>
    %187 = arith.mulf %183, %182 : vector<8x128xf32>
    %188 = arith.addf %186, %187 : vector<8x128xf32>
    %189 = math.tanh %188 : vector<8x128xf32>
    %190 = arith.mulf %185, %189 : vector<8x128xf32>
    %191 = tpu.concatenate %57, %76, %95, %114, %133, %152, %171, %190 in 0 : vector<8x128xf32>, vector<8x128xf32>, vector<8x128xf32>, vector<8x128xf32>, vector<8x128xf32>, vector<8x128xf32>, vector<8x128xf32>, vector<8x128xf32> -> vector<64x128xf32>
    %c256_43 = arith.constant 256 : index
    %c0_44 = arith.constant 0 : index
    %192 = vector.load %arg2[%c256_43, %c0_44] : memref<520x512xf32, #tpu.memory_space<vmem>>, vector<128x512xf32>
    %c384_45 = arith.constant 384 : index
    %c0_46 = arith.constant 0 : index
    %193 = vector.load %arg2[%c384_45, %c0_46] : memref<520x512xf32, #tpu.memory_space<vmem>>, vector<128x512xf32>
    %c513 = arith.constant 513 : index
    %c0_47 = arith.constant 0 : index
    %194 = vector.load %arg2[%c513, %c0_47] : memref<520x512xf32, #tpu.memory_space<vmem>>, vector<1x512xf32>
    %cst_48 = arith.constant dense<0.000000e+00> : vector<64x512xf32>
    %195 = tpu.matmul %191, %192, %cst_48 {dimension_numbers = #tpu.dot_dimension_numbers<[1], [0], [0], [1], [0, 0, 1, 1], [], []>} : vector<64x128xf32>, vector<128x512xf32>, vector<64x512xf32> -> vector<64x512xf32>
    %196 = vector.broadcast %194 : vector<1x512xf32> to vector<64x512xf32>
    %197 = arith.addf %195, %196 : vector<64x512xf32>
    %cst_49 = arith.constant 0.000000e+00 : f32
    %198 = vector.broadcast %cst_49 : f32 to vector<8x128xf32>
    %cst_50 = arith.constant 0.000000e+00 : f32
    %199 = vector.broadcast %cst_50 : f32 to vector<8x128xf32>
    %200 = vector.extract_strided_slice %197 {offsets = [0, 0], sizes = [8, 512], strides = [1, 1]} : vector<64x512xf32> to vector<8x512xf32>
    %cst_51 = arith.constant dense<0.000000e+00> : vector<8x512xf32>
    %201 = tpu.matmul %198, %193, %cst_51 {dimension_numbers = #tpu.dot_dimension_numbers<[1], [0], [0], [1], [0, 0, 1, 1], [], []>} : vector<8x128xf32>, vector<128x512xf32>, vector<8x512xf32> -> vector<8x512xf32>
    %202 = arith.addf %200, %201 : vector<8x512xf32>
    %203 = vector.extract_strided_slice %202 {offsets = [0, 0], sizes = [8, 384], strides = [1, 1]} : vector<8x512xf32> to vector<8x384xf32>
    %204 = arith.negf %203 : vector<8x384xf32>
    %205 = math.exp %204 : vector<8x384xf32>
    %cst_52 = arith.constant 1.000000e+00 : f32
    %206 = vector.broadcast %cst_52 : f32 to vector<8x384xf32>
    %207 = arith.addf %206, %205 : vector<8x384xf32>
    %208 = arith.divf %206, %207 : vector<8x384xf32>
    %209 = vector.extract_strided_slice %202 {offsets = [0, 384], sizes = [8, 128], strides = [1, 1]} : vector<8x512xf32> to vector<8x128xf32>
    %210 = math.tanh %209 : vector<8x128xf32>
    %211 = vector.extract_strided_slice %208 {offsets = [0, 0], sizes = [8, 128], strides = [1, 1]} : vector<8x384xf32> to vector<8x128xf32>
    %212 = vector.extract_strided_slice %208 {offsets = [0, 128], sizes = [8, 128], strides = [1, 1]} : vector<8x384xf32> to vector<8x128xf32>
    %213 = vector.extract_strided_slice %208 {offsets = [0, 256], sizes = [8, 128], strides = [1, 1]} : vector<8x384xf32> to vector<8x128xf32>
    %214 = arith.mulf %212, %199 : vector<8x128xf32>
    %215 = arith.mulf %211, %210 : vector<8x128xf32>
    %216 = arith.addf %214, %215 : vector<8x128xf32>
    %217 = math.tanh %216 : vector<8x128xf32>
    %218 = arith.mulf %213, %217 : vector<8x128xf32>
    %219 = vector.extract_strided_slice %197 {offsets = [8, 0], sizes = [8, 512], strides = [1, 1]} : vector<64x512xf32> to vector<8x512xf32>
    %cst_53 = arith.constant dense<0.000000e+00> : vector<8x512xf32>
    %220 = tpu.matmul %218, %193, %cst_53 {dimension_numbers = #tpu.dot_dimension_numbers<[1], [0], [0], [1], [0, 0, 1, 1], [], []>} : vector<8x128xf32>, vector<128x512xf32>, vector<8x512xf32> -> vector<8x512xf32>
    %221 = arith.addf %219, %220 : vector<8x512xf32>
    %222 = vector.extract_strided_slice %221 {offsets = [0, 0], sizes = [8, 384], strides = [1, 1]} : vector<8x512xf32> to vector<8x384xf32>
    %223 = arith.negf %222 : vector<8x384xf32>
    %224 = math.exp %223 : vector<8x384xf32>
    %cst_54 = arith.constant 1.000000e+00 : f32
    %225 = vector.broadcast %cst_54 : f32 to vector<8x384xf32>
    %226 = arith.addf %225, %224 : vector<8x384xf32>
    %227 = arith.divf %225, %226 : vector<8x384xf32>
    %228 = vector.extract_strided_slice %221 {offsets = [0, 384], sizes = [8, 128], strides = [1, 1]} : vector<8x512xf32> to vector<8x128xf32>
    %229 = math.tanh %228 : vector<8x128xf32>
    %230 = vector.extract_strided_slice %227 {offsets = [0, 0], sizes = [8, 128], strides = [1, 1]} : vector<8x384xf32> to vector<8x128xf32>
    %231 = vector.extract_strided_slice %227 {offsets = [0, 128], sizes = [8, 128], strides = [1, 1]} : vector<8x384xf32> to vector<8x128xf32>
    %232 = vector.extract_strided_slice %227 {offsets = [0, 256], sizes = [8, 128], strides = [1, 1]} : vector<8x384xf32> to vector<8x128xf32>
    %233 = arith.mulf %231, %216 : vector<8x128xf32>
    %234 = arith.mulf %230, %229 : vector<8x128xf32>
    %235 = arith.addf %233, %234 : vector<8x128xf32>
    %236 = math.tanh %235 : vector<8x128xf32>
    %237 = arith.mulf %232, %236 : vector<8x128xf32>
    %238 = vector.extract_strided_slice %197 {offsets = [16, 0], sizes = [8, 512], strides = [1, 1]} : vector<64x512xf32> to vector<8x512xf32>
    %cst_55 = arith.constant dense<0.000000e+00> : vector<8x512xf32>
    %239 = tpu.matmul %237, %193, %cst_55 {dimension_numbers = #tpu.dot_dimension_numbers<[1], [0], [0], [1], [0, 0, 1, 1], [], []>} : vector<8x128xf32>, vector<128x512xf32>, vector<8x512xf32> -> vector<8x512xf32>
    %240 = arith.addf %238, %239 : vector<8x512xf32>
    %241 = vector.extract_strided_slice %240 {offsets = [0, 0], sizes = [8, 384], strides = [1, 1]} : vector<8x512xf32> to vector<8x384xf32>
    %242 = arith.negf %241 : vector<8x384xf32>
    %243 = math.exp %242 : vector<8x384xf32>
    %cst_56 = arith.constant 1.000000e+00 : f32
    %244 = vector.broadcast %cst_56 : f32 to vector<8x384xf32>
    %245 = arith.addf %244, %243 : vector<8x384xf32>
    %246 = arith.divf %244, %245 : vector<8x384xf32>
    %247 = vector.extract_strided_slice %240 {offsets = [0, 384], sizes = [8, 128], strides = [1, 1]} : vector<8x512xf32> to vector<8x128xf32>
    %248 = math.tanh %247 : vector<8x128xf32>
    %249 = vector.extract_strided_slice %246 {offsets = [0, 0], sizes = [8, 128], strides = [1, 1]} : vector<8x384xf32> to vector<8x128xf32>
    %250 = vector.extract_strided_slice %246 {offsets = [0, 128], sizes = [8, 128], strides = [1, 1]} : vector<8x384xf32> to vector<8x128xf32>
    %251 = vector.extract_strided_slice %246 {offsets = [0, 256], sizes = [8, 128], strides = [1, 1]} : vector<8x384xf32> to vector<8x128xf32>
    %252 = arith.mulf %250, %235 : vector<8x128xf32>
    %253 = arith.mulf %249, %248 : vector<8x128xf32>
    %254 = arith.addf %252, %253 : vector<8x128xf32>
    %255 = math.tanh %254 : vector<8x128xf32>
    %256 = arith.mulf %251, %255 : vector<8x128xf32>
    %257 = vector.extract_strided_slice %197 {offsets = [24, 0], sizes = [8, 512], strides = [1, 1]} : vector<64x512xf32> to vector<8x512xf32>
    %cst_57 = arith.constant dense<0.000000e+00> : vector<8x512xf32>
    %258 = tpu.matmul %256, %193, %cst_57 {dimension_numbers = #tpu.dot_dimension_numbers<[1], [0], [0], [1], [0, 0, 1, 1], [], []>} : vector<8x128xf32>, vector<128x512xf32>, vector<8x512xf32> -> vector<8x512xf32>
    %259 = arith.addf %257, %258 : vector<8x512xf32>
    %260 = vector.extract_strided_slice %259 {offsets = [0, 0], sizes = [8, 384], strides = [1, 1]} : vector<8x512xf32> to vector<8x384xf32>
    %261 = arith.negf %260 : vector<8x384xf32>
    %262 = math.exp %261 : vector<8x384xf32>
    %cst_58 = arith.constant 1.000000e+00 : f32
    %263 = vector.broadcast %cst_58 : f32 to vector<8x384xf32>
    %264 = arith.addf %263, %262 : vector<8x384xf32>
    %265 = arith.divf %263, %264 : vector<8x384xf32>
    %266 = vector.extract_strided_slice %259 {offsets = [0, 384], sizes = [8, 128], strides = [1, 1]} : vector<8x512xf32> to vector<8x128xf32>
    %267 = math.tanh %266 : vector<8x128xf32>
    %268 = vector.extract_strided_slice %265 {offsets = [0, 0], sizes = [8, 128], strides = [1, 1]} : vector<8x384xf32> to vector<8x128xf32>
    %269 = vector.extract_strided_slice %265 {offsets = [0, 128], sizes = [8, 128], strides = [1, 1]} : vector<8x384xf32> to vector<8x128xf32>
    %270 = vector.extract_strided_slice %265 {offsets = [0, 256], sizes = [8, 128], strides = [1, 1]} : vector<8x384xf32> to vector<8x128xf32>
    %271 = arith.mulf %269, %254 : vector<8x128xf32>
    %272 = arith.mulf %268, %267 : vector<8x128xf32>
    %273 = arith.addf %271, %272 : vector<8x128xf32>
    %274 = math.tanh %273 : vector<8x128xf32>
    %275 = arith.mulf %270, %274 : vector<8x128xf32>
    %276 = vector.extract_strided_slice %197 {offsets = [32, 0], sizes = [8, 512], strides = [1, 1]} : vector<64x512xf32> to vector<8x512xf32>
    %cst_59 = arith.constant dense<0.000000e+00> : vector<8x512xf32>
    %277 = tpu.matmul %275, %193, %cst_59 {dimension_numbers = #tpu.dot_dimension_numbers<[1], [0], [0], [1], [0, 0, 1, 1], [], []>} : vector<8x128xf32>, vector<128x512xf32>, vector<8x512xf32> -> vector<8x512xf32>
    %278 = arith.addf %276, %277 : vector<8x512xf32>
    %279 = vector.extract_strided_slice %278 {offsets = [0, 0], sizes = [8, 384], strides = [1, 1]} : vector<8x512xf32> to vector<8x384xf32>
    %280 = arith.negf %279 : vector<8x384xf32>
    %281 = math.exp %280 : vector<8x384xf32>
    %cst_60 = arith.constant 1.000000e+00 : f32
    %282 = vector.broadcast %cst_60 : f32 to vector<8x384xf32>
    %283 = arith.addf %282, %281 : vector<8x384xf32>
    %284 = arith.divf %282, %283 : vector<8x384xf32>
    %285 = vector.extract_strided_slice %278 {offsets = [0, 384], sizes = [8, 128], strides = [1, 1]} : vector<8x512xf32> to vector<8x128xf32>
    %286 = math.tanh %285 : vector<8x128xf32>
    %287 = vector.extract_strided_slice %284 {offsets = [0, 0], sizes = [8, 128], strides = [1, 1]} : vector<8x384xf32> to vector<8x128xf32>
    %288 = vector.extract_strided_slice %284 {offsets = [0, 128], sizes = [8, 128], strides = [1, 1]} : vector<8x384xf32> to vector<8x128xf32>
    %289 = vector.extract_strided_slice %284 {offsets = [0, 256], sizes = [8, 128], strides = [1, 1]} : vector<8x384xf32> to vector<8x128xf32>
    %290 = arith.mulf %288, %273 : vector<8x128xf32>
    %291 = arith.mulf %287, %286 : vector<8x128xf32>
    %292 = arith.addf %290, %291 : vector<8x128xf32>
    %293 = math.tanh %292 : vector<8x128xf32>
    %294 = arith.mulf %289, %293 : vector<8x128xf32>
    %295 = vector.extract_strided_slice %197 {offsets = [40, 0], sizes = [8, 512], strides = [1, 1]} : vector<64x512xf32> to vector<8x512xf32>
    %cst_61 = arith.constant dense<0.000000e+00> : vector<8x512xf32>
    %296 = tpu.matmul %294, %193, %cst_61 {dimension_numbers = #tpu.dot_dimension_numbers<[1], [0], [0], [1], [0, 0, 1, 1], [], []>} : vector<8x128xf32>, vector<128x512xf32>, vector<8x512xf32> -> vector<8x512xf32>
    %297 = arith.addf %295, %296 : vector<8x512xf32>
    %298 = vector.extract_strided_slice %297 {offsets = [0, 0], sizes = [8, 384], strides = [1, 1]} : vector<8x512xf32> to vector<8x384xf32>
    %299 = arith.negf %298 : vector<8x384xf32>
    %300 = math.exp %299 : vector<8x384xf32>
    %cst_62 = arith.constant 1.000000e+00 : f32
    %301 = vector.broadcast %cst_62 : f32 to vector<8x384xf32>
    %302 = arith.addf %301, %300 : vector<8x384xf32>
    %303 = arith.divf %301, %302 : vector<8x384xf32>
    %304 = vector.extract_strided_slice %297 {offsets = [0, 384], sizes = [8, 128], strides = [1, 1]} : vector<8x512xf32> to vector<8x128xf32>
    %305 = math.tanh %304 : vector<8x128xf32>
    %306 = vector.extract_strided_slice %303 {offsets = [0, 0], sizes = [8, 128], strides = [1, 1]} : vector<8x384xf32> to vector<8x128xf32>
    %307 = vector.extract_strided_slice %303 {offsets = [0, 128], sizes = [8, 128], strides = [1, 1]} : vector<8x384xf32> to vector<8x128xf32>
    %308 = vector.extract_strided_slice %303 {offsets = [0, 256], sizes = [8, 128], strides = [1, 1]} : vector<8x384xf32> to vector<8x128xf32>
    %309 = arith.mulf %307, %292 : vector<8x128xf32>
    %310 = arith.mulf %306, %305 : vector<8x128xf32>
    %311 = arith.addf %309, %310 : vector<8x128xf32>
    %312 = math.tanh %311 : vector<8x128xf32>
    %313 = arith.mulf %308, %312 : vector<8x128xf32>
    %314 = vector.extract_strided_slice %197 {offsets = [48, 0], sizes = [8, 512], strides = [1, 1]} : vector<64x512xf32> to vector<8x512xf32>
    %cst_63 = arith.constant dense<0.000000e+00> : vector<8x512xf32>
    %315 = tpu.matmul %313, %193, %cst_63 {dimension_numbers = #tpu.dot_dimension_numbers<[1], [0], [0], [1], [0, 0, 1, 1], [], []>} : vector<8x128xf32>, vector<128x512xf32>, vector<8x512xf32> -> vector<8x512xf32>
    %316 = arith.addf %314, %315 : vector<8x512xf32>
    %317 = vector.extract_strided_slice %316 {offsets = [0, 0], sizes = [8, 384], strides = [1, 1]} : vector<8x512xf32> to vector<8x384xf32>
    %318 = arith.negf %317 : vector<8x384xf32>
    %319 = math.exp %318 : vector<8x384xf32>
    %cst_64 = arith.constant 1.000000e+00 : f32
    %320 = vector.broadcast %cst_64 : f32 to vector<8x384xf32>
    %321 = arith.addf %320, %319 : vector<8x384xf32>
    %322 = arith.divf %320, %321 : vector<8x384xf32>
    %323 = vector.extract_strided_slice %316 {offsets = [0, 384], sizes = [8, 128], strides = [1, 1]} : vector<8x512xf32> to vector<8x128xf32>
    %324 = math.tanh %323 : vector<8x128xf32>
    %325 = vector.extract_strided_slice %322 {offsets = [0, 0], sizes = [8, 128], strides = [1, 1]} : vector<8x384xf32> to vector<8x128xf32>
    %326 = vector.extract_strided_slice %322 {offsets = [0, 128], sizes = [8, 128], strides = [1, 1]} : vector<8x384xf32> to vector<8x128xf32>
    %327 = vector.extract_strided_slice %322 {offsets = [0, 256], sizes = [8, 128], strides = [1, 1]} : vector<8x384xf32> to vector<8x128xf32>
    %328 = arith.mulf %326, %311 : vector<8x128xf32>
    %329 = arith.mulf %325, %324 : vector<8x128xf32>
    %330 = arith.addf %328, %329 : vector<8x128xf32>
    %331 = math.tanh %330 : vector<8x128xf32>
    %332 = arith.mulf %327, %331 : vector<8x128xf32>
    %333 = vector.extract_strided_slice %197 {offsets = [56, 0], sizes = [8, 512], strides = [1, 1]} : vector<64x512xf32> to vector<8x512xf32>
    %cst_65 = arith.constant dense<0.000000e+00> : vector<8x512xf32>
    %334 = tpu.matmul %332, %193, %cst_65 {dimension_numbers = #tpu.dot_dimension_numbers<[1], [0], [0], [1], [0, 0, 1, 1], [], []>} : vector<8x128xf32>, vector<128x512xf32>, vector<8x512xf32> -> vector<8x512xf32>
    %335 = arith.addf %333, %334 : vector<8x512xf32>
    %336 = vector.extract_strided_slice %335 {offsets = [0, 0], sizes = [8, 384], strides = [1, 1]} : vector<8x512xf32> to vector<8x384xf32>
    %337 = arith.negf %336 : vector<8x384xf32>
    %338 = math.exp %337 : vector<8x384xf32>
    %cst_66 = arith.constant 1.000000e+00 : f32
    %339 = vector.broadcast %cst_66 : f32 to vector<8x384xf32>
    %340 = arith.addf %339, %338 : vector<8x384xf32>
    %341 = arith.divf %339, %340 : vector<8x384xf32>
    %342 = vector.extract_strided_slice %335 {offsets = [0, 384], sizes = [8, 128], strides = [1, 1]} : vector<8x512xf32> to vector<8x128xf32>
    %343 = math.tanh %342 : vector<8x128xf32>
    %344 = vector.extract_strided_slice %341 {offsets = [0, 0], sizes = [8, 128], strides = [1, 1]} : vector<8x384xf32> to vector<8x128xf32>
    %345 = vector.extract_strided_slice %341 {offsets = [0, 128], sizes = [8, 128], strides = [1, 1]} : vector<8x384xf32> to vector<8x128xf32>
    %346 = vector.extract_strided_slice %341 {offsets = [0, 256], sizes = [8, 128], strides = [1, 1]} : vector<8x384xf32> to vector<8x128xf32>
    %347 = arith.mulf %345, %330 : vector<8x128xf32>
    %348 = arith.mulf %344, %343 : vector<8x128xf32>
    %349 = arith.addf %347, %348 : vector<8x128xf32>
    %350 = math.tanh %349 : vector<8x128xf32>
    %351 = arith.mulf %346, %350 : vector<8x128xf32>
    %c512_67 = arith.constant 512 : index
    %c0_68 = arith.constant 0 : index
    %352 = vector.load %arg1[%c512_67, %c0_68] : memref<1424x128xf32, #tpu.memory_space<vmem>>, vector<128x128xf32>
    %cst_69 = arith.constant dense<0.000000e+00> : vector<8x128xf32>
    %353 = tpu.matmul %14, %352, %cst_69 {dimension_numbers = #tpu.dot_dimension_numbers<[1], [0], [0], [1], [0, 0, 1, 1], [], []>} : vector<8x128xf32>, vector<128x128xf32>, vector<8x128xf32> -> vector<8x128xf32>
    %c640 = arith.constant 640 : index
    %c0_70 = arith.constant 0 : index
    %354 = vector.load %arg1[%c640, %c0_70] : memref<1424x128xf32, #tpu.memory_space<vmem>>, vector<128x128xf32>
    %cst_71 = arith.constant dense<0.000000e+00> : vector<8x128xf32>
    %355 = tpu.matmul %29, %354, %cst_71 {dimension_numbers = #tpu.dot_dimension_numbers<[1], [0], [0], [1], [0, 0, 1, 1], [], []>} : vector<8x128xf32>, vector<128x128xf32>, vector<8x128xf32> -> vector<8x128xf32>
    %356 = arith.addf %353, %355 : vector<8x128xf32>
    %c768 = arith.constant 768 : index
    %c0_72 = arith.constant 0 : index
    %357 = vector.load %arg1[%c768, %c0_72] : memref<1424x128xf32, #tpu.memory_space<vmem>>, vector<128x128xf32>
    %cst_73 = arith.constant dense<0.000000e+00> : vector<8x128xf32>
    %358 = tpu.matmul %351, %357, %cst_73 {dimension_numbers = #tpu.dot_dimension_numbers<[1], [0], [0], [1], [0, 0, 1, 1], [], []>} : vector<8x128xf32>, vector<128x128xf32>, vector<8x128xf32> -> vector<8x128xf32>
    %359 = arith.addf %356, %358 : vector<8x128xf32>
    %c1412 = arith.constant 1412 : index
    %c0_74 = arith.constant 0 : index
    %360 = vector.load %arg1[%c1412, %c0_74] : memref<1424x128xf32, #tpu.memory_space<vmem>>, vector<1x128xf32>
    %361 = vector.broadcast %360 : vector<1x128xf32> to vector<8x128xf32>
    %362 = arith.addf %359, %361 : vector<8x128xf32>
    %cst_75 = arith.constant 0.000000e+00 : f32
    %363 = vector.broadcast %cst_75 : f32 to vector<8x128xf32>
    %364 = arith.maximumf %362, %363 : vector<8x128xf32>
    %c896 = arith.constant 896 : index
    %c0_76 = arith.constant 0 : index
    %365 = vector.load %arg1[%c896, %c0_76] : memref<1424x128xf32, #tpu.memory_space<vmem>>, vector<128x128xf32>
    %cst_77 = arith.constant dense<0.000000e+00> : vector<8x128xf32>
    %366 = tpu.matmul %364, %365, %cst_77 {dimension_numbers = #tpu.dot_dimension_numbers<[1], [0], [0], [1], [0, 0, 1, 1], [], []>} : vector<8x128xf32>, vector<128x128xf32>, vector<8x128xf32> -> vector<8x128xf32>
    %c1413 = arith.constant 1413 : index
    %c0_78 = arith.constant 0 : index
    %367 = vector.load %arg1[%c1413, %c0_78] : memref<1424x128xf32, #tpu.memory_space<vmem>>, vector<1x128xf32>
    %368 = vector.broadcast %367 : vector<1x128xf32> to vector<8x128xf32>
    %369 = arith.addf %366, %368 : vector<8x128xf32>
    %cst_79 = arith.constant 0.000000e+00 : f32
    %370 = vector.broadcast %cst_79 : f32 to vector<8x128xf32>
    %371 = arith.maximumf %369, %370 : vector<8x128xf32>
    %c1024 = arith.constant 1024 : index
    %c0_80 = arith.constant 0 : index
    %372 = vector.load %arg1[%c1024, %c0_80] : memref<1424x128xf32, #tpu.memory_space<vmem>>, vector<128x128xf32>
    %cst_81 = arith.constant dense<0.000000e+00> : vector<8x128xf32>
    %373 = tpu.matmul %371, %372, %cst_81 {dimension_numbers = #tpu.dot_dimension_numbers<[1], [0], [0], [1], [0, 0, 1, 1], [], []>} : vector<8x128xf32>, vector<128x128xf32>, vector<8x128xf32> -> vector<8x128xf32>
    %c1414 = arith.constant 1414 : index
    %c0_82 = arith.constant 0 : index
    %374 = vector.load %arg1[%c1414, %c0_82] : memref<1424x128xf32, #tpu.memory_space<vmem>>, vector<1x128xf32>
    %375 = vector.broadcast %374 : vector<1x128xf32> to vector<8x128xf32>
    %376 = arith.addf %373, %375 : vector<8x128xf32>
    %cst_83 = arith.constant 0.000000e+00 : f32
    %377 = vector.broadcast %cst_83 : f32 to vector<8x128xf32>
    %378 = arith.maximumf %376, %377 : vector<8x128xf32>
    %c1152 = arith.constant 1152 : index
    %c0_84 = arith.constant 0 : index
    %379 = vector.load %arg1[%c1152, %c0_84] : memref<1424x128xf32, #tpu.memory_space<vmem>>, vector<128x128xf32>
    %cst_85 = arith.constant dense<0.000000e+00> : vector<8x128xf32>
    %380 = tpu.matmul %378, %379, %cst_85 {dimension_numbers = #tpu.dot_dimension_numbers<[1], [0], [0], [1], [0, 0, 1, 1], [], []>} : vector<8x128xf32>, vector<128x128xf32>, vector<8x128xf32> -> vector<8x128xf32>
    %c1415 = arith.constant 1415 : index
    %c0_86 = arith.constant 0 : index
    %381 = vector.load %arg1[%c1415, %c0_86] : memref<1424x128xf32, #tpu.memory_space<vmem>>, vector<1x128xf32>
    %382 = vector.broadcast %381 : vector<1x128xf32> to vector<8x128xf32>
    %383 = arith.addf %380, %382 : vector<8x128xf32>
    %cst_87 = arith.constant 0.000000e+00 : f32
    %384 = vector.broadcast %cst_87 : f32 to vector<8x128xf32>
    %385 = arith.maximumf %383, %384 : vector<8x128xf32>
    %c1280 = arith.constant 1280 : index
    %c0_88 = arith.constant 0 : index
    %386 = vector.load %arg1[%c1280, %c0_88] : memref<1424x128xf32, #tpu.memory_space<vmem>>, vector<128x128xf32>
    %cst_89 = arith.constant dense<0.000000e+00> : vector<8x128xf32>
    %387 = tpu.matmul %385, %386, %cst_89 {dimension_numbers = #tpu.dot_dimension_numbers<[1], [0], [0], [1], [0, 0, 1, 1], [], []>} : vector<8x128xf32>, vector<128x128xf32>, vector<8x128xf32> -> vector<8x128xf32>
    %c1416 = arith.constant 1416 : index
    %c0_90 = arith.constant 0 : index
    %388 = vector.load %arg1[%c1416, %c0_90] : memref<1424x128xf32, #tpu.memory_space<vmem>>, vector<1x128xf32>
    %389 = vector.broadcast %388 : vector<1x128xf32> to vector<8x128xf32>
    %390 = arith.addf %387, %389 : vector<8x128xf32>
    %391 = arith.negf %390 : vector<8x128xf32>
    %392 = math.exp %391 : vector<8x128xf32>
    %cst_91 = arith.constant 1.000000e+00 : f32
    %393 = vector.broadcast %cst_91 : f32 to vector<8x128xf32>
    %394 = arith.addf %393, %392 : vector<8x128xf32>
    %395 = arith.divf %393, %394 : vector<8x128xf32>
    %c0_92 = arith.constant 0 : index
    %c0_93 = arith.constant 0 : index
    %396 = vector.load %arg3[%c0_92, %c0_93] : memref<8x128xf32, #tpu.memory_space<vmem>>, vector<8x128xf32>
    tpu.vector_store %arg3[%c0_92, %c0_93], %395 {strides = array<i32>} : memref<8x128xf32, #tpu.memory_space<vmem>>, vector<8x128xf32>,
    return
  }
}

</mosaic_0001>

<llo_original>
// kernel: recommender_forward.1
$region0: #{recommender_forward.1}
  #allocation0 [shape = 'u32[]', space=smem, size = 0x4, offset = 0x4, fixed_abs, tag = 'smem constant byte address 0x4 - core index']
  #allocation1 [shape = 'u32[144,128]{1,0:T(1,128)}', space=vmem, size = 0x12000, scoped, tag = 'internal scratch']
  %s0 = inlined_call_operand.vmem [shape: f32[80,128], index: 0, kind: input, shape index: {}]
  %s1 = inlined_call_operand.hbm [shape: f32[1424,128], index: 1, kind: input, shape index: {}]
  %s2 = inlined_call_operand.hbm [shape: f32[520,512], index: 2, kind: input, shape index: {}]
  %s3 = inlined_call_operand.vmem [shape: f32[8,128], index: 3, kind: output, shape index: {}]
  %s4 = sld [smem:[#allocation0]]
  $region30: #{recommender_forward.1} parent=0
    _
  %s6 = ssub.s32 1, %s4
  %s7 = scalar_select 0, %s6, %s4
  $region1: #{recommender_forward.1} parent=0
    #allocation2 [shape = 'u8[729088]{0}', space=vmem, size = 0xb2000, scoped, tag = 'input window, operand 1, single buffered']
    #allocation3 [shape = 's32[1]{0}', space=sflag, size = 0x4, scoped, tag = 'scoped memory for recommender_forward.1']
    #allocation4 [shape = 'u8[1064960]{0}', space=vmem, size = 0x104000, scoped, tag = 'input window, operand 2, single buffered']
    #allocation5 [shape = 's32[1]{0}', space=sflag, size = 0x4, scoped, tag = 'scoped memory for recommender_forward.1']
    %8 = vsyncpa [#allocation3], 0
    %9 = vsyncpa [#allocation5], 0
    // Predicated region
    $region2: #{recommender_forward.1} parent=1 // pred_check
      _
    $region3: #{recommender_forward.1} parent=1 // pred_check_branch
      %11 = sbr.rel (0) target = $region5
    $region4: #{recommender_forward.1} parent=1 // pred_region
      _
    $region5: #{recommender_forward.1} parent=1 // pred_fallthru
      _
    // Predicated region
    $region6: #{recommender_forward.1} parent=1 // pred_check
      _
    $region7: #{recommender_forward.1} parent=1 // pred_check_branch
      %13 = sbr.rel (0) target = $region9
    $region8: #{recommender_forward.1} parent=1 // pred_region
      %s15 = ssub.s32 22784, 22784
      %16 = vsyncadd [#allocation3], %s15
      %s17 = sshll.u32 [#allocation2], 4
      %s18 = int_to_ptr.vmem [resolvable:$true] %s17
      %23 = dma.hbm_to_vmem [thread:$0]  %s1, 22784, %s18, [#allocation3], 128, 128, 8
    $region9: #{recommender_forward.1} parent=1 // pred_fallthru
      _
    // Predicated region
    $region10: #{recommender_forward.1} parent=1 // pred_check
      _
    $region11: #{recommender_forward.1} parent=1 // pred_check_branch
      %25 = sbr.rel (0) target = $region13
    $region12: #{recommender_forward.1} parent=1 // pred_region
      %s27 = ssub.s32 33280, 33280
      %28 = vsyncadd [#allocation5], %s27
      %s29 = sshll.u32 [#allocation4], 4
      %s30 = int_to_ptr.vmem [resolvable:$true] %s29
      %35 = dma.hbm_to_vmem [thread:$0]  %s2, 33280, %s30, [#allocation5], 512, 512, 32
    $region13: #{recommender_forward.1} parent=1 // pred_fallthru
      _
    // Predicated region
    $region14: #{recommender_forward.1} parent=1 // pred_check
      _
    $region15: #{recommender_forward.1} parent=1 // pred_check_branch
      %37 = sbr.rel (0) target = $region17
    $region16: #{recommender_forward.1} parent=1 // pred_region
      %38 = dma.done [#allocation3], 22784
    $region17: #{recommender_forward.1} parent=1 // pred_fallthru
      _
    // Predicated region
    $region18: #{recommender_forward.1} parent=1 // pred_check
      _
    $region19: #{recommender_forward.1} parent=1 // pred_check_branch
      %40 = sbr.rel (0) target = $region21
    $region20: #{recommender_forward.1} parent=1 // pred_region
      %41 = dma.done [#allocation5], 33280
    $region21: #{recommender_forward.1} parent=1 // pred_fallthru
      _
    %v42 = vld [vmem:[%s0] sm:$0xff]
    %v43 = vld [vmem:[#allocation2] sm:$0xff]
    %v44 = vld [vmem:[#allocation2 + $0x8] sm:$0xff]
    %v45 = vld [vmem:[#allocation2 + $0x10] sm:$0xff]
    %v46 = vld [vmem:[#allocation2 + $0x18] sm:$0xff]
    %v47 = vld [vmem:[#allocation2 + $0x20] sm:$0xff]
    %v48 = vld [vmem:[#allocation2 + $0x28] sm:$0xff]
    %v49 = vld [vmem:[#allocation2 + $0x30] sm:$0xff]
    %v50 = vld [vmem:[#allocation2 + $0x38] sm:$0xff]
    %v51 = vld [vmem:[#allocation2 + $0x40] sm:$0xff]
    %v52 = vld [vmem:[#allocation2 + $0x48] sm:$0xff]
    %v53 = vld [vmem:[#allocation2 + $0x50] sm:$0xff]
    %v54 = vld [vmem:[#allocation2 + $0x58] sm:$0xff]
    %v55 = vld [vmem:[#allocation2 + $0x60] sm:$0xff]
    %v56 = vld [vmem:[#allocation2 + $0x68] sm:$0xff]
    %v57 = vld [vmem:[#allocation2 + $0x70] sm:$0xff]
    %v58 = vld [vmem:[#allocation2 + $0x78] sm:$0xff]
    %v59 = vld [vmem:[#allocation2 + $0x580] sm:$0x1]
    %v60 = vlaneseq
    %v61 = vshrl.u32 %v60, 7
    %v62 = vsub.s32 0, %v61
    %v63 = vrot.slane %v59, %v62
    %64 = vmatprep.subr.mxu0 0.0
    %65 = vmatpush1.msra.mxu0 %v43
    %66 = vmatprep.subr.mxu0 0.0
    %67 = vmatpush1.msra.mxu0 %v44
    %68 = vmatprep.subr.mxu0 0.0
    %69 = vmatpush1.msra.mxu0 %v45
    %70 = vmatprep.subr.mxu0 0.0
    %71 = vmatpush1.msra.mxu0 %v46
    %72 = vmatprep.subr.mxu0 0.0
    %73 = vmatpush1.msra.mxu0 %v47
    %74 = vmatprep.subr.mxu0 0.0
    %75 = vmatpush1.msra.mxu0 %v48
    %76 = vmatprep.subr.mxu0 0.0
    %77 = vmatpush1.msra.mxu0 %v49
    %78 = vmatprep.subr.mxu0 0.0
    %79 = vmatpush1.msra.mxu0 %v50
    %80 = vmatprep.subr.mxu0 0.0
    %81 = vmatpush1.msra.mxu0 %v51
    %82 = vmatprep.subr.mxu0 0.0
    %83 = vmatpush1.msra.mxu0 %v52
    %84 = vmatprep.subr.mxu0 0.0
    %85 = vmatpush1.msra.mxu0 %v53
    %86 = vmatprep.subr.mxu0 0.0
    %87 = vmatpush1.msra.mxu0 %v54
    %88 = vmatprep.subr.mxu0 0.0
    %89 = vmatpush1.msra.mxu0 %v55
    %90 = vmatprep.subr.mxu0 0.0
    %91 = vmatpush1.msra.mxu0 %v56
    %92 = vmatprep.subr.mxu0 0.0
    %93 = vmatpush1.msra.mxu0 %v57
    %94 = vmatprep.subr.mxu0 0.0
    %95 = vmatpush1.msra.mxu0 %v58
    %96 = vmatprep.subr.mxu0 0.0
    %97 = vmatpush1.msra.mxu0 0.0
    %98 = vmatprep.subr.mxu0 0.0
    %99 = vmatpush1.msra.mxu0 0.0
    %100 = vmatprep.subr.mxu0 0.0
    %101 = vmatpush1.msra.mxu0 0.0
    %102 = vmatprep.subr.mxu0 0.0
    %103 = vmatpush1.msra.mxu0 0.0
    %104 = vmatprep.subr.mxu0 0.0
    %105 = vmatpush1.msra.mxu0 0.0
    %106 = vmatprep.subr.mxu0 0.0
    %107 = vmatpush1.msra.mxu0 0.0
    %108 = vmatprep.subr.mxu0 0.0
    %109 = vmatpush1.msra.mxu0 0.0
    %110 = vmatprep.subr.mxu0 0.0
    %111 = vmatpush1.msra.mxu0 0.0
    %112 = vmatprep.subr.mxu0 0.0
    %113 = vmatpush1.msra.mxu0 0.0
    %114 = vmatprep.subr.mxu0 0.0
    %115 = vmatpush1.msra.mxu0 0.0
    %116 = vmatprep.subr.mxu0 0.0
    %117 = vmatpush1.msra.mxu0 0.0
    %118 = vmatprep.subr.mxu0 0.0
    %119 = vmatpush1.msra.mxu0 0.0
    %120 = vmatprep.subr.mxu0 0.0
    %121 = vmatpush1.msra.mxu0 0.0
    %122 = vmatprep.subr.mxu0 0.0
    %123 = vmatpush1.msra.mxu0 0.0
    %124 = vmatprep.subr.mxu0 0.0
    %125 = vmatpush1.msra.mxu0 0.0
    %126 = vmatprep.subr.mxu0 0.0
    %127 = vmatpush1.msra.mxu0 0.0
    %128 = vmatprep.mubr.f32.mxu0 0.0
    %129 = vmatmul.mubr.f32.gmra.mrb[0].mxu0 %v42
    %v130 = vpop.f32.mrb[0].mxu0
    %v131 = vadd.f32 %v63, %v130
    %v132 = vpop.f32.mrb[0].mxu0
    %133 = vdwg.mxu0
    %v134 = vmax.f32 %v131, 0.0
    %v135 = vld [vmem:[#allocation2 + $0x80] sm:$0xff]
    %v136 = vld [vmem:[#allocation2 + $0x88] sm:$0xff]
    %v137 = vld [vmem:[#allocation2 + $0x90] sm:$0xff]
    %v138 = vld [vmem:[#allocation2 + $0x98] sm:$0xff]
    %v139 = vld [vmem:[#allocation2 + $0xa0] sm:$0xff]
    %v140 = vld [vmem:[#allocation2 + $0xa8] sm:$0xff]
    %v141 = vld [vmem:[#allocation2 + $0xb0] sm:$0xff]
    %v142 = vld [vmem:[#allocation2 + $0xb8] sm:$0xff]
    %v143 = vld [vmem:[#allocation2 + $0xc0] sm:$0xff]
    %v144 = vld [vmem:[#allocation2 + $0xc8] sm:$0xff]
    %v145 = vld [vmem:[#allocation2 + $0xd0] sm:$0xff]
    %v146 = vld [vmem:[#allocation2 + $0xd8] sm:$0xff]
    %v147 = vld [vmem:[#allocation2 + $0xe0] sm:$0xff]
    %v148 = vld [vmem:[#allocation2 + $0xe8] sm:$0xff]
    %v149 = vld [vmem:[#allocation2 + $0xf0] sm:$0xff]
    %v150 = vld [vmem:[#allocation2 + $0xf8] sm:$0xff]
    %v151 = vld [vmem:[#allocation2 + $0x581] sm:$0x1]
    %v152 = vlaneseq
    %v153 = vshrl.u32 %v152, 7
    %v154 = vsub.s32 0, %v153
    %v155 = vrot.slane %v151, %v154
    %156 = vmatprep.subr.mxu0 0.0
    %157 = vmatpush1.msra.mxu0 %v135
    %158 = vmatprep.subr.mxu0 0.0
    %159 = vmatpush1.msra.mxu0 %v136
    %160 = vmatprep.subr.mxu0 0.0
    %161 = vmatpush1.msra.mxu0 %v137
    %162 = vmatprep.subr.mxu0 0.0
    %163 = vmatpush1.msra.mxu0 %v138
    %164 = vmatprep.subr.mxu0 0.0
    %165 = vmatpush1.msra.mxu0 %v139
    %166 = vmatprep.subr.mxu0 0.0
    %167 = vmatpush1.msra.mxu0 %v140
    %168 = vmatprep.subr.mxu0 0.0
    %169 = vmatpush1.msra.mxu0 %v141
    %170 = vmatprep.subr.mxu0 0.0
    %171 = vmatpush1.msra.mxu0 %v142
    %172 = vmatprep.subr.mxu0 0.0
    %173 = vmatpush1.msra.mxu0 %v143
    %174 = vmatprep.subr.mxu0 0.0
    %175 = vmatpush1.msra.mxu0 %v144
    %176 = vmatprep.subr.mxu0 0.0
    %177 = vmatpush1.msra.mxu0 %v145
    %178 = vmatprep.subr.mxu0 0.0
    %179 = vmatpush1.msra.mxu0 %v146
    %180 = vmatprep.subr.mxu0 0.0
    %181 = vmatpush1.msra.mxu0 %v147
    %182 = vmatprep.subr.mxu0 0.0
    %183 = vmatpush1.msra.mxu0 %v148
    %184 = vmatprep.subr.mxu0 0.0
    %185 = vmatpush1.msra.mxu0 %v149
    %186 = vmatprep.subr.mxu0 0.0
    %187 = vmatpush1.msra.mxu0 %v150
    %188 = vmatprep.subr.mxu0 0.0
    %189 = vmatpush1.msra.mxu0 0.0
    %190 = vmatprep.subr.mxu0 0.0
    %191 = vmatpush1.msra.mxu0 0.0
    %192 = vmatprep.subr.mxu0 0.0
    %193 = vmatpush1.msra.mxu0 0.0
    %194 = vmatprep.subr.mxu0 0.0
    %195 = vmatpush1.msra.mxu0 0.0
    %196 = vmatprep.subr.mxu0 0.0
    %197 = vmatpush1.msra.mxu0 0.0
    %198 = vmatprep.subr.mxu0 0.0
    %199 = vmatpush1.msra.mxu0 0.0
    %200 = vmatprep.subr.mxu0 0.0
    %201 = vmatpush1.msra.mxu0 0.0
    %202 = vmatprep.subr.mxu0 0.0
    %203 = vmatpush1.msra.mxu0 0.0
    %204 = vmatprep.subr.mxu0 0.0
    %205 = vmatpush1.msra.mxu0 0.0
    %206 = vmatprep.subr.mxu0 0.0
    %207 = vmatpush1.msra.mxu0 0.0
    %208 = vmatprep.subr.mxu0 0.0
    %209 = vmatpush1.msra.mxu0 0.0
    %210 = vmatprep.subr.mxu0 0.0
    %211 = vmatpush1.msra.mxu0 0.0
    %212 = vmatprep.subr.mxu0 0.0
    %213 = vmatpush1.msra.mxu0 0.0
    %214 = vmatprep.subr.mxu0 0.0
    %215 = vmatpush1.msra.mxu0 0.0
    %216 = vmatprep.subr.mxu0 0.0
    %217 = vmatpush1.msra.mxu0 0.0
    %218 = vmatprep.subr.mxu0 0.0
    %219 = vmatpush1.msra.mxu0 0.0
    %220 = vmatprep.mubr.f32.mxu0 0.0
    %221 = vmatmul.mubr.f32.gmra.mrb[0].mxu0 %v134
    %v222 = vpop.f32.mrb[0].mxu0
    %v223 = vadd.f32 %v155, %v222
    %v224 = vpop.f32.mrb[0].mxu0
    %225 = vdwg.mxu0
    %v226 = vmax.f32 %v223, 0.0
    %v227 = vld [vmem:[%s0 + $0x8] sm:$0xff]
    %v228 = vld [vmem:[#allocation2 + $0x100] sm:$0xff]
    %v229 = vld [vmem:[#allocation2 + $0x108] sm:$0xff]
    %v230 = vld [vmem:[#allocation2 + $0x110] sm:$0xff]
    %v231 = vld [vmem:[#allocation2 + $0x118] sm:$0xff]
    %v232 = vld [vmem:[#allocation2 + $0x120] sm:$0xff]
    %v233 = vld [vmem:[#allocation2 + $0x128] sm:$0xff]
    %v234 = vld [vmem:[#allocation2 + $0x130] sm:$0xff]
    %v235 = vld [vmem:[#allocation2 + $0x138] sm:$0xff]
    %v236 = vld [vmem:[#allocation2 + $0x140] sm:$0xff]
    %v237 = vld [vmem:[#allocation2 + $0x148] sm:$0xff]
    %v238 = vld [vmem:[#allocation2 + $0x150] sm:$0xff]
    %v239 = vld [vmem:[#allocation2 + $0x158] sm:$0xff]
    %v240 = vld [vmem:[#allocation2 + $0x160] sm:$0xff]
    %v241 = vld [vmem:[#allocation2 + $0x168] sm:$0xff]
    %v242 = vld [vmem:[#allocation2 + $0x170] sm:$0xff]
    %v243 = vld [vmem:[#allocation2 + $0x178] sm:$0xff]
    %v244 = vld [vmem:[#allocation2 + $0x582] sm:$0x1]
    %v245 = vlaneseq
    %v246 = vshrl.u32 %v245, 7
    %v247 = vsub.s32 0, %v246
    %v248 = vrot.slane %v244, %v247
    %249 = vmatprep.subr.mxu0 0.0
    %250 = vmatpush1.msra.mxu0 %v228
    %251 = vmatprep.subr.mxu0 0.0
    %252 = vmatpush1.msra.mxu0 %v229
    %253 = vmatprep.subr.mxu0 0.0
    %254 = vmatpush1.msra.mxu0 %v230
    %255 = vmatprep.subr.mxu0 0.0
    %256 = vmatpush1.msra.mxu0 %v231
    %257 = vmatprep.subr.mxu0 0.0
    %258 = vmatpush1.msra.mxu0 %v232
    %259 = vmatprep.subr.mxu0 0.0
    %260 = vmatpush1.msra.mxu0 %v233
    %261 = vmatprep.subr.mxu0 0.0
    %262 = vmatpush1.msra.mxu0 %v234
    %263 = vmatprep.subr.mxu0 0.0
    %264 = vmatpush1.msra.mxu0 %v235
    %265 = vmatprep.subr.mxu0 0.0
    %266 = vmatpush1.msra.mxu0 %v236
    %267 = vmatprep.subr.mxu0 0.0
    %268 = vmatpush1.msra.mxu0 %v237
    %269 = vmatprep.subr.mxu0 0.0
    %270 = vmatpush1.msra.mxu0 %v238
    %271 = vmatprep.subr.mxu0 0.0
    %272 = vmatpush1.msra.mxu0 %v239
    %273 = vmatprep.subr.mxu0 0.0
    %274 = vmatpush1.msra.mxu0 %v240
    %275 = vmatprep.subr.mxu0 0.0
    %276 = vmatpush1.msra.mxu0 %v241
    %277 = vmatprep.subr.mxu0 0.0
    %278 = vmatpush1.msra.mxu0 %v242
    %279 = vmatprep.subr.mxu0 0.0
    %280 = vmatpush1.msra.mxu0 %v243
    %281 = vmatprep.subr.mxu0 0.0
    %282 = vmatpush1.msra.mxu0 0.0
    %283 = vmatprep.subr.mxu0 0.0
    %284 = vmatpush1.msra.mxu0 0.0
    %285 = vmatprep.subr.mxu0 0.0
    %286 = vmatpush1.msra.mxu0 0.0
    %287 = vmatprep.subr.mxu0 0.0
    %288 = vmatpush1.msra.mxu0 0.0
    %289 = vmatprep.subr.mxu0 0.0
    %290 = vmatpush1.msra.mxu0 0.0
    %291 = vmatprep.subr.mxu0 0.0
    %292 = vmatpush1.msra.mxu0 0.0
    %293 = vmatprep.subr.mxu0 0.0
    %294 = vmatpush1.msra.mxu0 0.0
    %295 = vmatprep.subr.mxu0 0.0
    %296 = vmatpush1.msra.mxu0 0.0
    %297 = vmatprep.subr.mxu0 0.0
    %298 = vmatpush1.msra.mxu0 0.0
    %299 = vmatprep.subr.mxu0 0.0
    %300 = vmatpush1.msra.mxu0 0.0
    %301 = vmatprep.subr.mxu0 0.0
    %302 = vmatpush1.msra.mxu0 0.0
    %303 = vmatprep.subr.mxu0 0.0
    %304 = vmatpush1.msra.mxu0 0.0
    %305 = vmatprep.subr.mxu0 0.0
    %306 = vmatpush1.msra.mxu0 0.0
    %307 = vmatprep.subr.mxu0 0.0
    %308 = vmatpush1.msra.mxu0 0.0
    %309 = vmatprep.subr.mxu0 0.0
    %310 = vmatpush1.msra.mxu0 0.0
    %311 = vmatprep.subr.mxu0 0.0
    %312 = vmatpush1.msra.mxu0 0.0
    %313 = vmatprep.mubr.f32.mxu0 0.0
    %314 = vmatmul.mubr.f32.gmra.mrb[0].mxu0 %v227
    %v315 = vpop.f32.mrb[0].mxu0
    %v316 = vadd.f32 %v248, %v315
    %v317 = vpop.f32.mrb[0].mxu0
    %318 = vdwg.mxu0
    %v319 = vmax.f32 %v316, 0.0
    %v320 = vld [vmem:[#allocation2 + $0x180] sm:$0xff]
    %v321 = vld [vmem:[#allocation2 + $0x188] sm:$0xff]
    %v322 = vld [vmem:[#allocation2 + $0x190] sm:$0xff]
    %v323 = vld [vmem:[#allocation2 + $0x198] sm:$0xff]
    %v324 = vld [vmem:[#allocation2 + $0x1a0] sm:$0xff]
    %v325 = vld [vmem:[#allocation2 + $0x1a8] sm:$0xff]
    %v326 = vld [vmem:[#allocation2 + $0x1b0] sm:$0xff]
    %v327 = vld [vmem:[#allocation2 + $0x1b8] sm:$0xff]
    %v328 = vld [vmem:[#allocation2 + $0x1c0] sm:$0xff]
    %v329 = vld [vmem:[#allocation2 + $0x1c8] sm:$0xff]
    %v330 = vld [vmem:[#allocation2 + $0x1d0] sm:$0xff]
    %v331 = vld [vmem:[#allocation2 + $0x1d8] sm:$0xff]
    %v332 = vld [vmem:[#allocation2 + $0x1e0] sm:$0xff]
    %v333 = vld [vmem:[#allocation2 + $0x1e8] sm:$0xff]
    %v334 = vld [vmem:[#allocation2 + $0x1f0] sm:$0xff]
    %v335 = vld [vmem:[#allocation2 + $0x1f8] sm:$0xff]
    %v336 = vld [vmem:[#allocation2 + $0x583] sm:$0x1]
    %v337 = vlaneseq
    %v338 = vshrl.u32 %v337, 7
    %v339 = vsub.s32 0, %v338
    %v340 = vrot.slane %v336, %v339
    %341 = vmatprep.subr.mxu0 0.0
    %342 = vmatpush1.msra.mxu0 %v320
    %343 = vmatprep.subr.mxu0 0.0
    %344 = vmatpush1.msra.mxu0 %v321
    %345 = vmatprep.subr.mxu0 0.0
    %346 = vmatpush1.msra.mxu0 %v322
    %347 = vmatprep.subr.mxu0 0.0
    %348 = vmatpush1.msra.mxu0 %v323
    %349 = vmatprep.subr.mxu0 0.0
    %350 = vmatpush1.msra.mxu0 %v324
    %351 = vmatprep.subr.mxu0 0.0
    %352 = vmatpush1.msra.mxu0 %v325
    %353 = vmatprep.subr.mxu0 0.0
    %354 = vmatpush1.msra.mxu0 %v326
    %355 = vmatprep.subr.mxu0 0.0
    %356 = vmatpush1.msra.mxu0 %v327
    %357 = vmatprep.subr.mxu0 0.0
    %358 = vmatpush1.msra.mxu0 %v328
    %359 = vmatprep.subr.mxu0 0.0
    %360 = vmatpush1.msra.mxu0 %v329
    %361 = vmatprep.subr.mxu0 0.0
    %362 = vmatpush1.msra.mxu0 %v330
    %363 = vmatprep.subr.mxu0 0.0
    %364 = vmatpush1.msra.mxu0 %v331
    %365 = vmatprep.subr.mxu0 0.0
    %366 = vmatpush1.msra.mxu0 %v332
    %367 = vmatprep.subr.mxu0 0.0
    %368 = vmatpush1.msra.mxu0 %v333
    %369 = vmatprep.subr.mxu0 0.0
    %370 = vmatpush1.msra.mxu0 %v334
    %371 = vmatprep.subr.mxu0 0.0
    %372 = vmatpush1.msra.mxu0 %v335
    %373 = vmatprep.subr.mxu0 0.0
    %374 = vmatpush1.msra.mxu0 0.0
    %375 = vmatprep.subr.mxu0 0.0
    %376 = vmatpush1.msra.mxu0 0.0
    %377 = vmatprep.subr.mxu0 0.0
    %378 = vmatpush1.msra.mxu0 0.0
    %379 = vmatprep.subr.mxu0 0.0
    %380 = vmatpush1.msra.mxu0 0.0
    %381 = vmatprep.subr.mxu0 0.0
    %382 = vmatpush1.msra.mxu0 0.0
    %383 = vmatprep.subr.mxu0 0.0
    %384 = vmatpush1.msra.mxu0 0.0
    %385 = vmatprep.subr.mxu0 0.0
    %386 = vmatpush1.msra.mxu0 0.0
    %387 = vmatprep.subr.mxu0 0.0
    %388 = vmatpush1.msra.mxu0 0.0
    %389 = vmatprep.subr.mxu0 0.0
    %390 = vmatpush1.msra.mxu0 0.0
    %391 = vmatprep.subr.mxu0 0.0
    %392 = vmatpush1.msra.mxu0 0.0
    %393 = vmatprep.subr.mxu0 0.0
    %394 = vmatpush1.msra.mxu0 0.0
    %395 = vmatprep.subr.mxu0 0.0
    %396 = vmatpush1.msra.mxu0 0.0
    %397 = vmatprep.subr.mxu0 0.0
    %398 = vmatpush1.msra.mxu0 0.0
    %399 = vmatprep.subr.mxu0 0.0
    %400 = vmatpush1.msra.mxu0 0.0
    %401 = vmatprep.subr.mxu0 0.0
    %402 = vmatpush1.msra.mxu0 0.0
    %403 = vmatprep.subr.mxu0 0.0
    %404 = vmatpush1.msra.mxu0 0.0
    %405 = vmatprep.mubr.f32.mxu0 0.0
    %406 = vmatmul.mubr.f32.gmra.mrb[0].mxu0 %v319
    %v407 = vpop.f32.mrb[0].mxu0
    %v408 = vadd.f32 %v340, %v407
    %v409 = vpop.f32.mrb[0].mxu0
    %410 = vdwg.mxu0
    %v411 = vmax.f32 %v408, 0.0
    %v412 = vld [vmem:[%s0 + $0x10] sm:$0xff]
    %v413 = vld [vmem:[%s0 + $0x18] sm:$0xff]
    %v414 = vld [vmem:[%s0 + $0x20] sm:$0xff]
    %v415 = vld [vmem:[%s0 + $0x28] sm:$0xff]
    %v416 = vld [vmem:[%s0 + $0x30] sm:$0xff]
    %v417 = vld [vmem:[%s0 + $0x38] sm:$0xff]
    %v418 = vld [vmem:[%s0 + $0x40] sm:$0xff]
    %v419 = vld [vmem:[%s0 + $0x48] sm:$0xff]
    %v420 = vld [vmem:[#allocation4] sm:$0xff]
    %v421 = vld [vmem:[#allocation4 + $0x8] sm:$0xff]
    %v422 = vld [vmem:[#allocation4 + $0x10] sm:$0xff]
    %v423 = vld [vmem:[#allocation4 + $0x18] sm:$0xff]
    %v424 = vld [vmem:[#allocation4 + $0x20] sm:$0xff]
    %v425 = vld [vmem:[#allocation4 + $0x28] sm:$0xff]
    %v426 = vld [vmem:[#allocation4 + $0x30] sm:$0xff]
    %v427 = vld [vmem:[#allocation4 + $0x38] sm:$0xff]
    %v428 = vld [vmem:[#allocation4 + $0x40] sm:$0xff]
    %v429 = vld [vmem:[#allocation4 + $0x48] sm:$0xff]
    %v430 = vld [vmem:[#allocation4 + $0x50] sm:$0xff]
    %v431 = vld [vmem:[#allocation4 + $0x58] sm:$0xff]
    %v432 = vld [vmem:[#allocation4 + $0x60] sm:$0xff]
    %v433 = vld [vmem:[#allocation4 + $0x68] sm:$0xff]
    %v434 = vld [vmem:[#allocation4 + $0x70] sm:$0xff]
    %v435 = vld [vmem:[#allocation4 + $0x78] sm:$0xff]
    %v436 = vld [vmem:[#allocation4 + $0x80] sm:$0xff]
    %v437 = vld [vmem:[#allocation4 + $0x88] sm:$0xff]
    %v438 = vld [vmem:[#allocation4 + $0x90] sm:$0xff]
    %v439 = vld [vmem:[#allocation4 + $0x98] sm:$0xff]
    %v440 = vld [vmem:[#allocation4 + $0xa0] sm:$0xff]
    %v441 = vld [vmem:[#allocation4 + $0xa8] sm:$0xff]
    %v442 = vld [vmem:[#allocation4 + $0xb0] sm:$0xff]
    %v443 = vld [vmem:[#allocation4 + $0xb8] sm:$0xff]
    %v444 = vld [vmem:[#allocation4 + $0xc0] sm:$0xff]
    %v445 = vld [vmem:[#allocation4 + $0xc8] sm:$0xff]
    %v446 = vld [vmem:[#allocation4 + $0xd0] sm:$0xff]
    %v447 = vld [vmem:[#allocation4 + $0xd8] sm:$0xff]
    %v448 = vld [vmem:[#allocation4 + $0xe0] sm:$0xff]
    %v449 = vld [vmem:[#allocation4 + $0xe8] sm:$0xff]
    %v450 = vld [vmem:[#allocation4 + $0xf0] sm:$0xff]
    %v451 = vld [vmem:[#allocation4 + $0xf8] sm:$0xff]
    %v452 = vld [vmem:[#allocation4 + $0x100] sm:$0xff]
    %v453 = vld [vmem:[#allocation4 + $0x108] sm:$0xff]
    %v454 = vld [vmem:[#allocation4 + $0x110] sm:$0xff]
    %v455 = vld [vmem:[#allocation4 + $0x118] sm:$0xff]
    %v456 = vld [vmem:[#allocation4 + $0x120] sm:$0xff]
    %v457 = vld [vmem:[#allocation4 + $0x128] sm:$0xff]
    %v458 = vld [vmem:[#allocation4 + $0x130] sm:$0xff]
    %v459 = vld [vmem:[#allocation4 + $0x138] sm:$0xff]
    %v460 = vld [vmem:[#allocation4 + $0x140] sm:$0xff]
    %v461 = vld [vmem:[#allocation4 + $0x148] sm:$0xff]
    %v462 = vld [vmem:[#allocation4 + $0x150] sm:$0xff]
    %v463 = vld [vmem:[#allocation4 + $0x158] sm:$0xff]
    %v464 = vld [vmem:[#allocation4 + $0x160] sm:$0xff]
    %v465 = vld [vmem:[#allocation4 + $0x168] sm:$0xff]
    %v466 = vld [vmem:[#allocation4 + $0x170] sm:$0xff]
    %v467 = vld [vmem:[#allocation4 + $0x178] sm:$0xff]
    %v468 = vld [vmem:[#allocation4 + $0x180] sm:$0xff]
    %v469 = vld [vmem:[#allocation4 + $0x188] sm:$0xff]
    %v470 = vld [vmem:[#allocation4 + $0x190] sm:$0xff]
    %v471 = vld [vmem:[#allocation4 + $0x198] sm:$0xff]
    %v472 = vld [vmem:[#allocation4 + $0x1a0] sm:$0xff]
    %v473 = vld [vmem:[#allocation4 + $0x1a8] sm:$0xff]
    %v474 = vld [vmem:[#allocation4 + $0x1b0] sm:$0xff]
    %v475 = vld [vmem:[#allocation4 + $0x1b8] sm:$0xff]
    %v476 = vld [vmem:[#allocation4 + $0x1c0] sm:$0xff]
    %v477 = vld [vmem:[#allocation4 + $0x1c8] sm:$0xff]
    %v478 = vld [vmem:[#allocation4 + $0x1d0] sm:$0xff]
    %v479 = vld [vmem:[#allocation4 + $0x1d8] sm:$0xff]
    %v480 = vld [vmem:[#allocation4 + $0x1e0] sm:$0xff]
    %v481 = vld [vmem:[#allocation4 + $0x1e8] sm:$0xff]
    %v482 = vld [vmem:[#allocation4 + $0x1f0] sm:$0xff]
    %v483 = vld [vmem:[#allocation4 + $0x1f8] sm:$0xff]
    %v484 = vld [vmem:[#allocation4 + $0x200] sm:$0xff]
    %v485 = vld [vmem:[#allocation4 + $0x208] sm:$0xff]
    %v486 = vld [vmem:[#allocation4 + $0x210] sm:$0xff]
    %v487 = vld [vmem:[#allocation4 + $0x218] sm:$0xff]
    %v488 = vld [vmem:[#allocation4 + $0x220] sm:$0xff]
    %v489 = vld [vmem:[#allocation4 + $0x228] sm:$0xff]
    %v490 = vld [vmem:[#allocation4 + $0x230] sm:$0xff]
    %v491 = vld [vmem:[#allocation4 + $0x238] sm:$0xff]
    %v492 = vld [vmem:[#allocation4 + $0x240] sm:$0xff]
    %v493 = vld [vmem:[#allocation4 + $0x248] sm:$0xff]
    %v494 = vld [vmem:[#allocation4 + $0x250] sm:$0xff]
    %v495 = vld [vmem:[#allocation4 + $0x258] sm:$0xff]
    %v496 = vld [vmem:[#allocation4 + $0x260] sm:$0xff]
    %v497 = vld [vmem:[#allocation4 + $0x268] sm:$0xff]
    %v498 = vld [vmem:[#allocation4 + $0x270] sm:$0xff]
    %v499 = vld [vmem:[#allocation4 + $0x278] sm:$0xff]
    %v500 = vld [vmem:[#allocation4 + $0x280] sm:$0xff]
    %v501 = vld [vmem:[#allocation4 + $0x288] sm:$0xff]
    %v502 = vld [vmem:[#allocation4 + $0x290] sm:$0xff]
    %v503 = vld [vmem:[#allocation4 + $0x298] sm:$0xff]
    %v504 = vld [vmem:[#allocation4 + $0x2a0] sm:$0xff]
    %v505 = vld [vmem:[#allocation4 + $0x2a8] sm:$0xff]
    %v506 = vld [vmem:[#allocation4 + $0x2b0] sm:$0xff]
    %v507 = vld [vmem:[#allocation4 + $0x2b8] sm:$0xff]
    %v508 = vld [vmem:[#allocation4 + $0x2c0] sm:$0xff]
    %v509 = vld [vmem:[#allocation4 + $0x2c8] sm:$0xff]
    %v510 = vld [vmem:[#allocation4 + $0x2d0] sm:$0xff]
    %v511 = vld [vmem:[#allocation4 + $0x2d8] sm:$0xff]
    %v512 = vld [vmem:[#allocation4 + $0x2e0] sm:$0xff]
    %v513 = vld [vmem:[#allocation4 + $0x2e8] sm:$0xff]
    %v514 = vld [vmem:[#allocation4 + $0x2f0] sm:$0xff]
    %v515 = vld [vmem:[#allocation4 + $0x2f8] sm:$0xff]
    %v516 = vld [vmem:[#allocation4 + $0x300] sm:$0xff]
    %v517 = vld [vmem:[#allocation4 + $0x308] sm:$0xff]
    %v518 = vld [vmem:[#allocation4 + $0x310] sm:$0xff]
    %v519 = vld [vmem:[#allocation4 + $0x318] sm:$0xff]
    %v520 = vld [vmem:[#allocation4 + $0x320] sm:$0xff]
    %v521 = vld [vmem:[#allocation4 + $0x328] sm:$0xff]
    %v522 = vld [vmem:[#allocation4 + $0x330] sm:$0xff]
    %v523 = vld [vmem:[#allocation4 + $0x338] sm:$0xff]
    %v524 = vld [vmem:[#allocation4 + $0x340] sm:$0xff]
    %v525 = vld [vmem:[#allocation4 + $0x348] sm:$0xff]
    %v526 = vld [vmem:[#allocation4 + $0x350] sm:$0xff]
    %v527 = vld [vmem:[#allocation4 + $0x358] sm:$0xff]
    %v528 = vld [vmem:[#allocation4 + $0x360] sm:$0xff]
    %v529 = vld [vmem:[#allocation4 + $0x368] sm:$0xff]
    %v530 = vld [vmem:[#allocation4 + $0x370] sm:$0xff]
    %v531 = vld [vmem:[#allocation4 + $0x378] sm:$0xff]
    %v532 = vld [vmem:[#allocation4 + $0x380] sm:$0xff]
    %v533 = vld [vmem:[#allocation4 + $0x388] sm:$0xff]
    %v534 = vld [vmem:[#allocation4 + $0x390] sm:$0xff]
    %v535 = vld [vmem:[#allocation4 + $0x398] sm:$0xff]
    %v536 = vld [vmem:[#allocation4 + $0x3a0] sm:$0xff]
    %v537 = vld [vmem:[#allocation4 + $0x3a8] sm:$0xff]
    %v538 = vld [vmem:[#allocation4 + $0x3b0] sm:$0xff]
    %v539 = vld [vmem:[#allocation4 + $0x3b8] sm:$0xff]
    %v540 = vld [vmem:[#allocation4 + $0x3c0] sm:$0xff]
    %v541 = vld [vmem:[#allocation4 + $0x3c8] sm:$0xff]
    %v542 = vld [vmem:[#allocation4 + $0x3d0] sm:$0xff]
    %v543 = vld [vmem:[#allocation4 + $0x3d8] sm:$0xff]
    %v544 = vld [vmem:[#allocation4 + $0x3e0] sm:$0xff]
    %v545 = vld [vmem:[#allocation4 + $0x3e8] sm:$0xff]
    %v546 = vld [vmem:[#allocation4 + $0x3f0] sm:$0xff]
    %v547 = vld [vmem:[#allocation4 + $0x3f8] sm:$0xff]
    %s548 = scalar_lea.vmem [#allocation4], 2048
    %v549 = vld [vmem:[%s548] ss:$8 sm:$0xf]
    %v551 = vlaneseq
    %v552 = vshrl.u32 %v551, 7
    %v553 = vsub.s32 0, %v552
    %v554 = vrot.slane %v549, %v553
    %v555 = vlaneseq
    %v556 = vshrl.u32 %v555, 7
    %v557 = vsub.s32 1, %v556
    %v558 = vrot.slane %v549, %v557
    %v559 = vlaneseq
    %v560 = vshrl.u32 %v559, 7
    %v561 = vsub.s32 2, %v560
    %v562 = vrot.slane %v549, %v561
    %v563 = vlaneseq
    %v564 = vshrl.u32 %v563, 7
    %v565 = vsub.s32 3, %v564
    %v566 = vrot.slane %v549, %v565
    %571 = vmatprep.subr.mxu0 %v421
    %572 = vmatpush1.msra.mxu0 %v420
    %573 = vmatprep.subr.mxu0 %v425
    %574 = vmatpush1.msra.mxu0 %v424
    %575 = vmatprep.subr.mxu0 %v429
    %576 = vmatpush1.msra.mxu0 %v428
    %577 = vmatprep.subr.mxu0 %v433
    %578 = vmatpush1.msra.mxu0 %v432
    %579 = vmatprep.subr.mxu0 %v437
    %580 = vmatpush1.msra.mxu0 %v436
    %581 = vmatprep.subr.mxu0 %v441
    %582 = vmatpush1.msra.mxu0 %v440
    %583 = vmatprep.subr.mxu0 %v445
    %584 = vmatpush1.msra.mxu0 %v444
    %585 = vmatprep.subr.mxu0 %v449
    %586 = vmatpush1.msra.mxu0 %v448
    %587 = vmatprep.subr.mxu0 %v453
    %588 = vmatpush1.msra.mxu0 %v452
    %589 = vmatprep.subr.mxu0 %v457
    %590 = vmatpush1.msra.mxu0 %v456
    %591 = vmatprep.subr.mxu0 %v461
    %592 = vmatpush1.msra.mxu0 %v460
    %593 = vmatprep.subr.mxu0 %v465
    %594 = vmatpush1.msra.mxu0 %v464
    %595 = vmatprep.subr.mxu0 %v469
    %596 = vmatpush1.msra.mxu0 %v468
    %597 = vmatprep.subr.mxu0 %v473
    %598 = vmatpush1.msra.mxu0 %v472
    %599 = vmatprep.subr.mxu0 %v477
    %600 = vmatpush1.msra.mxu0 %v476
    %601 = vmatprep.subr.mxu0 %v481
    %602 = vmatpush1.msra.mxu0 %v480
    %603 = vmatprep.subr.mxu0 0.0
    %604 = vmatpush1.msra.mxu0 0.0
    %605 = vmatprep.subr.mxu0 0.0
    %606 = vmatpush1.msra.mxu0 0.0
    %607 = vmatprep.subr.mxu0 0.0
    %608 = vmatpush1.msra.mxu0 0.0
    %609 = vmatprep.subr.mxu0 0.0
    %610 = vmatpush1.msra.mxu0 0.0
    %611 = vmatprep.subr.mxu0 0.0
    %612 = vmatpush1.msra.mxu0 0.0
    %613 = vmatprep.subr.mxu0 0.0
    %614 = vmatpush1.msra.mxu0 0.0
    %615 = vmatprep.subr.mxu0 0.0
    %616 = vmatpush1.msra.mxu0 0.0
    %617 = vmatprep.subr.mxu0 0.0
    %618 = vmatpush1.msra.mxu0 0.0
    %619 = vmatprep.subr.mxu0 0.0
    %620 = vmatpush1.msra.mxu0 0.0
    %621 = vmatprep.subr.mxu0 0.0
    %622 = vmatpush1.msra.mxu0 0.0
    %623 = vmatprep.subr.mxu0 0.0
    %624 = vmatpush1.msra.mxu0 0.0
    %625 = vmatprep.subr.mxu0 0.0
    %626 = vmatpush1.msra.mxu0 0.0
    %627 = vmatprep.subr.mxu0 0.0
    %628 = vmatpush1.msra.mxu0 0.0
    %629 = vmatprep.subr.mxu0 0.0
    %630 = vmatpush1.msra.mxu0 0.0
    %631 = vmatprep.subr.mxu0 0.0
    %632 = vmatpush1.msra.mxu0 0.0
    %633 = vmatprep.subr.mxu0 0.0
    %634 = vmatpush1.msra.mxu0 0.0
    %635 = vmatprep.mubr.f32.mxu0 0.0
    %636 = vmatmul.mubr.f32.gmra.mrb[0].mxu0 %v412
    %v637 = vpop.f32.mrb[0].mxu0
    %v638 = vadd.f32 %v554, %v637
    %v639 = vpop.f32.mrb[0].mxu0
    %v640 = vadd.f32 %v558, %v639
    %641 = vmatprep.mubr.f32.mxu0 0.0
    %642 = vmatmul.mubr.f32.gmra.mrb[0].mxu0 %v413
    %v643 = vpop.f32.mrb[0].mxu0
    %v644 = vadd.f32 %v554, %v643
    %v645 = vpop.f32.mrb[0].mxu0
    %v646 = vadd.f32 %v558, %v645
    %647 = vmatprep.mubr.f32.mxu0 0.0
    %648 = vmatmul.mubr.f32.gmra.mrb[0].mxu0 %v414
    %v649 = vpop.f32.mrb[0].mxu0
    %v650 = vadd.f32 %v554, %v649
    %v651 = vpop.f32.mrb[0].mxu0
    %v652 = vadd.f32 %v558, %v651
    %653 = vmatprep.mubr.f32.mxu0 0.0
    %654 = vmatmul.mubr.f32.gmra.mrb[0].mxu0 %v415
    %v655 = vpop.f32.mrb[0].mxu0
    %v656 = vadd.f32 %v554, %v655
    %v657 = vpop.f32.mrb[0].mxu0
    %v658 = vadd.f32 %v558, %v657
    %659 = vmatprep.mubr.f32.mxu0 0.0
    %660 = vmatmul.mubr.f32.gmra.mrb[0].mxu0 %v416
    %v661 = vpop.f32.mrb[0].mxu0
    %v662 = vadd.f32 %v554, %v661
    %v663 = vpop.f32.mrb[0].mxu0
    %v664 = vadd.f32 %v558, %v663
    %665 = vmatprep.mubr.f32.mxu0 0.0
    %666 = vmatmul.mubr.f32.gmra.mrb[0].mxu0 %v417
    %v667 = vpop.f32.mrb[0].mxu0
    %v668 = vadd.f32 %v554, %v667
    %v669 = vpop.f32.mrb[0].mxu0
    %v670 = vadd.f32 %v558, %v669
    %671 = vmatprep.mubr.f32.mxu0 0.0
    %672 = vmatmul.mubr.f32.gmra.mrb[0].mxu0 %v418
    %v673 = vpop.f32.mrb[0].mxu0
    %v674 = vadd.f32 %v554, %v673
    %v675 = vpop.f32.mrb[0].mxu0
    %v676 = vadd.f32 %v558, %v675
    %677 = vmatprep.mubr.f32.mxu0 0.0
    %678 = vmatmul.mubr.f32.gmra.mrb[0].mxu0 %v419
    %v679 = vpop.f32.mrb[0].mxu0
    %v680 = vadd.f32 %v554, %v679
    %v681 = vpop.f32.mrb[0].mxu0
    %v682 = vadd.f32 %v558, %v681
    %683 = vdwg.mxu0
    %684 = vmatprep.subr.mxu0 %v423
    %685 = vmatpush1.msra.mxu0 %v422
    %686 = vmatprep.subr.mxu0 %v427
    %687 = vmatpush1.msra.mxu0 %v426
    %688 = vmatprep.subr.mxu0 %v431
    %689 = vmatpush1.msra.mxu0 %v430
    %690 = vmatprep.subr.mxu0 %v435
    %691 = vmatpush1.msra.mxu0 %v434
    %692 = vmatprep.subr.mxu0 %v439
    %693 = vmatpush1.msra.mxu0 %v438
    %694 = vmatprep.subr.mxu0 %v443
    %695 = vmatpush1.msra.mxu0 %v442
    %696 = vmatprep.subr.mxu0 %v447
    %697 = vmatpush1.msra.mxu0 %v446
    %698 = vmatprep.subr.mxu0 %v451
    %699 = vmatpush1.msra.mxu0 %v450
    %700 = vmatprep.subr.mxu0 %v455
    %701 = vmatpush1.msra.mxu0 %v454
    %702 = vmatprep.subr.mxu0 %v459
    %703 = vmatpush1.msra.mxu0 %v458
    %704 = vmatprep.subr.mxu0 %v463
    %705 = vmatpush1.msra.mxu0 %v462
    %706 = vmatprep.subr.mxu0 %v467
    %707 = vmatpush1.msra.mxu0 %v466
    %708 = vmatprep.subr.mxu0 %v471
    %709 = vmatpush1.msra.mxu0 %v470
    %710 = vmatprep.subr.mxu0 %v475
    %711 = vmatpush1.msra.mxu0 %v474
    %712 = vmatprep.subr.mxu0 %v479
    %713 = vmatpush1.msra.mxu0 %v478
    %714 = vmatprep.subr.mxu0 %v483
    %715 = vmatpush1.msra.mxu0 %v482
    %716 = vmatprep.subr.mxu0 0.0
    %717 = vmatpush1.msra.mxu0 0.0
    %718 = vmatprep.subr.mxu0 0.0
    %719 = vmatpush1.msra.mxu0 0.0
    %720 = vmatprep.subr.mxu0 0.0
    %721 = vmatpush1.msra.mxu0 0.0
    %722 = vmatprep.subr.mxu0 0.0
    %723 = vmatpush1.msra.mxu0 0.0
    %724 = vmatprep.subr.mxu0 0.0
    %725 = vmatpush1.msra.mxu0 0.0
    %726 = vmatprep.subr.mxu0 0.0
    %727 = vmatpush1.msra.mxu0 0.0
    %728 = vmatprep.subr.mxu0 0.0
    %729 = vmatpush1.msra.mxu0 0.0
    %730 = vmatprep.subr.mxu0 0.0
    %731 = vmatpush1.msra.mxu0 0.0
    %732 = vmatprep.subr.mxu0 0.0
    %733 = vmatpush1.msra.mxu0 0.0
    %734 = vmatprep.subr.mxu0 0.0
    %735 = vmatpush1.msra.mxu0 0.0
    %736 = vmatprep.subr.mxu0 0.0
    %737 = vmatpush1.msra.mxu0 0.0
    %738 = vmatprep.subr.mxu0 0.0
    %739 = vmatpush1.msra.mxu0 0.0
    %740 = vmatprep.subr.mxu0 0.0
    %741 = vmatpush1.msra.mxu0 0.0
    %742 = vmatprep.subr.mxu0 0.0
    %743 = vmatpush1.msra.mxu0 0.0
    %744 = vmatprep.subr.mxu0 0.0
    %745 = vmatpush1.msra.mxu0 0.0
    %746 = vmatprep.subr.mxu0 0.0
    %747 = vmatpush1.msra.mxu0 0.0
    %748 = vmatprep.mubr.f32.mxu0 0.0
    %749 = vmatmul.mubr.f32.gmra.mrb[0].mxu0 %v412
    %v750 = vpop.f32.mrb[0].mxu0
    %v751 = vadd.f32 %v562, %v750
    %v752 = vpop.f32.mrb[0].mxu0
    %v753 = vadd.f32 %v566, %v752
    %754 = vmatprep.mubr.f32.mxu0 0.0
    %755 = vmatmul.mubr.f32.gmra.mrb[0].mxu0 %v413
    %v756 = vpop.f32.mrb[0].mxu0
    %v757 = vadd.f32 %v562, %v756
    %v758 = vpop.f32.mrb[0].mxu0
    %v759 = vadd.f32 %v566, %v758
    %760 = vmatprep.mubr.f32.mxu0 0.0
    %761 = vmatmul.mubr.f32.gmra.mrb[0].mxu0 %v414
    %v762 = vpop.f32.mrb[0].mxu0
    %v763 = vadd.f32 %v562, %v762
    %v764 = vpop.f32.mrb[0].mxu0
    %v765 = vadd.f32 %v566, %v764
    %766 = vmatprep.mubr.f32.mxu0 0.0
    %767 = vmatmul.mubr.f32.gmra.mrb[0].mxu0 %v415
    %v768 = vpop.f32.mrb[0].mxu0
    %v769 = vadd.f32 %v562, %v768
    %v770 = vpop.f32.mrb[0].mxu0
    %v771 = vadd.f32 %v566, %v770
    %772 = vmatprep.mubr.f32.mxu0 0.0
    %773 = vmatmul.mubr.f32.gmra.mrb[0].mxu0 %v416
    %v774 = vpop.f32.mrb[0].mxu0
    %v775 = vadd.f32 %v562, %v774
    %v776 = vpop.f32.mrb[0].mxu0
    %v777 = vadd.f32 %v566, %v776
    %778 = vmatprep.mubr.f32.mxu0 0.0
    %779 = vmatmul.mubr.f32.gmra.mrb[0].mxu0 %v417
    %v780 = vpop.f32.mrb[0].mxu0
    %v781 = vadd.f32 %v562, %v780
    %v782 = vpop.f32.mrb[0].mxu0
    %v783 = vadd.f32 %v566, %v782
    %784 = vmatprep.mubr.f32.mxu0 0.0
    %785 = vmatmul.mubr.f32.gmra.mrb[0].mxu0 %v418
    %v786 = vpop.f32.mrb[0].mxu0
    %v787 = vadd.f32 %v562, %v786
    %v788 = vpop.f32.mrb[0].mxu0
    %v789 = vadd.f32 %v566, %v788
    %790 = vmatprep.mubr.f32.mxu0 0.0
    %791 = vmatmul.mubr.f32.gmra.mrb[0].mxu0 %v419
    %v792 = vpop.f32.mrb[0].mxu0
    %v793 = vadd.f32 %v562, %v792
    %v794 = vpop.f32.mrb[0].mxu0
    %v795 = vadd.f32 %v566, %v794
    %796 = vdwg.mxu0
    %797 = vmatprep.subr.mxu0 %v485
    %798 = vmatpush1.msra.mxu0 %v484
    %799 = vmatprep.subr.mxu0 %v489
    %800 = vmatpush1.msra.mxu0 %v488
    %801 = vmatprep.subr.mxu0 %v493
    %802 = vmatpush1.msra.mxu0 %v492
    %803 = vmatprep.subr.mxu0 %v497
    %804 = vmatpush1.msra.mxu0 %v496
    %805 = vmatprep.subr.mxu0 %v501
    %806 = vmatpush1.msra.mxu0 %v500
    %807 = vmatprep.subr.mxu0 %v505
    %808 = vmatpush1.msra.mxu0 %v504
    %809 = vmatprep.subr.mxu0 %v509
    %810 = vmatpush1.msra.mxu0 %v508
    %811 = vmatprep.subr.mxu0 %v513
    %812 = vmatpush1.msra.mxu0 %v512
    %813 = vmatprep.subr.mxu0 %v517
    %814 = vmatpush1.msra.mxu0 %v516
    %815 = vmatprep.subr.mxu0 %v521
    %816 = vmatpush1.msra.mxu0 %v520
    %817 = vmatprep.subr.mxu0 %v525
    %818 = vmatpush1.msra.mxu0 %v524
    %819 = vmatprep.subr.mxu0 %v529
    %820 = vmatpush1.msra.mxu0 %v528
    %821 = vmatprep.subr.mxu0 %v533
    %822 = vmatpush1.msra.mxu0 %v532
    %823 = vmatprep.subr.mxu0 %v537
    %824 = vmatpush1.msra.mxu0 %v536
    %825 = vmatprep.subr.mxu0 %v541
    %826 = vmatpush1.msra.mxu0 %v540
    %827 = vmatprep.subr.mxu0 %v545
    %828 = vmatpush1.msra.mxu0 %v544
    %829 = vmatprep.subr.mxu0 0.0
    %830 = vmatpush1.msra.mxu0 0.0
    %831 = vmatprep.subr.mxu0 0.0
    %832 = vmatpush1.msra.mxu0 0.0
    %833 = vmatprep.subr.mxu0 0.0
    %834 = vmatpush1.msra.mxu0 0.0
    %835 = vmatprep.subr.mxu0 0.0
    %836 = vmatpush1.msra.mxu0 0.0
    %837 = vmatprep.subr.mxu0 0.0
    %838 = vmatpush1.msra.mxu0 0.0
    %839 = vmatprep.subr.mxu0 0.0
    %840 = vmatpush1.msra.mxu0 0.0
    %841 = vmatprep.subr.mxu0 0.0
    %842 = vmatpush1.msra.mxu0 0.0
    %843 = vmatprep.subr.mxu0 0.0
    %844 = vmatpush1.msra.mxu0 0.0
    %845 = vmatprep.subr.mxu0 0.0
    %846 = vmatpush1.msra.mxu0 0.0
    %847 = vmatprep.subr.mxu0 0.0
    %848 = vmatpush1.msra.mxu0 0.0
    %849 = vmatprep.subr.mxu0 0.0
    %850 = vmatpush1.msra.mxu0 0.0
    %851 = vmatprep.subr.mxu0 0.0
    %852 = vmatpush1.msra.mxu0 0.0
    %853 = vmatprep.subr.mxu0 0.0
    %854 = vmatpush1.msra.mxu0 0.0
    %855 = vmatprep.subr.mxu0 0.0
    %856 = vmatpush1.msra.mxu0 0.0
    %857 = vmatprep.subr.mxu0 0.0
    %858 = vmatpush1.msra.mxu0 0.0
    %859 = vmatprep.subr.mxu0 0.0
    %860 = vmatpush1.msra.mxu0 0.0
    %861 = vmatprep.mubr.f32.mxu0 0.0
    %862 = vmatmul.mubr.f32.gmra.mrb[0].mxu0 0.0
    %v863 = vpop.f32.mrb[0].mxu0
    %v864 = vadd.f32 0.0, %v863
    %v865 = vpop.f32.mrb[0].mxu0
    %v866 = vadd.f32 0.0, %v865
    %867 = vdwg.mxu0
    %868 = vmatprep.subr.mxu0 %v487
    %869 = vmatpush1.msra.mxu0 %v486
    %870 = vmatprep.subr.mxu0 %v491
    %871 = vmatpush1.msra.mxu0 %v490
    %872 = vmatprep.subr.mxu0 %v495
    %873 = vmatpush1.msra.mxu0 %v494
    %874 = vmatprep.subr.mxu0 %v499
    %875 = vmatpush1.msra.mxu0 %v498
    %876 = vmatprep.subr.mxu0 %v503
    %877 = vmatpush1.msra.mxu0 %v502
    %878 = vmatprep.subr.mxu0 %v507
    %879 = vmatpush1.msra.mxu0 %v506
    %880 = vmatprep.subr.mxu0 %v511
    %881 = vmatpush1.msra.mxu0 %v510
    %882 = vmatprep.subr.mxu0 %v515
    %883 = vmatpush1.msra.mxu0 %v514
    %884 = vmatprep.subr.mxu0 %v519
    %885 = vmatpush1.msra.mxu0 %v518
    %886 = vmatprep.subr.mxu0 %v523
    %887 = vmatpush1.msra.mxu0 %v522
    %888 = vmatprep.subr.mxu0 %v527
    %889 = vmatpush1.msra.mxu0 %v526
    %890 = vmatprep.subr.mxu0 %v531
    %891 = vmatpush1.msra.mxu0 %v530
    %892 = vmatprep.subr.mxu0 %v535
    %893 = vmatpush1.msra.mxu0 %v534
    %894 = vmatprep.subr.mxu0 %v539
    %895 = vmatpush1.msra.mxu0 %v538
    %896 = vmatprep.subr.mxu0 %v543
    %897 = vmatpush1.msra.mxu0 %v542
    %898 = vmatprep.subr.mxu0 %v547
    %899 = vmatpush1.msra.mxu0 %v546
    %900 = vmatprep.subr.mxu0 0.0
    %901 = vmatpush1.msra.mxu0 0.0
    %902 = vmatprep.subr.mxu0 0.0
    %903 = vmatpush1.msra.mxu0 0.0
    %904 = vmatprep.subr.mxu0 0.0
    %905 = vmatpush1.msra.mxu0 0.0
    %906 = vmatprep.subr.mxu0 0.0
    %907 = vmatpush1.msra.mxu0 0.0
    %908 = vmatprep.subr.mxu0 0.0
    %909 = vmatpush1.msra.mxu0 0.0
    %910 = vmatprep.subr.mxu0 0.0
    %911 = vmatpush1.msra.mxu0 0.0
    %912 = vmatprep.subr.mxu0 0.0
    %913 = vmatpush1.msra.mxu0 0.0
    %914 = vmatprep.subr.mxu0 0.0
    %915 = vmatpush1.msra.mxu0 0.0
    %916 = vmatprep.subr.mxu0 0.0
    %917 = vmatpush1.msra.mxu0 0.0
    %918 = vmatprep.subr.mxu0 0.0
    %919 = vmatpush1.msra.mxu0 0.0
    %920 = vmatprep.subr.mxu0 0.0
    %921 = vmatpush1.msra.mxu0 0.0
    %922 = vmatprep.subr.mxu0 0.0
    %923 = vmatpush1.msra.mxu0 0.0
    %924 = vmatprep.subr.mxu0 0.0
    %925 = vmatpush1.msra.mxu0 0.0
    %926 = vmatprep.subr.mxu0 0.0
    %927 = vmatpush1.msra.mxu0 0.0
    %928 = vmatprep.subr.mxu0 0.0
    %929 = vmatpush1.msra.mxu0 0.0
    %930 = vmatprep.subr.mxu0 0.0
    %931 = vmatpush1.msra.mxu0 0.0
    %932 = vmatprep.mubr.f32.mxu0 0.0
    %933 = vmatmul.mubr.f32.gmra.mrb[0].mxu0 0.0
    %v934 = vpop.f32.mrb[0].mxu0
    %v935 = vadd.f32 0.0, %v934
    %v936 = vpop.f32.mrb[0].mxu0
    %v937 = vadd.f32 0.0, %v936
    %938 = vdwg.mxu0
    %v939 = vadd.f32 %v638, %v864
    %v940 = vadd.f32 %v640, %v866
    %v941 = vadd.f32 %v751, %v935
    %v942 = vadd.f32 %v753, %v937
    %v943 = vxor.u32 %v939, 2147483648
    %v944 = vxor.u32 %v940, 2147483648
    %v945 = vxor.u32 %v941, 2147483648
    %v946 = vmul.f32 %v943, 1.442695
    %v947 = vpow.pop %v946
    %v948 = vmul.f32 %v944, 1.442695
    %v949 = vpow.pop %v948
    %v950 = vmul.f32 %v945, 1.442695
    %v951 = vpow.pop %v950
    %v952 = vadd.f32 %v947, 1.0
    %v953 = vadd.f32 %v949, 1.0
    %v954 = vadd.f32 %v951, 1.0
    %v955 = vrcp.pop %v952
    %v956 = vmul.f32 1.0, %v955
    %v957 = vrcp.pop %v953
    %v958 = vmul.f32 1.0, %v957
    %v959 = vrcp.pop %v954
    %v960 = vmul.f32 1.0, %v959
    %v961 = vtanh.pop %v942
    %v962 = vmul.f32 %v958, 0.0
    %v963 = vmul.f32 %v956, %v961
    %v964 = vadd.f32 %v962, %v963
    %v965 = vtanh.pop %v964
    %v966 = vmul.f32 %v960, %v965
    %967 = vmatprep.subr.mxu0 %v485
    %968 = vmatpush1.msra.mxu0 %v484
    %969 = vmatprep.subr.mxu0 %v489
    %970 = vmatpush1.msra.mxu0 %v488
    %971 = vmatprep.subr.mxu0 %v493
    %972 = vmatpush1.msra.mxu0 %v492
    %973 = vmatprep.subr.mxu0 %v497
    %974 = vmatpush1.msra.mxu0 %v496
    %975 = vmatprep.subr.mxu0 %v501
    %976 = vmatpush1.msra.mxu0 %v500
    %977 = vmatprep.subr.mxu0 %v505
    %978 = vmatpush1.msra.mxu0 %v504
    %979 = vmatprep.subr.mxu0 %v509
    %980 = vmatpush1.msra.mxu0 %v508
    %981 = vmatprep.subr.mxu0 %v513
    %982 = vmatpush1.msra.mxu0 %v512
    %983 = vmatprep.subr.mxu0 %v517
    %984 = vmatpush1.msra.mxu0 %v516
    %985 = vmatprep.subr.mxu0 %v521
    %986 = vmatpush1.msra.mxu0 %v520
    %987 = vmatprep.subr.mxu0 %v525
    %988 = vmatpush1.msra.mxu0 %v524
    %989 = vmatprep.subr.mxu0 %v529
    %990 = vmatpush1.msra.mxu0 %v528
    %991 = vmatprep.subr.mxu0 %v533
    %992 = vmatpush1.msra.mxu0 %v532
    %993 = vmatprep.subr.mxu0 %v537
    %994 = vmatpush1.msra.mxu0 %v536
    %995 = vmatprep.subr.mxu0 %v541
    %996 = vmatpush1.msra.mxu0 %v540
    %997 = vmatprep.subr.mxu0 %v545
    %998 = vmatpush1.msra.mxu0 %v544
    %999 = vmatprep.subr.mxu0 0.0
    %1000 = vmatpush1.msra.mxu0 0.0
    %1001 = vmatprep.subr.mxu0 0.0
    %1002 = vmatpush1.msra.mxu0 0.0
    %1003 = vmatprep.subr.mxu0 0.0
    %1004 = vmatpush1.msra.mxu0 0.0
    %1005 = vmatprep.subr.mxu0 0.0
    %1006 = vmatpush1.msra.mxu0 0.0
    %1007 = vmatprep.subr.mxu0 0.0
    %1008 = vmatpush1.msra.mxu0 0.0
    %1009 = vmatprep.subr.mxu0 0.0
    %1010 = vmatpush1.msra.mxu0 0.0
    %1011 = vmatprep.subr.mxu0 0.0
    %1012 = vmatpush1.msra.mxu0 0.0
    %1013 = vmatprep.subr.mxu0 0.0
    %1014 = vmatpush1.msra.mxu0 0.0
    %1015 = vmatprep.subr.mxu0 0.0
    %1016 = vmatpush1.msra.mxu0 0.0
    %1017 = vmatprep.subr.mxu0 0.0
    %1018 = vmatpush1.msra.mxu0 0.0
    %1019 = vmatprep.subr.mxu0 0.0
    %1020 = vmatpush1.msra.mxu0 0.0
    %1021 = vmatprep.subr.mxu0 0.0
    %1022 = vmatpush1.msra.mxu0 0.0
    %1023 = vmatprep.subr.mxu0 0.0
    %1024 = vmatpush1.msra.mxu0 0.0
    %1025 = vmatprep.subr.mxu0 0.0
    %1026 = vmatpush1.msra.mxu0 0.0
    %1027 = vmatprep.subr.mxu0 0.0
    %1028 = vmatpush1.msra.mxu0 0.0
    %1029 = vmatprep.subr.mxu0 0.0
    %1030 = vmatpush1.msra.mxu0 0.0
    %1031 = vmatprep.mubr.f32.mxu0 0.0
    %1032 = vmatmul.mubr.f32.gmra.mrb[0].mxu0 %v966
    %v1033 = vpop.f32.mrb[0].mxu0
    %v1034 = vadd.f32 0.0, %v1033
    %v1035 = vpop.f32.mrb[0].mxu0
    %v1036 = vadd.f32 0.0, %v1035
    %1037 = vdwg.mxu0
    %1038 = vmatprep.subr.mxu0 %v487
    %1039 = vmatpush1.msra.mxu0 %v486
    %1040 = vmatprep.subr.mxu0 %v491
    %1041 = vmatpush1.msra.mxu0 %v490
    %1042 = vmatprep.subr.mxu0 %v495
    %1043 = vmatpush1.msra.mxu0 %v494
    %1044 = vmatprep.subr.mxu0 %v499
    %1045 = vmatpush1.msra.mxu0 %v498
    %1046 = vmatprep.subr.mxu0 %v503
    %1047 = vmatpush1.msra.mxu0 %v502
    %1048 = vmatprep.subr.mxu0 %v507
    %1049 = vmatpush1.msra.mxu0 %v506
    %1050 = vmatprep.subr.mxu0 %v511
    %1051 = vmatpush1.msra.mxu0 %v510
    %1052 = vmatprep.subr.mxu0 %v515
    %1053 = vmatpush1.msra.mxu0 %v514
    %1054 = vmatprep.subr.mxu0 %v519
    %1055 = vmatpush1.msra.mxu0 %v518
    %1056 = vmatprep.subr.mxu0 %v523
    %1057 = vmatpush1.msra.mxu0 %v522
    %1058 = vmatprep.subr.mxu0 %v527
    %1059 = vmatpush1.msra.mxu0 %v526
    %1060 = vmatprep.subr.mxu0 %v531
    %1061 = vmatpush1.msra.mxu0 %v530
    %1062 = vmatprep.subr.mxu0 %v535
    %1063 = vmatpush1.msra.mxu0 %v534
    %1064 = vmatprep.subr.mxu0 %v539
    %1065 = vmatpush1.msra.mxu0 %v538
    %1066 = vmatprep.subr.mxu0 %v543
    %1067 = vmatpush1.msra.mxu0 %v542
    %1068 = vmatprep.subr.mxu0 %v547
    %1069 = vmatpush1.msra.mxu0 %v546
    %1070 = vmatprep.subr.mxu0 0.0
    %1071 = vmatpush1.msra.mxu0 0.0
    %1072 = vmatprep.subr.mxu0 0.0
    %1073 = vmatpush1.msra.mxu0 0.0
    %1074 = vmatprep.subr.mxu0 0.0
    %1075 = vmatpush1.msra.mxu0 0.0
    %1076 = vmatprep.subr.mxu0 0.0
    %1077 = vmatpush1.msra.mxu0 0.0
    %1078 = vmatprep.subr.mxu0 0.0
    %1079 = vmatpush1.msra.mxu0 0.0
    %1080 = vmatprep.subr.mxu0 0.0
    %1081 = vmatpush1.msra.mxu0 0.0
    %1082 = vmatprep.subr.mxu0 0.0
    %1083 = vmatpush1.msra.mxu0 0.0
    %1084 = vmatprep.subr.mxu0 0.0
    %1085 = vmatpush1.msra.mxu0 0.0
    %1086 = vmatprep.subr.mxu0 0.0
    %1087 = vmatpush1.msra.mxu0 0.0
    %1088 = vmatprep.subr.mxu0 0.0
    %1089 = vmatpush1.msra.mxu0 0.0
    %1090 = vmatprep.subr.mxu0 0.0
    %1091 = vmatpush1.msra.mxu0 0.0
    %1092 = vmatprep.subr.mxu0 0.0
    %1093 = vmatpush1.msra.mxu0 0.0
    %1094 = vmatprep.subr.mxu0 0.0
    %1095 = vmatpush1.msra.mxu0 0.0
    %1096 = vmatprep.subr.mxu0 0.0
    %1097 = vmatpush1.msra.mxu0 0.0
    %1098 = vmatprep.subr.mxu0 0.0
    %1099 = vmatpush1.msra.mxu0 0.0
    %1100 = vmatprep.subr.mxu0 0.0
    %1101 = vmatpush1.msra.mxu0 0.0
    %1102 = vmatprep.mubr.f32.mxu0 0.0
    %1103 = vmatmul.mubr.f32.gmra.mrb[0].mxu0 %v966
    %v1104 = vpop.f32.mrb[0].mxu0
    %v1105 = vadd.f32 0.0, %v1104
    %v1106 = vpop.f32.mrb[0].mxu0
    %v1107 = vadd.f32 0.0, %v1106
    %1108 = vdwg.mxu0
    %v1109 = vadd.f32 %v644, %v1034
    %v1110 = vadd.f32 %v646, %v1036
    %v1111 = vadd.f32 %v757, %v1105
    %v1112 = vadd.f32 %v759, %v1107
    %v1113 = vxor.u32 %v1109, 2147483648
    %v1114 = vxor.u32 %v1110, 2147483648
    %v1115 = vxor.u32 %v1111, 2147483648
    %v1116 = vmul.f32 %v1113, 1.442695
    %v1117 = vpow.pop %v1116
    %v1118 = vmul.f32 %v1114, 1.442695
    %v1119 = vpow.pop %v1118
    %v1120 = vmul.f32 %v1115, 1.442695
    %v1121 = vpow.pop %v1120
    %v1122 = vadd.f32 %v1117, 1.0
    %v1123 = vadd.f32 %v1119, 1.0
    %v1124 = vadd.f32 %v1121, 1.0
    %v1125 = vrcp.pop %v1122
    %v1126 = vmul.f32 1.0, %v1125
    %v1127 = vrcp.pop %v1123
    %v1128 = vmul.f32 1.0, %v1127
    %v1129 = vrcp.pop %v1124
    %v1130 = vmul.f32 1.0, %v1129
    %v1131 = vtanh.pop %v1112
    %v1132 = vmul.f32 %v1128, %v964
    %v1133 = vmul.f32 %v1126, %v1131
    %v1134 = vadd.f32 %v1132, %v1133
    %v1135 = vtanh.pop %v1134
    %v1136 = vmul.f32 %v1130, %v1135
    %1137 = vmatprep.subr.mxu0 %v485
    %1138 = vmatpush1.msra.mxu0 %v484
    %1139 = vmatprep.subr.mxu0 %v489
    %1140 = vmatpush1.msra.mxu0 %v488
    %1141 = vmatprep.subr.mxu0 %v493
    %1142 = vmatpush1.msra.mxu0 %v492
    %1143 = vmatprep.subr.mxu0 %v497
    %1144 = vmatpush1.msra.mxu0 %v496
    %1145 = vmatprep.subr.mxu0 %v501
    %1146 = vmatpush1.msra.mxu0 %v500
    %1147 = vmatprep.subr.mxu0 %v505
    %1148 = vmatpush1.msra.mxu0 %v504
    %1149 = vmatprep.subr.mxu0 %v509
    %1150 = vmatpush1.msra.mxu0 %v508
    %1151 = vmatprep.subr.mxu0 %v513
    %1152 = vmatpush1.msra.mxu0 %v512
    %1153 = vmatprep.subr.mxu0 %v517
    %1154 = vmatpush1.msra.mxu0 %v516
    %1155 = vmatprep.subr.mxu0 %v521
    %1156 = vmatpush1.msra.mxu0 %v520
    %1157 = vmatprep.subr.mxu0 %v525
    %1158 = vmatpush1.msra.mxu0 %v524
    %1159 = vmatprep.subr.mxu0 %v529
    %1160 = vmatpush1.msra.mxu0 %v528
    %1161 = vmatprep.subr.mxu0 %v533
    %1162 = vmatpush1.msra.mxu0 %v532
    %1163 = vmatprep.subr.mxu0 %v537
    %1164 = vmatpush1.msra.mxu0 %v536
    %1165 = vmatprep.subr.mxu0 %v541
    %1166 = vmatpush1.msra.mxu0 %v540
    %1167 = vmatprep.subr.mxu0 %v545
    %1168 = vmatpush1.msra.mxu0 %v544
    %1169 = vmatprep.subr.mxu0 0.0
    %1170 = vmatpush1.msra.mxu0 0.0
    %1171 = vmatprep.subr.mxu0 0.0
    %1172 = vmatpush1.msra.mxu0 0.0
    %1173 = vmatprep.subr.mxu0 0.0
    %1174 = vmatpush1.msra.mxu0 0.0
    %1175 = vmatprep.subr.mxu0 0.0
    %1176 = vmatpush1.msra.mxu0 0.0
    %1177 = vmatprep.subr.mxu0 0.0
    %1178 = vmatpush1.msra.mxu0 0.0
    %1179 = vmatprep.subr.mxu0 0.0
    %1180 = vmatpush1.msra.mxu0 0.0
    %1181 = vmatprep.subr.mxu0 0.0
    %1182 = vmatpush1.msra.mxu0 0.0
    %1183 = vmatprep.subr.mxu0 0.0
    %1184 = vmatpush1.msra.mxu0 0.0
    %1185 = vmatprep.subr.mxu0 0.0
    %1186 = vmatpush1.msra.mxu0 0.0
    %1187 = vmatprep.subr.mxu0 0.0
    %1188 = vmatpush1.msra.mxu0 0.0
    %1189 = vmatprep.subr.mxu0 0.0
    %1190 = vmatpush1.msra.mxu0 0.0
    %1191 = vmatprep.subr.mxu0 0.0
    %1192 = vmatpush1.msra.mxu0 0.0
    %1193 = vmatprep.subr.mxu0 0.0
    %1194 = vmatpush1.msra.mxu0 0.0
    %1195 = vmatprep.subr.mxu0 0.0
    %1196 = vmatpush1.msra.mxu0 0.0
    %1197 = vmatprep.subr.mxu0 0.0
    %1198 = vmatpush1.msra.mxu0 0.0
    %1199 = vmatprep.subr.mxu0 0.0
    %1200 = vmatpush1.msra.mxu0 0.0
    %1201 = vmatprep.mubr.f32.mxu0 0.0
    %1202 = vmatmul.mubr.f32.gmra.mrb[0].mxu0 %v1136
    %v1203 = vpop.f32.mrb[0].mxu0
    %v1204 = vadd.f32 0.0, %v1203
    %v1205 = vpop.f32.mrb[0].mxu0
    %v1206 = vadd.f32 0.0, %v1205
    %1207 = vdwg.mxu0
    %1208 = vmatprep.subr.mxu0 %v487
    %1209 = vmatpush1.msra.mxu0 %v486
    %1210 = vmatprep.subr.mxu0 %v491
    %1211 = vmatpush1.msra.mxu0 %v490
    %1212 = vmatprep.subr.mxu0 %v495
    %1213 = vmatpush1.msra.mxu0 %v494
    %1214 = vmatprep.subr.mxu0 %v499
    %1215 = vmatpush1.msra.mxu0 %v498
    %1216 = vmatprep.subr.mxu0 %v503
    %1217 = vmatpush1.msra.mxu0 %v502
    %1218 = vmatprep.subr.mxu0 %v507
    %1219 = vmatpush1.msra.mxu0 %v506
    %1220 = vmatprep.subr.mxu0 %v511
    %1221 = vmatpush1.msra.mxu0 %v510
    %1222 = vmatprep.subr.mxu0 %v515
    %1223 = vmatpush1.msra.mxu0 %v514
    %1224 = vmatprep.subr.mxu0 %v519
    %1225 = vmatpush1.msra.mxu0 %v518
    %1226 = vmatprep.subr.mxu0 %v523
    %1227 = vmatpush1.msra.mxu0 %v522
    %1228 = vmatprep.subr.mxu0 %v527
    %1229 = vmatpush1.msra.mxu0 %v526
    %1230 = vmatprep.subr.mxu0 %v531
    %1231 = vmatpush1.msra.mxu0 %v530
    %1232 = vmatprep.subr.mxu0 %v535
    %1233 = vmatpush1.msra.mxu0 %v534
    %1234 = vmatprep.subr.mxu0 %v539
    %1235 = vmatpush1.msra.mxu0 %v538
    %1236 = vmatprep.subr.mxu0 %v543
    %1237 = vmatpush1.msra.mxu0 %v542
    %1238 = vmatprep.subr.mxu0 %v547
    %1239 = vmatpush1.msra.mxu0 %v546
    %1240 = vmatprep.subr.mxu0 0.0
    %1241 = vmatpush1.msra.mxu0 0.0
    %1242 = vmatprep.subr.mxu0 0.0
    %1243 = vmatpush1.msra.mxu0 0.0
    %1244 = vmatprep.subr.mxu0 0.0
    %1245 = vmatpush1.msra.mxu0 0.0
    %1246 = vmatprep.subr.mxu0 0.0
    %1247 = vmatpush1.msra.mxu0 0.0
    %1248 = vmatprep.subr.mxu0 0.0
    %1249 = vmatpush1.msra.mxu0 0.0
    %1250 = vmatprep.subr.mxu0 0.0
    %1251 = vmatpush1.msra.mxu0 0.0
    %1252 = vmatprep.subr.mxu0 0.0
    %1253 = vmatpush1.msra.mxu0 0.0
    %1254 = vmatprep.subr.mxu0 0.0
    %1255 = vmatpush1.msra.mxu0 0.0
    %1256 = vmatprep.subr.mxu0 0.0
    %1257 = vmatpush1.msra.mxu0 0.0
    %1258 = vmatprep.subr.mxu0 0.0
    %1259 = vmatpush1.msra.mxu0 0.0
    %1260 = vmatprep.subr.mxu0 0.0
    %1261 = vmatpush1.msra.mxu0 0.0
    %1262 = vmatprep.subr.mxu0 0.0
    %1263 = vmatpush1.msra.mxu0 0.0
    %1264 = vmatprep.subr.mxu0 0.0
    %1265 = vmatpush1.msra.mxu0 0.0
    %1266 = vmatprep.subr.mxu0 0.0
    %1267 = vmatpush1.msra.mxu0 0.0
    %1268 = vmatprep.subr.mxu0 0.0
    %1269 = vmatpush1.msra.mxu0 0.0
    %1270 = vmatprep.subr.mxu0 0.0
    %1271 = vmatpush1.msra.mxu0 0.0
    %1272 = vmatprep.mubr.f32.mxu0 0.0
    %1273 = vmatmul.mubr.f32.gmra.mrb[0].mxu0 %v1136
    %v1274 = vpop.f32.mrb[0].mxu0
    %v1275 = vadd.f32 0.0, %v1274
    %v1276 = vpop.f32.mrb[0].mxu0
    %v1277 = vadd.f32 0.0, %v1276
    %1278 = vdwg.mxu0
    %v1279 = vadd.f32 %v650, %v1204
    %v1280 = vadd.f32 %v652, %v1206
    %v1281 = vadd.f32 %v763, %v1275
    %v1282 = vadd.f32 %v765, %v1277
    %v1283 = vxor.u32 %v1279, 2147483648
    %v1284 = vxor.u32 %v1280, 2147483648
    %v1285 = vxor.u32 %v1281, 2147483648
    %v1286 = vmul.f32 %v1283, 1.442695
    %v1287 = vpow.pop %v1286
    %v1288 = vmul.f32 %v1284, 1.442695
    %v1289 = vpow.pop %v1288
    %v1290 = vmul.f32 %v1285, 1.442695
    %v1291 = vpow.pop %v1290
    %v1292 = vadd.f32 %v1287, 1.0
    %v1293 = vadd.f32 %v1289, 1.0
    %v1294 = vadd.f32 %v1291, 1.0
    %v1295 = vrcp.pop %v1292
    %v1296 = vmul.f32 1.0, %v1295
    %v1297 = vrcp.pop %v1293
    %v1298 = vmul.f32 1.0, %v1297
    %v1299 = vrcp.pop %v1294
    %v1300 = vmul.f32 1.0, %v1299
    %v1301 = vtanh.pop %v1282
    %v1302 = vmul.f32 %v1298, %v1134
    %v1303 = vmul.f32 %v1296, %v1301
    %v1304 = vadd.f32 %v1302, %v1303
    %v1305 = vtanh.pop %v1304
    %v1306 = vmul.f32 %v1300, %v1305
    %1307 = vmatprep.subr.mxu0 %v485
    %1308 = vmatpush1.msra.mxu0 %v484
    %1309 = vmatprep.subr.mxu0 %v489
    %1310 = vmatpush1.msra.mxu0 %v488
    %1311 = vmatprep.subr.mxu0 %v493
    %1312 = vmatpush1.msra.mxu0 %v492
    %1313 = vmatprep.subr.mxu0 %v497
    %1314 = vmatpush1.msra.mxu0 %v496
    %1315 = vmatprep.subr.mxu0 %v501
    %1316 = vmatpush1.msra.mxu0 %v500
    %1317 = vmatprep.subr.mxu0 %v505
    %1318 = vmatpush1.msra.mxu0 %v504
    %1319 = vmatprep.subr.mxu0 %v509
    %1320 = vmatpush1.msra.mxu0 %v508
    %1321 = vmatprep.subr.mxu0 %v513
    %1322 = vmatpush1.msra.mxu0 %v512
    %1323 = vmatprep.subr.mxu0 %v517
    %1324 = vmatpush1.msra.mxu0 %v516
    %1325 = vmatprep.subr.mxu0 %v521
    %1326 = vmatpush1.msra.mxu0 %v520
    %1327 = vmatprep.subr.mxu0 %v525
    %1328 = vmatpush1.msra.mxu0 %v524
    %1329 = vmatprep.subr.mxu0 %v529
    %1330 = vmatpush1.msra.mxu0 %v528
    %1331 = vmatprep.subr.mxu0 %v533
    %1332 = vmatpush1.msra.mxu0 %v532
    %1333 = vmatprep.subr.mxu0 %v537
    %1334 = vmatpush1.msra.mxu0 %v536
    %1335 = vmatprep.subr.mxu0 %v541
    %1336 = vmatpush1.msra.mxu0 %v540
    %1337 = vmatprep.subr.mxu0 %v545
    %1338 = vmatpush1.msra.mxu0 %v544
    %1339 = vmatprep.subr.mxu0 0.0
    %1340 = vmatpush1.msra.mxu0 0.0
    %1341 = vmatprep.subr.mxu0 0.0
    %1342 = vmatpush1.msra.mxu0 0.0
    %1343 = vmatprep.subr.mxu0 0.0
    %1344 = vmatpush1.msra.mxu0 0.0
    %1345 = vmatprep.subr.mxu0 0.0
    %1346 = vmatpush1.msra.mxu0 0.0
    %1347 = vmatprep.subr.mxu0 0.0
    %1348 = vmatpush1.msra.mxu0 0.0
    %1349 = vmatprep.subr.mxu0 0.0
    %1350 = vmatpush1.msra.mxu0 0.0
    %1351 = vmatprep.subr.mxu0 0.0
    %1352 = vmatpush1.msra.mxu0 0.0
    %1353 = vmatprep.subr.mxu0 0.0
    %1354 = vmatpush1.msra.mxu0 0.0
    %1355 = vmatprep.subr.mxu0 0.0
    %1356 = vmatpush1.msra.mxu0 0.0
    %1357 = vmatprep.subr.mxu0 0.0
    %1358 = vmatpush1.msra.mxu0 0.0
    %1359 = vmatprep.subr.mxu0 0.0
    %1360 = vmatpush1.msra.mxu0 0.0
    %1361 = vmatprep.subr.mxu0 0.0
    %1362 = vmatpush1.msra.mxu0 0.0
    %1363 = vmatprep.subr.mxu0 0.0
    %1364 = vmatpush1.msra.mxu0 0.0
    %1365 = vmatprep.subr.mxu0 0.0
    %1366 = vmatpush1.msra.mxu0 0.0
    %1367 = vmatprep.subr.mxu0 0.0
    %1368 = vmatpush1.msra.mxu0 0.0
    %1369 = vmatprep.subr.mxu0 0.0
    %1370 = vmatpush1.msra.mxu0 0.0
    %1371 = vmatprep.mubr.f32.mxu0 0.0
    %1372 = vmatmul.mubr.f32.gmra.mrb[0].mxu0 %v1306
    %v1373 = vpop.f32.mrb[0].mxu0
    %v1374 = vadd.f32 0.0, %v1373
    %v1375 = vpop.f32.mrb[0].mxu0
    %v1376 = vadd.f32 0.0, %v1375
    %1377 = vdwg.mxu0
    %1378 = vmatprep.subr.mxu0 %v487
    %1379 = vmatpush1.msra.mxu0 %v486
    %1380 = vmatprep.subr.mxu0 %v491
    %1381 = vmatpush1.msra.mxu0 %v490
    %1382 = vmatprep.subr.mxu0 %v495
    %1383 = vmatpush1.msra.mxu0 %v494
    %1384 = vmatprep.subr.mxu0 %v499
    %1385 = vmatpush1.msra.mxu0 %v498
    %1386 = vmatprep.subr.mxu0 %v503
    %1387 = vmatpush1.msra.mxu0 %v502
    %1388 = vmatprep.subr.mxu0 %v507
    %1389 = vmatpush1.msra.mxu0 %v506
    %1390 = vmatprep.subr.mxu0 %v511
    %1391 = vmatpush1.msra.mxu0 %v510
    %1392 = vmatprep.subr.mxu0 %v515
    %1393 = vmatpush1.msra.mxu0 %v514
    %1394 = vmatprep.subr.mxu0 %v519
    %1395 = vmatpush1.msra.mxu0 %v518
    %1396 = vmatprep.subr.mxu0 %v523
    %1397 = vmatpush1.msra.mxu0 %v522
    %1398 = vmatprep.subr.mxu0 %v527
    %1399 = vmatpush1.msra.mxu0 %v526
    %1400 = vmatprep.subr.mxu0 %v531
    %1401 = vmatpush1.msra.mxu0 %v530
    %1402 = vmatprep.subr.mxu0 %v535
    %1403 = vmatpush1.msra.mxu0 %v534
    %1404 = vmatprep.subr.mxu0 %v539
    %1405 = vmatpush1.msra.mxu0 %v538
    %1406 = vmatprep.subr.mxu0 %v543
    %1407 = vmatpush1.msra.mxu0 %v542
    %1408 = vmatprep.subr.mxu0 %v547
    %1409 = vmatpush1.msra.mxu0 %v546
    %1410 = vmatprep.subr.mxu0 0.0
    %1411 = vmatpush1.msra.mxu0 0.0
    %1412 = vmatprep.subr.mxu0 0.0
    %1413 = vmatpush1.msra.mxu0 0.0
    %1414 = vmatprep.subr.mxu0 0.0
    %1415 = vmatpush1.msra.mxu0 0.0
    %1416 = vmatprep.subr.mxu0 0.0
    %1417 = vmatpush1.msra.mxu0 0.0
    %1418 = vmatprep.subr.mxu0 0.0
    %1419 = vmatpush1.msra.mxu0 0.0
    %1420 = vmatprep.subr.mxu0 0.0
    %1421 = vmatpush1.msra.mxu0 0.0
    %1422 = vmatprep.subr.mxu0 0.0
    %1423 = vmatpush1.msra.mxu0 0.0
    %1424 = vmatprep.subr.mxu0 0.0
    %1425 = vmatpush1.msra.mxu0 0.0
    %1426 = vmatprep.subr.mxu0 0.0
    %1427 = vmatpush1.msra.mxu0 0.0
    %1428 = vmatprep.subr.mxu0 0.0
    %1429 = vmatpush1.msra.mxu0 0.0
    %1430 = vmatprep.subr.mxu0 0.0
    %1431 = vmatpush1.msra.mxu0 0.0
    %1432 = vmatprep.subr.mxu0 0.0
    %1433 = vmatpush1.msra.mxu0 0.0
    %1434 = vmatprep.subr.mxu0 0.0
    %1435 = vmatpush1.msra.mxu0 0.0
    %1436 = vmatprep.subr.mxu0 0.0
    %1437 = vmatpush1.msra.mxu0 0.0
    %1438 = vmatprep.subr.mxu0 0.0
    %1439 = vmatpush1.msra.mxu0 0.0
    %1440 = vmatprep.subr.mxu0 0.0
    %1441 = vmatpush1.msra.mxu0 0.0
    %1442 = vmatprep.mubr.f32.mxu0 0.0
    %1443 = vmatmul.mubr.f32.gmra.mrb[0].mxu0 %v1306
    %v1444 = vpop.f32.mrb[0].mxu0
    %v1445 = vadd.f32 0.0, %v1444
    %v1446 = vpop.f32.mrb[0].mxu0
    %v1447 = vadd.f32 0.0, %v1446
    %1448 = vdwg.mxu0
    %v1449 = vadd.f32 %v656, %v1374
    %v1450 = vadd.f32 %v658, %v1376
    %v1451 = vadd.f32 %v769, %v1445
    %v1452 = vadd.f32 %v771, %v1447
    %v1453 = vxor.u32 %v1449, 2147483648
    %v1454 = vxor.u32 %v1450, 2147483648
    %v1455 = vxor.u32 %v1451, 2147483648
    %v1456 = vmul.f32 %v1453, 1.442695
    %v1457 = vpow.pop %v1456
    %v1458 = vmul.f32 %v1454, 1.442695
    %v1459 = vpow.pop %v1458
    %v1460 = vmul.f32 %v1455, 1.442695
    %v1461 = vpow.pop %v1460
    %v1462 = vadd.f32 %v1457, 1.0
    %v1463 = vadd.f32 %v1459, 1.0
    %v1464 = vadd.f32 %v1461, 1.0
    %v1465 = vrcp.pop %v1462
    %v1466 = vmul.f32 1.0, %v1465
    %v1467 = vrcp.pop %v1463
    %v1468 = vmul.f32 1.0, %v1467
    %v1469 = vrcp.pop %v1464
    %v1470 = vmul.f32 1.0, %v1469
    %v1471 = vtanh.pop %v1452
    %v1472 = vmul.f32 %v1468, %v1304
    %v1473 = vmul.f32 %v1466, %v1471
    %v1474 = vadd.f32 %v1472, %v1473
    %v1475 = vtanh.pop %v1474
    %v1476 = vmul.f32 %v1470, %v1475
    %1477 = vmatprep.subr.mxu0 %v485
    %1478 = vmatpush1.msra.mxu0 %v484
    %1479 = vmatprep.subr.mxu0 %v489
    %1480 = vmatpush1.msra.mxu0 %v488
    %1481 = vmatprep.subr.mxu0 %v493
    %1482 = vmatpush1.msra.mxu0 %v492
    %1483 = vmatprep.subr.mxu0 %v497
    %1484 = vmatpush1.msra.mxu0 %v496
    %1485 = vmatprep.subr.mxu0 %v501
    %1486 = vmatpush1.msra.mxu0 %v500
    %1487 = vmatprep.subr.mxu0 %v505
    %1488 = vmatpush1.msra.mxu0 %v504
    %1489 = vmatprep.subr.mxu0 %v509
    %1490 = vmatpush1.msra.mxu0 %v508
    %1491 = vmatprep.subr.mxu0 %v513
    %1492 = vmatpush1.msra.mxu0 %v512
    %1493 = vmatprep.subr.mxu0 %v517
    %1494 = vmatpush1.msra.mxu0 %v516
    %1495 = vmatprep.subr.mxu0 %v521
    %1496 = vmatpush1.msra.mxu0 %v520
    %1497 = vmatprep.subr.mxu0 %v525
    %1498 = vmatpush1.msra.mxu0 %v524
    %1499 = vmatprep.subr.mxu0 %v529
    %1500 = vmatpush1.msra.mxu0 %v528
    %1501 = vmatprep.subr.mxu0 %v533
    %1502 = vmatpush1.msra.mxu0 %v532
    %1503 = vmatprep.subr.mxu0 %v537
    %1504 = vmatpush1.msra.mxu0 %v536
    %1505 = vmatprep.subr.mxu0 %v541
    %1506 = vmatpush1.msra.mxu0 %v540
    %1507 = vmatprep.subr.mxu0 %v545
    %1508 = vmatpush1.msra.mxu0 %v544
    %1509 = vmatprep.subr.mxu0 0.0
    %1510 = vmatpush1.msra.mxu0 0.0
    %1511 = vmatprep.subr.mxu0 0.0
    %1512 = vmatpush1.msra.mxu0 0.0
    %1513 = vmatprep.subr.mxu0 0.0
    %1514 = vmatpush1.msra.mxu0 0.0
    %1515 = vmatprep.subr.mxu0 0.0
    %1516 = vmatpush1.msra.mxu0 0.0
    %1517 = vmatprep.subr.mxu0 0.0
    %1518 = vmatpush1.msra.mxu0 0.0
    %1519 = vmatprep.subr.mxu0 0.0
    %1520 = vmatpush1.msra.mxu0 0.0
    %1521 = vmatprep.subr.mxu0 0.0
    %1522 = vmatpush1.msra.mxu0 0.0
    %1523 = vmatprep.subr.mxu0 0.0
    %1524 = vmatpush1.msra.mxu0 0.0
    %1525 = vmatprep.subr.mxu0 0.0
    %1526 = vmatpush1.msra.mxu0 0.0
    %1527 = vmatprep.subr.mxu0 0.0
    %1528 = vmatpush1.msra.mxu0 0.0
    %1529 = vmatprep.subr.mxu0 0.0
    %1530 = vmatpush1.msra.mxu0 0.0
    %1531 = vmatprep.subr.mxu0 0.0
    %1532 = vmatpush1.msra.mxu0 0.0
    %1533 = vmatprep.subr.mxu0 0.0
    %1534 = vmatpush1.msra.mxu0 0.0
    %1535 = vmatprep.subr.mxu0 0.0
    %1536 = vmatpush1.msra.mxu0 0.0
    %1537 = vmatprep.subr.mxu0 0.0
    %1538 = vmatpush1.msra.mxu0 0.0
    %1539 = vmatprep.subr.mxu0 0.0
    %1540 = vmatpush1.msra.mxu0 0.0
    %1541 = vmatprep.mubr.f32.mxu0 0.0
    %1542 = vmatmul.mubr.f32.gmra.mrb[0].mxu0 %v1476
    %v1543 = vpop.f32.mrb[0].mxu0
    %v1544 = vadd.f32 0.0, %v1543
    %v1545 = vpop.f32.mrb[0].mxu0
    %v1546 = vadd.f32 0.0, %v1545
    %1547 = vdwg.mxu0
    %1548 = vmatprep.subr.mxu0 %v487
    %1549 = vmatpush1.msra.mxu0 %v486
    %1550 = vmatprep.subr.mxu0 %v491
    %1551 = vmatpush1.msra.mxu0 %v490
    %1552 = vmatprep.subr.mxu0 %v495
    %1553 = vmatpush1.msra.mxu0 %v494
    %1554 = vmatprep.subr.mxu0 %v499
    %1555 = vmatpush1.msra.mxu0 %v498
    %1556 = vmatprep.subr.mxu0 %v503
    %1557 = vmatpush1.msra.mxu0 %v502
    %1558 = vmatprep.subr.mxu0 %v507
    %1559 = vmatpush1.msra.mxu0 %v506
    %1560 = vmatprep.subr.mxu0 %v511
    %1561 = vmatpush1.msra.mxu0 %v510
    %1562 = vmatprep.subr.mxu0 %v515
    %1563 = vmatpush1.msra.mxu0 %v514
    %1564 = vmatprep.subr.mxu0 %v519
    %1565 = vmatpush1.msra.mxu0 %v518
    %1566 = vmatprep.subr.mxu0 %v523
    %1567 = vmatpush1.msra.mxu0 %v522
    %1568 = vmatprep.subr.mxu0 %v527
    %1569 = vmatpush1.msra.mxu0 %v526
    %1570 = vmatprep.subr.mxu0 %v531
    %1571 = vmatpush1.msra.mxu0 %v530
    %1572 = vmatprep.subr.mxu0 %v535
    %1573 = vmatpush1.msra.mxu0 %v534
    %1574 = vmatprep.subr.mxu0 %v539
    %1575 = vmatpush1.msra.mxu0 %v538
    %1576 = vmatprep.subr.mxu0 %v543
    %1577 = vmatpush1.msra.mxu0 %v542
    %1578 = vmatprep.subr.mxu0 %v547
    %1579 = vmatpush1.msra.mxu0 %v546
    %1580 = vmatprep.subr.mxu0 0.0
    %1581 = vmatpush1.msra.mxu0 0.0
    %1582 = vmatprep.subr.mxu0 0.0
    %1583 = vmatpush1.msra.mxu0 0.0
    %1584 = vmatprep.subr.mxu0 0.0
    %1585 = vmatpush1.msra.mxu0 0.0
    %1586 = vmatprep.subr.mxu0 0.0
    %1587 = vmatpush1.msra.mxu0 0.0
    %1588 = vmatprep.subr.mxu0 0.0
    %1589 = vmatpush1.msra.mxu0 0.0
    %1590 = vmatprep.subr.mxu0 0.0
    %1591 = vmatpush1.msra.mxu0 0.0
    %1592 = vmatprep.subr.mxu0 0.0
    %1593 = vmatpush1.msra.mxu0 0.0
    %1594 = vmatprep.subr.mxu0 0.0
    %1595 = vmatpush1.msra.mxu0 0.0
    %1596 = vmatprep.subr.mxu0 0.0
    %1597 = vmatpush1.msra.mxu0 0.0
    %1598 = vmatprep.subr.mxu0 0.0
    %1599 = vmatpush1.msra.mxu0 0.0
    %1600 = vmatprep.subr.mxu0 0.0
    %1601 = vmatpush1.msra.mxu0 0.0
    %1602 = vmatprep.subr.mxu0 0.0
    %1603 = vmatpush1.msra.mxu0 0.0
    %1604 = vmatprep.subr.mxu0 0.0
    %1605 = vmatpush1.msra.mxu0 0.0
    %1606 = vmatprep.subr.mxu0 0.0
    %1607 = vmatpush1.msra.mxu0 0.0
    %1608 = vmatprep.subr.mxu0 0.0
    %1609 = vmatpush1.msra.mxu0 0.0
    %1610 = vmatprep.subr.mxu0 0.0
    %1611 = vmatpush1.msra.mxu0 0.0
    %1612 = vmatprep.mubr.f32.mxu0 0.0
    %1613 = vmatmul.mubr.f32.gmra.mrb[0].mxu0 %v1476
    %v1614 = vpop.f32.mrb[0].mxu0
    %v1615 = vadd.f32 0.0, %v1614
    %v1616 = vpop.f32.mrb[0].mxu0
    %v1617 = vadd.f32 0.0, %v1616
    %1618 = vdwg.mxu0
    %v1619 = vadd.f32 %v662, %v1544
    %v1620 = vadd.f32 %v664, %v1546
    %v1621 = vadd.f32 %v775, %v1615
    %v1622 = vadd.f32 %v777, %v1617
    %v1623 = vxor.u32 %v1619, 2147483648
    %v1624 = vxor.u32 %v1620, 2147483648
    %v1625 = vxor.u32 %v1621, 2147483648
    %v1626 = vmul.f32 %v1623, 1.442695
    %v1627 = vpow.pop %v1626
    %v1628 = vmul.f32 %v1624, 1.442695
    %v1629 = vpow.pop %v1628
    %v1630 = vmul.f32 %v1625, 1.442695
    %v1631 = vpow.pop %v1630
    %v1632 = vadd.f32 %v1627, 1.0
    %v1633 = vadd.f32 %v1629, 1.0
    %v1634 = vadd.f32 %v1631, 1.0
    %v1635 = vrcp.pop %v1632
    %v1636 = vmul.f32 1.0, %v1635
    %v1637 = vrcp.pop %v1633
    %v1638 = vmul.f32 1.0, %v1637
    %v1639 = vrcp.pop %v1634
    %v1640 = vmul.f32 1.0, %v1639
    %v1641 = vtanh.pop %v1622
    %v1642 = vmul.f32 %v1638, %v1474
    %v1643 = vmul.f32 %v1636, %v1641
    %v1644 = vadd.f32 %v1642, %v1643
    %v1645 = vtanh.pop %v1644
    %v1646 = vmul.f32 %v1640, %v1645
    %1647 = vmatprep.subr.mxu0 %v485
    %1648 = vmatpush1.msra.mxu0 %v484
    %1649 = vmatprep.subr.mxu0 %v489
    %1650 = vmatpush1.msra.mxu0 %v488
    %1651 = vmatprep.subr.mxu0 %v493
    %1652 = vmatpush1.msra.mxu0 %v492
    %1653 = vmatprep.subr.mxu0 %v497
    %1654 = vmatpush1.msra.mxu0 %v496
    %1655 = vmatprep.subr.mxu0 %v501
    %1656 = vmatpush1.msra.mxu0 %v500
    %1657 = vmatprep.subr.mxu0 %v505
    %1658 = vmatpush1.msra.mxu0 %v504
    %1659 = vmatprep.subr.mxu0 %v509
    %1660 = vmatpush1.msra.mxu0 %v508
    %1661 = vmatprep.subr.mxu0 %v513
    %1662 = vmatpush1.msra.mxu0 %v512
    %1663 = vmatprep.subr.mxu0 %v517
    %1664 = vmatpush1.msra.mxu0 %v516
    %1665 = vmatprep.subr.mxu0 %v521
    %1666 = vmatpush1.msra.mxu0 %v520
    %1667 = vmatprep.subr.mxu0 %v525
    %1668 = vmatpush1.msra.mxu0 %v524
    %1669 = vmatprep.subr.mxu0 %v529
    %1670 = vmatpush1.msra.mxu0 %v528
    %1671 = vmatprep.subr.mxu0 %v533
    %1672 = vmatpush1.msra.mxu0 %v532
    %1673 = vmatprep.subr.mxu0 %v537
    %1674 = vmatpush1.msra.mxu0 %v536
    %1675 = vmatprep.subr.mxu0 %v541
    %1676 = vmatpush1.msra.mxu0 %v540
    %1677 = vmatprep.subr.mxu0 %v545
    %1678 = vmatpush1.msra.mxu0 %v544
    %1679 = vmatprep.subr.mxu0 0.0
    %1680 = vmatpush1.msra.mxu0 0.0
    %1681 = vmatprep.subr.mxu0 0.0
    %1682 = vmatpush1.msra.mxu0 0.0
    %1683 = vmatprep.subr.mxu0 0.0
    %1684 = vmatpush1.msra.mxu0 0.0
    %1685 = vmatprep.subr.mxu0 0.0
    %1686 = vmatpush1.msra.mxu0 0.0
    %1687 = vmatprep.subr.mxu0 0.0
    %1688 = vmatpush1.msra.mxu0 0.0
    %1689 = vmatprep.subr.mxu0 0.0
    %1690 = vmatpush1.msra.mxu0 0.0
    %1691 = vmatprep.subr.mxu0 0.0
    %1692 = vmatpush1.msra.mxu0 0.0
    %1693 = vmatprep.subr.mxu0 0.0
    %1694 = vmatpush1.msra.mxu0 0.0
    %1695 = vmatprep.subr.mxu0 0.0
    %1696 = vmatpush1.msra.mxu0 0.0
    %1697 = vmatprep.subr.mxu0 0.0
    %1698 = vmatpush1.msra.mxu0 0.0
    %1699 = vmatprep.subr.mxu0 0.0
    %1700 = vmatpush1.msra.mxu0 0.0
    %1701 = vmatprep.subr.mxu0 0.0
    %1702 = vmatpush1.msra.mxu0 0.0
    %1703 = vmatprep.subr.mxu0 0.0
    %1704 = vmatpush1.msra.mxu0 0.0
    %1705 = vmatprep.subr.mxu0 0.0
    %1706 = vmatpush1.msra.mxu0 0.0
    %1707 = vmatprep.subr.mxu0 0.0
    %1708 = vmatpush1.msra.mxu0 0.0
    %1709 = vmatprep.subr.mxu0 0.0
    %1710 = vmatpush1.msra.mxu0 0.0
    %1711 = vmatprep.mubr.f32.mxu0 0.0
    %1712 = vmatmul.mubr.f32.gmra.mrb[0].mxu0 %v1646
    %v1713 = vpop.f32.mrb[0].mxu0
    %v1714 = vadd.f32 0.0, %v1713
    %v1715 = vpop.f32.mrb[0].mxu0
    %v1716 = vadd.f32 0.0, %v1715
    %1717 = vdwg.mxu0
    %1718 = vmatprep.subr.mxu0 %v487
    %1719 = vmatpush1.msra.mxu0 %v486
    %1720 = vmatprep.subr.mxu0 %v491
    %1721 = vmatpush1.msra.mxu0 %v490
    %1722 = vmatprep.subr.mxu0 %v495
    %1723 = vmatpush1.msra.mxu0 %v494
    %1724 = vmatprep.subr.mxu0 %v499
    %1725 = vmatpush1.msra.mxu0 %v498
    %1726 = vmatprep.subr.mxu0 %v503
    %1727 = vmatpush1.msra.mxu0 %v502
    %1728 = vmatprep.subr.mxu0 %v507
    %1729 = vmatpush1.msra.mxu0 %v506
    %1730 = vmatprep.subr.mxu0 %v511
    %1731 = vmatpush1.msra.mxu0 %v510
    %1732 = vmatprep.subr.mxu0 %v515
    %1733 = vmatpush1.msra.mxu0 %v514
    %1734 = vmatprep.subr.mxu0 %v519
    %1735 = vmatpush1.msra.mxu0 %v518
    %1736 = vmatprep.subr.mxu0 %v523
    %1737 = vmatpush1.msra.mxu0 %v522
    %1738 = vmatprep.subr.mxu0 %v527
    %1739 = vmatpush1.msra.mxu0 %v526
    %1740 = vmatprep.subr.mxu0 %v531
    %1741 = vmatpush1.msra.mxu0 %v530
    %1742 = vmatprep.subr.mxu0 %v535
    %1743 = vmatpush1.msra.mxu0 %v534
    %1744 = vmatprep.subr.mxu0 %v539
    %1745 = vmatpush1.msra.mxu0 %v538
    %1746 = vmatprep.subr.mxu0 %v543
    %1747 = vmatpush1.msra.mxu0 %v542
    %1748 = vmatprep.subr.mxu0 %v547
    %1749 = vmatpush1.msra.mxu0 %v546
    %1750 = vmatprep.subr.mxu0 0.0
    %1751 = vmatpush1.msra.mxu0 0.0
    %1752 = vmatprep.subr.mxu0 0.0
    %1753 = vmatpush1.msra.mxu0 0.0
    %1754 = vmatprep.subr.mxu0 0.0
    %1755 = vmatpush1.msra.mxu0 0.0
    %1756 = vmatprep.subr.mxu0 0.0
    %1757 = vmatpush1.msra.mxu0 0.0
    %1758 = vmatprep.subr.mxu0 0.0
    %1759 = vmatpush1.msra.mxu0 0.0
    %1760 = vmatprep.subr.mxu0 0.0
    %1761 = vmatpush1.msra.mxu0 0.0
    %1762 = vmatprep.subr.mxu0 0.0
    %1763 = vmatpush1.msra.mxu0 0.0
    %1764 = vmatprep.subr.mxu0 0.0
    %1765 = vmatpush1.msra.mxu0 0.0
    %1766 = vmatprep.subr.mxu0 0.0
    %1767 = vmatpush1.msra.mxu0 0.0
    %1768 = vmatprep.subr.mxu0 0.0
    %1769 = vmatpush1.msra.mxu0 0.0
    %1770 = vmatprep.subr.mxu0 0.0
    %1771 = vmatpush1.msra.mxu0 0.0
    %1772 = vmatprep.subr.mxu0 0.0
    %1773 = vmatpush1.msra.mxu0 0.0
    %1774 = vmatprep.subr.mxu0 0.0
    %1775 = vmatpush1.msra.mxu0 0.0
    %1776 = vmatprep.subr.mxu0 0.0
    %1777 = vmatpush1.msra.mxu0 0.0
    %1778 = vmatprep.subr.mxu0 0.0
    %1779 = vmatpush1.msra.mxu0 0.0
    %1780 = vmatprep.subr.mxu0 0.0
    %1781 = vmatpush1.msra.mxu0 0.0
    %1782 = vmatprep.mubr.f32.mxu0 0.0
    %1783 = vmatmul.mubr.f32.gmra.mrb[0].mxu0 %v1646
    %v1784 = vpop.f32.mrb[0].mxu0
    %v1785 = vadd.f32 0.0, %v1784
    %v1786 = vpop.f32.mrb[0].mxu0
    %v1787 = vadd.f32 0.0, %v1786
    %1788 = vdwg.mxu0
    %v1789 = vadd.f32 %v668, %v1714
    %v1790 = vadd.f32 %v670, %v1716
    %v1791 = vadd.f32 %v781, %v1785
    %v1792 = vadd.f32 %v783, %v1787
    %v1793 = vxor.u32 %v1789, 2147483648
    %v1794 = vxor.u32 %v1790, 2147483648
    %v1795 = vxor.u32 %v1791, 2147483648
    %v1796 = vmul.f32 %v1793, 1.442695
    %v1797 = vpow.pop %v1796
    %v1798 = vmul.f32 %v1794, 1.442695
    %v1799 = vpow.pop %v1798
    %v1800 = vmul.f32 %v1795, 1.442695
    %v1801 = vpow.pop %v1800
    %v1802 = vadd.f32 %v1797, 1.0
    %v1803 = vadd.f32 %v1799, 1.0
    %v1804 = vadd.f32 %v1801, 1.0
    %v1805 = vrcp.pop %v1802
    %v1806 = vmul.f32 1.0, %v1805
    %v1807 = vrcp.pop %v1803
    %v1808 = vmul.f32 1.0, %v1807
    %v1809 = vrcp.pop %v1804
    %v1810 = vmul.f32 1.0, %v1809
    %v1811 = vtanh.pop %v1792
    %v1812 = vmul.f32 %v1808, %v1644
    %v1813 = vmul.f32 %v1806, %v1811
    %v1814 = vadd.f32 %v1812, %v1813
    %v1815 = vtanh.pop %v1814
    %v1816 = vmul.f32 %v1810, %v1815
    %1817 = vmatprep.subr.mxu0 %v485
    %1818 = vmatpush1.msra.mxu0 %v484
    %1819 = vmatprep.subr.mxu0 %v489
    %1820 = vmatpush1.msra.mxu0 %v488
    %1821 = vmatprep.subr.mxu0 %v493
    %1822 = vmatpush1.msra.mxu0 %v492
    %1823 = vmatprep.subr.mxu0 %v497
    %1824 = vmatpush1.msra.mxu0 %v496
    %1825 = vmatprep.subr.mxu0 %v501
    %1826 = vmatpush1.msra.mxu0 %v500
    %1827 = vmatprep.subr.mxu0 %v505
    %1828 = vmatpush1.msra.mxu0 %v504
    %1829 = vmatprep.subr.mxu0 %v509
    %1830 = vmatpush1.msra.mxu0 %v508
    %1831 = vmatprep.subr.mxu0 %v513
    %1832 = vmatpush1.msra.mxu0 %v512
    %1833 = vmatprep.subr.mxu0 %v517
    %1834 = vmatpush1.msra.mxu0 %v516
    %1835 = vmatprep.subr.mxu0 %v521
    %1836 = vmatpush1.msra.mxu0 %v520
    %1837 = vmatprep.subr.mxu0 %v525
    %1838 = vmatpush1.msra.mxu0 %v524
    %1839 = vmatprep.subr.mxu0 %v529
    %1840 = vmatpush1.msra.mxu0 %v528
    %1841 = vmatprep.subr.mxu0 %v533
    %1842 = vmatpush1.msra.mxu0 %v532
    %1843 = vmatprep.subr.mxu0 %v537
    %1844 = vmatpush1.msra.mxu0 %v536
    %1845 = vmatprep.subr.mxu0 %v541
    %1846 = vmatpush1.msra.mxu0 %v540
    %1847 = vmatprep.subr.mxu0 %v545
    %1848 = vmatpush1.msra.mxu0 %v544
    %1849 = vmatprep.subr.mxu0 0.0
    %1850 = vmatpush1.msra.mxu0 0.0
    %1851 = vmatprep.subr.mxu0 0.0
    %1852 = vmatpush1.msra.mxu0 0.0
    %1853 = vmatprep.subr.mxu0 0.0
    %1854 = vmatpush1.msra.mxu0 0.0
    %1855 = vmatprep.subr.mxu0 0.0
    %1856 = vmatpush1.msra.mxu0 0.0
    %1857 = vmatprep.subr.mxu0 0.0
    %1858 = vmatpush1.msra.mxu0 0.0
    %1859 = vmatprep.subr.mxu0 0.0
    %1860 = vmatpush1.msra.mxu0 0.0
    %1861 = vmatprep.subr.mxu0 0.0
    %1862 = vmatpush1.msra.mxu0 0.0
    %1863 = vmatprep.subr.mxu0 0.0
    %1864 = vmatpush1.msra.mxu0 0.0
    %1865 = vmatprep.subr.mxu0 0.0
    %1866 = vmatpush1.msra.mxu0 0.0
    %1867 = vmatprep.subr.mxu0 0.0
    %1868 = vmatpush1.msra.mxu0 0.0
    %1869 = vmatprep.subr.mxu0 0.0
    %1870 = vmatpush1.msra.mxu0 0.0
    %1871 = vmatprep.subr.mxu0 0.0
    %1872 = vmatpush1.msra.mxu0 0.0
    %1873 = vmatprep.subr.mxu0 0.0
    %1874 = vmatpush1.msra.mxu0 0.0
    %1875 = vmatprep.subr.mxu0 0.0
    %1876 = vmatpush1.msra.mxu0 0.0
    %1877 = vmatprep.subr.mxu0 0.0
    %1878 = vmatpush1.msra.mxu0 0.0
    %1879 = vmatprep.subr.mxu0 0.0
    %1880 = vmatpush1.msra.mxu0 0.0
    %1881 = vmatprep.mubr.f32.mxu0 0.0
    %1882 = vmatmul.mubr.f32.gmra.mrb[0].mxu0 %v1816
    %v1883 = vpop.f32.mrb[0].mxu0
    %v1884 = vadd.f32 0.0, %v1883
    %v1885 = vpop.f32.mrb[0].mxu0
    %v1886 = vadd.f32 0.0, %v1885
    %1887 = vdwg.mxu0
    %1888 = vmatprep.subr.mxu0 %v487
    %1889 = vmatpush1.msra.mxu0 %v486
    %1890 = vmatprep.subr.mxu0 %v491
    %1891 = vmatpush1.msra.mxu0 %v490
    %1892 = vmatprep.subr.mxu0 %v495
    %1893 = vmatpush1.msra.mxu0 %v494
    %1894 = vmatprep.subr.mxu0 %v499
    %1895 = vmatpush1.msra.mxu0 %v498
    %1896 = vmatprep.subr.mxu0 %v503
    %1897 = vmatpush1.msra.mxu0 %v502
    %1898 = vmatprep.subr.mxu0 %v507
    %1899 = vmatpush1.msra.mxu0 %v506
    %1900 = vmatprep.subr.mxu0 %v511
    %1901 = vmatpush1.msra.mxu0 %v510
    %1902 = vmatprep.subr.mxu0 %v515
    %1903 = vmatpush1.msra.mxu0 %v514
    %1904 = vmatprep.subr.mxu0 %v519
    %1905 = vmatpush1.msra.mxu0 %v518
    %1906 = vmatprep.subr.mxu0 %v523
    %1907 = vmatpush1.msra.mxu0 %v522
    %1908 = vmatprep.subr.mxu0 %v527
    %1909 = vmatpush1.msra.mxu0 %v526
    %1910 = vmatprep.subr.mxu0 %v531
    %1911 = vmatpush1.msra.mxu0 %v530
    %1912 = vmatprep.subr.mxu0 %v535
    %1913 = vmatpush1.msra.mxu0 %v534
    %1914 = vmatprep.subr.mxu0 %v539
    %1915 = vmatpush1.msra.mxu0 %v538
    %1916 = vmatprep.subr.mxu0 %v543
    %1917 = vmatpush1.msra.mxu0 %v542
    %1918 = vmatprep.subr.mxu0 %v547
    %1919 = vmatpush1.msra.mxu0 %v546
    %1920 = vmatprep.subr.mxu0 0.0
    %1921 = vmatpush1.msra.mxu0 0.0
    %1922 = vmatprep.subr.mxu0 0.0
    %1923 = vmatpush1.msra.mxu0 0.0
    %1924 = vmatprep.subr.mxu0 0.0
    %1925 = vmatpush1.msra.mxu0 0.0
    %1926 = vmatprep.subr.mxu0 0.0
    %1927 = vmatpush1.msra.mxu0 0.0
    %1928 = vmatprep.subr.mxu0 0.0
    %1929 = vmatpush1.msra.mxu0 0.0
    %1930 = vmatprep.subr.mxu0 0.0
    %1931 = vmatpush1.msra.mxu0 0.0
    %1932 = vmatprep.subr.mxu0 0.0
    %1933 = vmatpush1.msra.mxu0 0.0
    %1934 = vmatprep.subr.mxu0 0.0
    %1935 = vmatpush1.msra.mxu0 0.0
    %1936 = vmatprep.subr.mxu0 0.0
    %1937 = vmatpush1.msra.mxu0 0.0
    %1938 = vmatprep.subr.mxu0 0.0
    %1939 = vmatpush1.msra.mxu0 0.0
    %1940 = vmatprep.subr.mxu0 0.0
    %1941 = vmatpush1.msra.mxu0 0.0
    %1942 = vmatprep.subr.mxu0 0.0
    %1943 = vmatpush1.msra.mxu0 0.0
    %1944 = vmatprep.subr.mxu0 0.0
    %1945 = vmatpush1.msra.mxu0 0.0
    %1946 = vmatprep.subr.mxu0 0.0
    %1947 = vmatpush1.msra.mxu0 0.0
    %1948 = vmatprep.subr.mxu0 0.0
    %1949 = vmatpush1.msra.mxu0 0.0
    %1950 = vmatprep.subr.mxu0 0.0
    %1951 = vmatpush1.msra.mxu0 0.0
    %1952 = vmatprep.mubr.f32.mxu0 0.0
    %1953 = vmatmul.mubr.f32.gmra.mrb[0].mxu0 %v1816
    %v1954 = vpop.f32.mrb[0].mxu0
    %v1955 = vadd.f32 0.0, %v1954
    %v1956 = vpop.f32.mrb[0].mxu0
    %v1957 = vadd.f32 0.0, %v1956
    %1958 = vdwg.mxu0
    %v1959 = vadd.f32 %v674, %v1884
    %v1960 = vadd.f32 %v676, %v1886
    %v1961 = vadd.f32 %v787, %v1955
    %v1962 = vadd.f32 %v789, %v1957
    %v1963 = vxor.u32 %v1959, 2147483648
    %v1964 = vxor.u32 %v1960, 2147483648
    %v1965 = vxor.u32 %v1961, 2147483648
    %v1966 = vmul.f32 %v1963, 1.442695
    %v1967 = vpow.pop %v1966
    %v1968 = vmul.f32 %v1964, 1.442695
    %v1969 = vpow.pop %v1968
    %v1970 = vmul.f32 %v1965, 1.442695
    %v1971 = vpow.pop %v1970
    %v1972 = vadd.f32 %v1967, 1.0
    %v1973 = vadd.f32 %v1969, 1.0
    %v1974 = vadd.f32 %v1971, 1.0
    %v1975 = vrcp.pop %v1972
    %v1976 = vmul.f32 1.0, %v1975
    %v1977 = vrcp.pop %v1973
    %v1978 = vmul.f32 1.0, %v1977
    %v1979 = vrcp.pop %v1974
    %v1980 = vmul.f32 1.0, %v1979
    %v1981 = vtanh.pop %v1962
    %v1982 = vmul.f32 %v1978, %v1814
    %v1983 = vmul.f32 %v1976, %v1981
    %v1984 = vadd.f32 %v1982, %v1983
    %v1985 = vtanh.pop %v1984
    %v1986 = vmul.f32 %v1980, %v1985
    %1987 = vmatprep.subr.mxu0 %v485
    %1988 = vmatpush1.msra.mxu0 %v484
    %1989 = vmatprep.subr.mxu0 %v489
    %1990 = vmatpush1.msra.mxu0 %v488
    %1991 = vmatprep.subr.mxu0 %v493
    %1992 = vmatpush1.msra.mxu0 %v492
    %1993 = vmatprep.subr.mxu0 %v497
    %1994 = vmatpush1.msra.mxu0 %v496
    %1995 = vmatprep.subr.mxu0 %v501
    %1996 = vmatpush1.msra.mxu0 %v500
    %1997 = vmatprep.subr.mxu0 %v505
    %1998 = vmatpush1.msra.mxu0 %v504
    %1999 = vmatprep.subr.mxu0 %v509
    %2000 = vmatpush1.msra.mxu0 %v508
    %2001 = vmatprep.subr.mxu0 %v513
    %2002 = vmatpush1.msra.mxu0 %v512
    %2003 = vmatprep.subr.mxu0 %v517
    %2004 = vmatpush1.msra.mxu0 %v516
    %2005 = vmatprep.subr.mxu0 %v521
    %2006 = vmatpush1.msra.mxu0 %v520
    %2007 = vmatprep.subr.mxu0 %v525
    %2008 = vmatpush1.msra.mxu0 %v524
    %2009 = vmatprep.subr.mxu0 %v529
    %2010 = vmatpush1.msra.mxu0 %v528
    %2011 = vmatprep.subr.mxu0 %v533
    %2012 = vmatpush1.msra.mxu0 %v532
    %2013 = vmatprep.subr.mxu0 %v537
    %2014 = vmatpush1.msra.mxu0 %v536
    %2015 = vmatprep.subr.mxu0 %v541
    %2016 = vmatpush1.msra.mxu0 %v540
    %2017 = vmatprep.subr.mxu0 %v545
    %2018 = vmatpush1.msra.mxu0 %v544
    %2019 = vmatprep.subr.mxu0 0.0
    %2020 = vmatpush1.msra.mxu0 0.0
    %2021 = vmatprep.subr.mxu0 0.0
    %2022 = vmatpush1.msra.mxu0 0.0
    %2023 = vmatprep.subr.mxu0 0.0
    %2024 = vmatpush1.msra.mxu0 0.0
    %2025 = vmatprep.subr.mxu0 0.0
    %2026 = vmatpush1.msra.mxu0 0.0
    %2027 = vmatprep.subr.mxu0 0.0
    %2028 = vmatpush1.msra.mxu0 0.0
    %2029 = vmatprep.subr.mxu0 0.0
    %2030 = vmatpush1.msra.mxu0 0.0
    %2031 = vmatprep.subr.mxu0 0.0
    %2032 = vmatpush1.msra.mxu0 0.0
    %2033 = vmatprep.subr.mxu0 0.0
    %2034 = vmatpush1.msra.mxu0 0.0
    %2035 = vmatprep.subr.mxu0 0.0
    %2036 = vmatpush1.msra.mxu0 0.0
    %2037 = vmatprep.subr.mxu0 0.0
    %2038 = vmatpush1.msra.mxu0 0.0
    %2039 = vmatprep.subr.mxu0 0.0
    %2040 = vmatpush1.msra.mxu0 0.0
    %2041 = vmatprep.subr.mxu0 0.0
    %2042 = vmatpush1.msra.mxu0 0.0
    %2043 = vmatprep.subr.mxu0 0.0
    %2044 = vmatpush1.msra.mxu0 0.0
    %2045 = vmatprep.subr.mxu0 0.0
    %2046 = vmatpush1.msra.mxu0 0.0
    %2047 = vmatprep.subr.mxu0 0.0
    %2048 = vmatpush1.msra.mxu0 0.0
    %2049 = vmatprep.subr.mxu0 0.0
    %2050 = vmatpush1.msra.mxu0 0.0
    %2051 = vmatprep.mubr.f32.mxu0 0.0
    %2052 = vmatmul.mubr.f32.gmra.mrb[0].mxu0 %v1986
    %v2053 = vpop.f32.mrb[0].mxu0
    %v2054 = vadd.f32 0.0, %v2053
    %v2055 = vpop.f32.mrb[0].mxu0
    %v2056 = vadd.f32 0.0, %v2055
    %2057 = vdwg.mxu0
    %2058 = vmatprep.subr.mxu0 %v487
    %2059 = vmatpush1.msra.mxu0 %v486
    %2060 = vmatprep.subr.mxu0 %v491
    %2061 = vmatpush1.msra.mxu0 %v490
    %2062 = vmatprep.subr.mxu0 %v495
    %2063 = vmatpush1.msra.mxu0 %v494
    %2064 = vmatprep.subr.mxu0 %v499
    %2065 = vmatpush1.msra.mxu0 %v498
    %2066 = vmatprep.subr.mxu0 %v503
    %2067 = vmatpush1.msra.mxu0 %v502
    %2068 = vmatprep.subr.mxu0 %v507
    %2069 = vmatpush1.msra.mxu0 %v506
    %2070 = vmatprep.subr.mxu0 %v511
    %2071 = vmatpush1.msra.mxu0 %v510
    %2072 = vmatprep.subr.mxu0 %v515
    %2073 = vmatpush1.msra.mxu0 %v514
    %2074 = vmatprep.subr.mxu0 %v519
    %2075 = vmatpush1.msra.mxu0 %v518
    %2076 = vmatprep.subr.mxu0 %v523
    %2077 = vmatpush1.msra.mxu0 %v522
    %2078 = vmatprep.subr.mxu0 %v527
    %2079 = vmatpush1.msra.mxu0 %v526
    %2080 = vmatprep.subr.mxu0 %v531
    %2081 = vmatpush1.msra.mxu0 %v530
    %2082 = vmatprep.subr.mxu0 %v535
    %2083 = vmatpush1.msra.mxu0 %v534
    %2084 = vmatprep.subr.mxu0 %v539
    %2085 = vmatpush1.msra.mxu0 %v538
    %2086 = vmatprep.subr.mxu0 %v543
    %2087 = vmatpush1.msra.mxu0 %v542
    %2088 = vmatprep.subr.mxu0 %v547
    %2089 = vmatpush1.msra.mxu0 %v546
    %2090 = vmatprep.subr.mxu0 0.0
    %2091 = vmatpush1.msra.mxu0 0.0
    %2092 = vmatprep.subr.mxu0 0.0
    %2093 = vmatpush1.msra.mxu0 0.0
    %2094 = vmatprep.subr.mxu0 0.0
    %2095 = vmatpush1.msra.mxu0 0.0
    %2096 = vmatprep.subr.mxu0 0.0
    %2097 = vmatpush1.msra.mxu0 0.0
    %2098 = vmatprep.subr.mxu0 0.0
    %2099 = vmatpush1.msra.mxu0 0.0
    %2100 = vmatprep.subr.mxu0 0.0
    %2101 = vmatpush1.msra.mxu0 0.0
    %2102 = vmatprep.subr.mxu0 0.0
    %2103 = vmatpush1.msra.mxu0 0.0
    %2104 = vmatprep.subr.mxu0 0.0
    %2105 = vmatpush1.msra.mxu0 0.0
    %2106 = vmatprep.subr.mxu0 0.0
    %2107 = vmatpush1.msra.mxu0 0.0
    %2108 = vmatprep.subr.mxu0 0.0
    %2109 = vmatpush1.msra.mxu0 0.0
    %2110 = vmatprep.subr.mxu0 0.0
    %2111 = vmatpush1.msra.mxu0 0.0
    %2112 = vmatprep.subr.mxu0 0.0
    %2113 = vmatpush1.msra.mxu0 0.0
    %2114 = vmatprep.subr.mxu0 0.0
    %2115 = vmatpush1.msra.mxu0 0.0
    %2116 = vmatprep.subr.mxu0 0.0
    %2117 = vmatpush1.msra.mxu0 0.0
    %2118 = vmatprep.subr.mxu0 0.0
    %2119 = vmatpush1.msra.mxu0 0.0
    %2120 = vmatprep.subr.mxu0 0.0
    %2121 = vmatpush1.msra.mxu0 0.0
    %2122 = vmatprep.mubr.f32.mxu0 0.0
    %2123 = vmatmul.mubr.f32.gmra.mrb[0].mxu0 %v1986
    %v2124 = vpop.f32.mrb[0].mxu0
    %v2125 = vadd.f32 0.0, %v2124
    %v2126 = vpop.f32.mrb[0].mxu0
    %v2127 = vadd.f32 0.0, %v2126
    %2128 = vdwg.mxu0
    %v2129 = vadd.f32 %v680, %v2054
    %v2130 = vadd.f32 %v682, %v2056
    %v2131 = vadd.f32 %v793, %v2125
    %v2132 = vadd.f32 %v795, %v2127
    %v2133 = vxor.u32 %v2129, 2147483648
    %v2134 = vxor.u32 %v2130, 2147483648
    %v2135 = vxor.u32 %v2131, 2147483648
    %v2136 = vmul.f32 %v2133, 1.442695
    %v2137 = vpow.pop %v2136
    %v2138 = vmul.f32 %v2134, 1.442695
    %v2139 = vpow.pop %v2138
    %v2140 = vmul.f32 %v2135, 1.442695
    %v2141 = vpow.pop %v2140
    %v2142 = vadd.f32 %v2137, 1.0
    %v2143 = vadd.f32 %v2139, 1.0
    %v2144 = vadd.f32 %v2141, 1.0
    %v2145 = vrcp.pop %v2142
    %v2146 = vmul.f32 1.0, %v2145
    %v2147 = vrcp.pop %v2143
    %v2148 = vmul.f32 1.0, %v2147
    %v2149 = vrcp.pop %v2144
    %v2150 = vmul.f32 1.0, %v2149
    %v2151 = vtanh.pop %v2132
    %v2152 = vmul.f32 %v2148, %v1984
    %v2153 = vmul.f32 %v2146, %v2151
    %v2154 = vadd.f32 %v2152, %v2153
    %v2155 = vtanh.pop %v2154
    %v2156 = vmul.f32 %v2150, %v2155
    %v2157 = vld [vmem:[#allocation4 + $0x400] sm:$0xff]
    %v2158 = vld [vmem:[#allocation4 + $0x408] sm:$0xff]
    %v2159 = vld [vmem:[#allocation4 + $0x410] sm:$0xff]
    %v2160 = vld [vmem:[#allocation4 + $0x418] sm:$0xff]
    %v2161 = vld [vmem:[#allocation4 + $0x420] sm:$0xff]
    %v2162 = vld [vmem:[#allocation4 + $0x428] sm:$0xff]
    %v2163 = vld [vmem:[#allocation4 + $0x430] sm:$0xff]
    %v2164 = vld [vmem:[#allocation4 + $0x438] sm:$0xff]
    %v2165 = vld [vmem:[#allocation4 + $0x440] sm:$0xff]
    %v2166 = vld [vmem:[#allocation4 + $0x448] sm:$0xff]
    %v2167 = vld [vmem:[#allocation4 + $0x450] sm:$0xff]
    %v2168 = vld [vmem:[#allocation4 + $0x458] sm:$0xff]
    %v2169 = vld [vmem:[#allocation4 + $0x460] sm:$0xff]
    %v2170 = vld [vmem:[#allocation4 + $0x468] sm:$0xff]
    %v2171 = vld [vmem:[#allocation4 + $0x470] sm:$0xff]
    %v2172 = vld [vmem:[#allocation4 + $0x478] sm:$0xff]
    %v2173 = vld [vmem:[#allocation4 + $0x480] sm:$0xff]
    %v2174 = vld [vmem:[#allocation4 + $0x488] sm:$0xff]
    %v2175 = vld [vmem:[#allocation4 + $0x490] sm:$0xff]
    %v2176 = vld [vmem:[#allocation4 + $0x498] sm:$0xff]
    %v2177 = vld [vmem:[#allocation4 + $0x4a0] sm:$0xff]
    %v2178 = vld [vmem:[#allocation4 + $0x4a8] sm:$0xff]
    %v2179 = vld [vmem:[#allocation4 + $0x4b0] sm:$0xff]
    %v2180 = vld [vmem:[#allocation4 + $0x4b8] sm:$0xff]
    %v2181 = vld [vmem:[#allocation4 + $0x4c0] sm:$0xff]
    %v2182 = vld [vmem:[#allocation4 + $0x4c8] sm:$0xff]
    %v2183 = vld [vmem:[#allocation4 + $0x4d0] sm:$0xff]
    %v2184 = vld [vmem:[#allocation4 + $0x4d8] sm:$0xff]
    %v2185 = vld [vmem:[#allocation4 + $0x4e0] sm:$0xff]
    %v2186 = vld [vmem:[#allocation4 + $0x4e8] sm:$0xff]
    %v2187 = vld [vmem:[#allocation4 + $0x4f0] sm:$0xff]
    %v2188 = vld [vmem:[#allocation4 + $0x4f8] sm:$0xff]
    %v2189 = vld [vmem:[#allocation4 + $0x500] sm:$0xff]
    %v2190 = vld [vmem:[#allocation4 + $0x508] sm:$0xff]
    %v2191 = vld [vmem:[#allocation4 + $0x510] sm:$0xff]
    %v2192 = vld [vmem:[#allocation4 + $0x518] sm:$0xff]
    %v2193 = vld [vmem:[#allocation4 + $0x520] sm:$0xff]
    %v2194 = vld [vmem:[#allocation4 + $0x528] sm:$0xff]
    %v2195 = vld [vmem:[#allocation4 + $0x530] sm:$0xff]
    %v2196 = vld [vmem:[#allocation4 + $0x538] sm:$0xff]
    %v2197 = vld [vmem:[#allocation4 + $0x540] sm:$0xff]
    %v2198 = vld [vmem:[#allocation4 + $0x548] sm:$0xff]
    %v2199 = vld [vmem:[#allocation4 + $0x550] sm:$0xff]
    %v2200 = vld [vmem:[#allocation4 + $0x558] sm:$0xff]
    %v2201 = vld [vmem:[#allocation4 + $0x560] sm:$0xff]
    %v2202 = vld [vmem:[#allocation4 + $0x568] sm:$0xff]
    %v2203 = vld [vmem:[#allocation4 + $0x570] sm:$0xff]
    %v2204 = vld [vmem:[#allocation4 + $0x578] sm:$0xff]
    %v2205 = vld [vmem:[#allocation4 + $0x580] sm:$0xff]
    %v2206 = vld [vmem:[#allocation4 + $0x588] sm:$0xff]
    %v2207 = vld [vmem:[#allocation4 + $0x590] sm:$0xff]
    %v2208 = vld [vmem:[#allocation4 + $0x598] sm:$0xff]
    %v2209 = vld [vmem:[#allocation4 + $0x5a0] sm:$0xff]
    %v2210 = vld [vmem:[#allocation4 + $0x5a8] sm:$0xff]
    %v2211 = vld [vmem:[#allocation4 + $0x5b0] sm:$0xff]
    %v2212 = vld [vmem:[#allocation4 + $0x5b8] sm:$0xff]
    %v2213 = vld [vmem:[#allocation4 + $0x5c0] sm:$0xff]
    %v2214 = vld [vmem:[#allocation4 + $0x5c8] sm:$0xff]
    %v2215 = vld [vmem:[#allocation4 + $0x5d0] sm:$0xff]
    %v2216 = vld [vmem:[#allocation4 + $0x5d8] sm:$0xff]
    %v2217 = vld [vmem:[#allocation4 + $0x5e0] sm:$0xff]
    %v2218 = vld [vmem:[#allocation4 + $0x5e8] sm:$0xff]
    %v2219 = vld [vmem:[#allocation4 + $0x5f0] sm:$0xff]
    %v2220 = vld [vmem:[#allocation4 + $0x5f8] sm:$0xff]
    %v2221 = vld [vmem:[#allocation4 + $0x600] sm:$0xff]
    %v2222 = vld [vmem:[#allocation4 + $0x608] sm:$0xff]
    %v2223 = vld [vmem:[#allocation4 + $0x610] sm:$0xff]
    %v2224 = vld [vmem:[#allocation4 + $0x618] sm:$0xff]
    %v2225 = vld [vmem:[#allocation4 + $0x620] sm:$0xff]
    %v2226 = vld [vmem:[#allocation4 + $0x628] sm:$0xff]
    %v2227 = vld [vmem:[#allocation4 + $0x630] sm:$0xff]
    %v2228 = vld [vmem:[#allocation4 + $0x638] sm:$0xff]
    %v2229 = vld [vmem:[#allocation4 + $0x640] sm:$0xff]
    %v2230 = vld [vmem:[#allocation4 + $0x648] sm:$0xff]
    %v2231 = vld [vmem:[#allocation4 + $0x650] sm:$0xff]
    %v2232 = vld [vmem:[#allocation4 + $0x658] sm:$0xff]
    %v2233 = vld [vmem:[#allocation4 + $0x660] sm:$0xff]
    %v2234 = vld [vmem:[#allocation4 + $0x668] sm:$0xff]
    %v2235 = vld [vmem:[#allocation4 + $0x670] sm:$0xff]
    %v2236 = vld [vmem:[#allocation4 + $0x678] sm:$0xff]
    %v2237 = vld [vmem:[#allocation4 + $0x680] sm:$0xff]
    %v2238 = vld [vmem:[#allocation4 + $0x688] sm:$0xff]
    %v2239 = vld [vmem:[#allocation4 + $0x690] sm:$0xff]
    %v2240 = vld [vmem:[#allocation4 + $0x698] sm:$0xff]
    %v2241 = vld [vmem:[#allocation4 + $0x6a0] sm:$0xff]
    %v2242 = vld [vmem:[#allocation4 + $0x6a8] sm:$0xff]
    %v2243 = vld [vmem:[#allocation4 + $0x6b0] sm:$0xff]
    %v2244 = vld [vmem:[#allocation4 + $0x6b8] sm:$0xff]
    %v2245 = vld [vmem:[#allocation4 + $0x6c0] sm:$0xff]
    %v2246 = vld [vmem:[#allocation4 + $0x6c8] sm:$0xff]
    %v2247 = vld [vmem:[#allocation4 + $0x6d0] sm:$0xff]
    %v2248 = vld [vmem:[#allocation4 + $0x6d8] sm:$0xff]
    %v2249 = vld [vmem:[#allocation4 + $0x6e0] sm:$0xff]
    %v2250 = vld [vmem:[#allocation4 + $0x6e8] sm:$0xff]
    %v2251 = vld [vmem:[#allocation4 + $0x6f0] sm:$0xff]
    %v2252 = vld [vmem:[#allocation4 + $0x6f8] sm:$0xff]
    %v2253 = vld [vmem:[#allocation4 + $0x700] sm:$0xff]
    %v2254 = vld [vmem:[#allocation4 + $0x708] sm:$0xff]
    %v2255 = vld [vmem:[#allocation4 + $0x710] sm:$0xff]
    %v2256 = vld [vmem:[#allocation4 + $0x718] sm:$0xff]
    %v2257 = vld [vmem:[#allocation4 + $0x720] sm:$0xff]
    %v2258 = vld [vmem:[#allocation4 + $0x728] sm:$0xff]
    %v2259 = vld [vmem:[#allocation4 + $0x730] sm:$0xff]
    %v2260 = vld [vmem:[#allocation4 + $0x738] sm:$0xff]
    %v2261 = vld [vmem:[#allocation4 + $0x740] sm:$0xff]
    %v2262 = vld [vmem:[#allocation4 + $0x748] sm:$0xff]
    %v2263 = vld [vmem:[#allocation4 + $0x750] sm:$0xff]
    %v2264 = vld [vmem:[#allocation4 + $0x758] sm:$0xff]
    %v2265 = vld [vmem:[#allocation4 + $0x760] sm:$0xff]
    %v2266 = vld [vmem:[#allocation4 + $0x768] sm:$0xff]
    %v2267 = vld [vmem:[#allocation4 + $0x770] sm:$0xff]
    %v2268 = vld [vmem:[#allocation4 + $0x778] sm:$0xff]
    %v2269 = vld [vmem:[#allocation4 + $0x780] sm:$0xff]
    %v2270 = vld [vmem:[#allocation4 + $0x788] sm:$0xff]
    %v2271 = vld [vmem:[#allocation4 + $0x790] sm:$0xff]
    %v2272 = vld [vmem:[#allocation4 + $0x798] sm:$0xff]
    %v2273 = vld [vmem:[#allocation4 + $0x7a0] sm:$0xff]
    %v2274 = vld [vmem:[#allocation4 + $0x7a8] sm:$0xff]
    %v2275 = vld [vmem:[#allocation4 + $0x7b0] sm:$0xff]
    %v2276 = vld [vmem:[#allocation4 + $0x7b8] sm:$0xff]
    %v2277 = vld [vmem:[#allocation4 + $0x7c0] sm:$0xff]
    %v2278 = vld [vmem:[#allocation4 + $0x7c8] sm:$0xff]
    %v2279 = vld [vmem:[#allocation4 + $0x7d0] sm:$0xff]
    %v2280 = vld [vmem:[#allocation4 + $0x7d8] sm:$0xff]
    %v2281 = vld [vmem:[#allocation4 + $0x7e0] sm:$0xff]
    %v2282 = vld [vmem:[#allocation4 + $0x7e8] sm:$0xff]
    %v2283 = vld [vmem:[#allocation4 + $0x7f0] sm:$0xff]
    %v2284 = vld [vmem:[#allocation4 + $0x7f8] sm:$0xff]
    %s2285 = scalar_lea.vmem [#allocation4], 2049
    %v2286 = vld [vmem:[%s2285] ss:$8 sm:$0xf]
    %v2288 = vlaneseq
    %v2289 = vshrl.u32 %v2288, 7
    %v2290 = vsub.s32 0, %v2289
    %v2291 = vrot.slane %v2286, %v2290
    %v2292 = vlaneseq
    %v2293 = vshrl.u32 %v2292, 7
    %v2294 = vsub.s32 1, %v2293
    %v2295 = vrot.slane %v2286, %v2294
    %v2296 = vlaneseq
    %v2297 = vshrl.u32 %v2296, 7
    %v2298 = vsub.s32 2, %v2297
    %v2299 = vrot.slane %v2286, %v2298
    %v2300 = vlaneseq
    %v2301 = vshrl.u32 %v2300, 7
    %v2302 = vsub.s32 3, %v2301
    %v2303 = vrot.slane %v2286, %v2302
    %2308 = vmatprep.subr.mxu0 %v2158
    %2309 = vmatpush1.msra.mxu0 %v2157
    %2310 = vmatprep.subr.mxu0 %v2162
    %2311 = vmatpush1.msra.mxu0 %v2161
    %2312 = vmatprep.subr.mxu0 %v2166
    %2313 = vmatpush1.msra.mxu0 %v2165
    %2314 = vmatprep.subr.mxu0 %v2170
    %2315 = vmatpush1.msra.mxu0 %v2169
    %2316 = vmatprep.subr.mxu0 %v2174
    %2317 = vmatpush1.msra.mxu0 %v2173
    %2318 = vmatprep.subr.mxu0 %v2178
    %2319 = vmatpush1.msra.mxu0 %v2177
    %2320 = vmatprep.subr.mxu0 %v2182
    %2321 = vmatpush1.msra.mxu0 %v2181
    %2322 = vmatprep.subr.mxu0 %v2186
    %2323 = vmatpush1.msra.mxu0 %v2185
    %2324 = vmatprep.subr.mxu0 %v2190
    %2325 = vmatpush1.msra.mxu0 %v2189
    %2326 = vmatprep.subr.mxu0 %v2194
    %2327 = vmatpush1.msra.mxu0 %v2193
    %2328 = vmatprep.subr.mxu0 %v2198
    %2329 = vmatpush1.msra.mxu0 %v2197
    %2330 = vmatprep.subr.mxu0 %v2202
    %2331 = vmatpush1.msra.mxu0 %v2201
    %2332 = vmatprep.subr.mxu0 %v2206
    %2333 = vmatpush1.msra.mxu0 %v2205
    %2334 = vmatprep.subr.mxu0 %v2210
    %2335 = vmatpush1.msra.mxu0 %v2209
    %2336 = vmatprep.subr.mxu0 %v2214
    %2337 = vmatpush1.msra.mxu0 %v2213
    %2338 = vmatprep.subr.mxu0 %v2218
    %2339 = vmatpush1.msra.mxu0 %v2217
    %2340 = vmatprep.subr.mxu0 0.0
    %2341 = vmatpush1.msra.mxu0 0.0
    %2342 = vmatprep.subr.mxu0 0.0
    %2343 = vmatpush1.msra.mxu0 0.0
    %2344 = vmatprep.subr.mxu0 0.0
    %2345 = vmatpush1.msra.mxu0 0.0
    %2346 = vmatprep.subr.mxu0 0.0
    %2347 = vmatpush1.msra.mxu0 0.0
    %2348 = vmatprep.subr.mxu0 0.0
    %2349 = vmatpush1.msra.mxu0 0.0
    %2350 = vmatprep.subr.mxu0 0.0
    %2351 = vmatpush1.msra.mxu0 0.0
    %2352 = vmatprep.subr.mxu0 0.0
    %2353 = vmatpush1.msra.mxu0 0.0
    %2354 = vmatprep.subr.mxu0 0.0
    %2355 = vmatpush1.msra.mxu0 0.0
    %2356 = vmatprep.subr.mxu0 0.0
    %2357 = vmatpush1.msra.mxu0 0.0
    %2358 = vmatprep.subr.mxu0 0.0
    %2359 = vmatpush1.msra.mxu0 0.0
    %2360 = vmatprep.subr.mxu0 0.0
    %2361 = vmatpush1.msra.mxu0 0.0
    %2362 = vmatprep.subr.mxu0 0.0
    %2363 = vmatpush1.msra.mxu0 0.0
    %2364 = vmatprep.subr.mxu0 0.0
    %2365 = vmatpush1.msra.mxu0 0.0
    %2366 = vmatprep.subr.mxu0 0.0
    %2367 = vmatpush1.msra.mxu0 0.0
    %2368 = vmatprep.subr.mxu0 0.0
    %2369 = vmatpush1.msra.mxu0 0.0
    %2370 = vmatprep.subr.mxu0 0.0
    %2371 = vmatpush1.msra.mxu0 0.0
    %2372 = vmatprep.mubr.f32.mxu0 0.0
    %2373 = vmatmul.mubr.f32.gmra.mrb[0].mxu0 %v966
    %v2374 = vpop.f32.mrb[0].mxu0
    %v2375 = vadd.f32 %v2291, %v2374
    %v2376 = vpop.f32.mrb[0].mxu0
    %v2377 = vadd.f32 %v2295, %v2376
    %2378 = vmatprep.mubr.f32.mxu0 0.0
    %2379 = vmatmul.mubr.f32.gmra.mrb[0].mxu0 %v1136
    %v2380 = vpop.f32.mrb[0].mxu0
    %v2381 = vadd.f32 %v2291, %v2380
    %v2382 = vpop.f32.mrb[0].mxu0
    %v2383 = vadd.f32 %v2295, %v2382
    %2384 = vmatprep.mubr.f32.mxu0 0.0
    %2385 = vmatmul.mubr.f32.gmra.mrb[0].mxu0 %v1306
    %v2386 = vpop.f32.mrb[0].mxu0
    %v2387 = vadd.f32 %v2291, %v2386
    %v2388 = vpop.f32.mrb[0].mxu0
    %v2389 = vadd.f32 %v2295, %v2388
    %2390 = vmatprep.mubr.f32.mxu0 0.0
    %2391 = vmatmul.mubr.f32.gmra.mrb[0].mxu0 %v1476
    %v2392 = vpop.f32.mrb[0].mxu0
    %v2393 = vadd.f32 %v2291, %v2392
    %v2394 = vpop.f32.mrb[0].mxu0
    %v2395 = vadd.f32 %v2295, %v2394
    %2396 = vmatprep.mubr.f32.mxu0 0.0
    %2397 = vmatmul.mubr.f32.gmra.mrb[0].mxu0 %v1646
    %v2398 = vpop.f32.mrb[0].mxu0
    %v2399 = vadd.f32 %v2291, %v2398
    %v2400 = vpop.f32.mrb[0].mxu0
    %v2401 = vadd.f32 %v2295, %v2400
    %2402 = vmatprep.mubr.f32.mxu0 0.0
    %2403 = vmatmul.mubr.f32.gmra.mrb[0].mxu0 %v1816
    %v2404 = vpop.f32.mrb[0].mxu0
    %v2405 = vadd.f32 %v2291, %v2404
    %v2406 = vpop.f32.mrb[0].mxu0
    %v2407 = vadd.f32 %v2295, %v2406
    %2408 = vmatprep.mubr.f32.mxu0 0.0
    %2409 = vmatmul.mubr.f32.gmra.mrb[0].mxu0 %v1986
    %v2410 = vpop.f32.mrb[0].mxu0
    %v2411 = vadd.f32 %v2291, %v2410
    %v2412 = vpop.f32.mrb[0].mxu0
    %v2413 = vadd.f32 %v2295, %v2412
    %2414 = vmatprep.mubr.f32.mxu0 0.0
    %2415 = vmatmul.mubr.f32.gmra.mrb[0].mxu0 %v2156
    %v2416 = vpop.f32.mrb[0].mxu0
    %v2417 = vadd.f32 %v2291, %v2416
    %v2418 = vpop.f32.mrb[0].mxu0
    %v2419 = vadd.f32 %v2295, %v2418
    %2420 = vdwg.mxu0
    %2421 = vmatprep.subr.mxu0 %v2160
    %2422 = vmatpush1.msra.mxu0 %v2159
    %2423 = vmatprep.subr.mxu0 %v2164
    %2424 = vmatpush1.msra.mxu0 %v2163
    %2425 = vmatprep.subr.mxu0 %v2168
    %2426 = vmatpush1.msra.mxu0 %v2167
    %2427 = vmatprep.subr.mxu0 %v2172
    %2428 = vmatpush1.msra.mxu0 %v2171
    %2429 = vmatprep.subr.mxu0 %v2176
    %2430 = vmatpush1.msra.mxu0 %v2175
    %2431 = vmatprep.subr.mxu0 %v2180
    %2432 = vmatpush1.msra.mxu0 %v2179
    %2433 = vmatprep.subr.mxu0 %v2184
    %2434 = vmatpush1.msra.mxu0 %v2183
    %2435 = vmatprep.subr.mxu0 %v2188
    %2436 = vmatpush1.msra.mxu0 %v2187
    %2437 = vmatprep.subr.mxu0 %v2192
    %2438 = vmatpush1.msra.mxu0 %v2191
    %2439 = vmatprep.subr.mxu0 %v2196
    %2440 = vmatpush1.msra.mxu0 %v2195
    %2441 = vmatprep.subr.mxu0 %v2200
    %2442 = vmatpush1.msra.mxu0 %v2199
    %2443 = vmatprep.subr.mxu0 %v2204
    %2444 = vmatpush1.msra.mxu0 %v2203
    %2445 = vmatprep.subr.mxu0 %v2208
    %2446 = vmatpush1.msra.mxu0 %v2207
    %2447 = vmatprep.subr.mxu0 %v2212
    %2448 = vmatpush1.msra.mxu0 %v2211
    %2449 = vmatprep.subr.mxu0 %v2216
    %2450 = vmatpush1.msra.mxu0 %v2215
    %2451 = vmatprep.subr.mxu0 %v2220
    %2452 = vmatpush1.msra.mxu0 %v2219
    %2453 = vmatprep.subr.mxu0 0.0
    %2454 = vmatpush1.msra.mxu0 0.0
    %2455 = vmatprep.subr.mxu0 0.0
    %2456 = vmatpush1.msra.mxu0 0.0
    %2457 = vmatprep.subr.mxu0 0.0
    %2458 = vmatpush1.msra.mxu0 0.0
    %2459 = vmatprep.subr.mxu0 0.0
    %2460 = vmatpush1.msra.mxu0 0.0
    %2461 = vmatprep.subr.mxu0 0.0
    %2462 = vmatpush1.msra.mxu0 0.0
    %2463 = vmatprep.subr.mxu0 0.0
    %2464 = vmatpush1.msra.mxu0 0.0
    %2465 = vmatprep.subr.mxu0 0.0
    %2466 = vmatpush1.msra.mxu0 0.0
    %2467 = vmatprep.subr.mxu0 0.0
    %2468 = vmatpush1.msra.mxu0 0.0
    %2469 = vmatprep.subr.mxu0 0.0
    %2470 = vmatpush1.msra.mxu0 0.0
    %2471 = vmatprep.subr.mxu0 0.0
    %2472 = vmatpush1.msra.mxu0 0.0
    %2473 = vmatprep.subr.mxu0 0.0
    %2474 = vmatpush1.msra.mxu0 0.0
    %2475 = vmatprep.subr.mxu0 0.0
    %2476 = vmatpush1.msra.mxu0 0.0
    %2477 = vmatprep.subr.mxu0 0.0
    %2478 = vmatpush1.msra.mxu0 0.0
    %2479 = vmatprep.subr.mxu0 0.0
    %2480 = vmatpush1.msra.mxu0 0.0
    %2481 = vmatprep.subr.mxu0 0.0
    %2482 = vmatpush1.msra.mxu0 0.0
    %2483 = vmatprep.subr.mxu0 0.0
    %2484 = vmatpush1.msra.mxu0 0.0
    %2485 = vmatprep.mubr.f32.mxu0 0.0
    %2486 = vmatmul.mubr.f32.gmra.mrb[0].mxu0 %v966
    %v2487 = vpop.f32.mrb[0].mxu0
    %v2488 = vadd.f32 %v2299, %v2487
    %v2489 = vpop.f32.mrb[0].mxu0
    %v2490 = vadd.f32 %v2303, %v2489
    %2491 = vmatprep.mubr.f32.mxu0 0.0
    %2492 = vmatmul.mubr.f32.gmra.mrb[0].mxu0 %v1136
    %v2493 = vpop.f32.mrb[0].mxu0
    %v2494 = vadd.f32 %v2299, %v2493
    %v2495 = vpop.f32.mrb[0].mxu0
    %v2496 = vadd.f32 %v2303, %v2495
    %2497 = vmatprep.mubr.f32.mxu0 0.0
    %2498 = vmatmul.mubr.f32.gmra.mrb[0].mxu0 %v1306
    %v2499 = vpop.f32.mrb[0].mxu0
    %v2500 = vadd.f32 %v2299, %v2499
    %v2501 = vpop.f32.mrb[0].mxu0
    %v2502 = vadd.f32 %v2303, %v2501
    %2503 = vmatprep.mubr.f32.mxu0 0.0
    %2504 = vmatmul.mubr.f32.gmra.mrb[0].mxu0 %v1476
    %v2505 = vpop.f32.mrb[0].mxu0
    %v2506 = vadd.f32 %v2299, %v2505
    %v2507 = vpop.f32.mrb[0].mxu0
    %v2508 = vadd.f32 %v2303, %v2507
    %2509 = vmatprep.mubr.f32.mxu0 0.0
    %2510 = vmatmul.mubr.f32.gmra.mrb[0].mxu0 %v1646
    %v2511 = vpop.f32.mrb[0].mxu0
    %v2512 = vadd.f32 %v2299, %v2511
    %v2513 = vpop.f32.mrb[0].mxu0
    %v2514 = vadd.f32 %v2303, %v2513
    %2515 = vmatprep.mubr.f32.mxu0 0.0
    %2516 = vmatmul.mubr.f32.gmra.mrb[0].mxu0 %v1816
    %v2517 = vpop.f32.mrb[0].mxu0
    %v2518 = vadd.f32 %v2299, %v2517
    %v2519 = vpop.f32.mrb[0].mxu0
    %v2520 = vadd.f32 %v2303, %v2519
    %2521 = vmatprep.mubr.f32.mxu0 0.0
    %2522 = vmatmul.mubr.f32.gmra.mrb[0].mxu0 %v1986
    %v2523 = vpop.f32.mrb[0].mxu0
    %v2524 = vadd.f32 %v2299, %v2523
    %v2525 = vpop.f32.mrb[0].mxu0
    %v2526 = vadd.f32 %v2303, %v2525
    %2527 = vmatprep.mubr.f32.mxu0 0.0
    %2528 = vmatmul.mubr.f32.gmra.mrb[0].mxu0 %v2156
    %v2529 = vpop.f32.mrb[0].mxu0
    %v2530 = vadd.f32 %v2299, %v2529
    %v2531 = vpop.f32.mrb[0].mxu0
    %v2532 = vadd.f32 %v2303, %v2531
    %2533 = vdwg.mxu0
    %2534 = vmatprep.subr.mxu0 %v2222
    %2535 = vmatpush1.msra.mxu0 %v2221
    %2536 = vmatprep.subr.mxu0 %v2226
    %2537 = vmatpush1.msra.mxu0 %v2225
    %2538 = vmatprep.subr.mxu0 %v2230
    %2539 = vmatpush1.msra.mxu0 %v2229
    %2540 = vmatprep.subr.mxu0 %v2234
    %2541 = vmatpush1.msra.mxu0 %v2233
    %2542 = vmatprep.subr.mxu0 %v2238
    %2543 = vmatpush1.msra.mxu0 %v2237
    %2544 = vmatprep.subr.mxu0 %v2242
    %2545 = vmatpush1.msra.mxu0 %v2241
    %2546 = vmatprep.subr.mxu0 %v2246
    %2547 = vmatpush1.msra.mxu0 %v2245
    %2548 = vmatprep.subr.mxu0 %v2250
    %2549 = vmatpush1.msra.mxu0 %v2249
    %2550 = vmatprep.subr.mxu0 %v2254
    %2551 = vmatpush1.msra.mxu0 %v2253
    %2552 = vmatprep.subr.mxu0 %v2258
    %2553 = vmatpush1.msra.mxu0 %v2257
    %2554 = vmatprep.subr.mxu0 %v2262
    %2555 = vmatpush1.msra.mxu0 %v2261
    %2556 = vmatprep.subr.mxu0 %v2266
    %2557 = vmatpush1.msra.mxu0 %v2265
    %2558 = vmatprep.subr.mxu0 %v2270
    %2559 = vmatpush1.msra.mxu0 %v2269
    %2560 = vmatprep.subr.mxu0 %v2274
    %2561 = vmatpush1.msra.mxu0 %v2273
    %2562 = vmatprep.subr.mxu0 %v2278
    %2563 = vmatpush1.msra.mxu0 %v2277
    %2564 = vmatprep.subr.mxu0 %v2282
    %2565 = vmatpush1.msra.mxu0 %v2281
    %2566 = vmatprep.subr.mxu0 0.0
    %2567 = vmatpush1.msra.mxu0 0.0
    %2568 = vmatprep.subr.mxu0 0.0
    %2569 = vmatpush1.msra.mxu0 0.0
    %2570 = vmatprep.subr.mxu0 0.0
    %2571 = vmatpush1.msra.mxu0 0.0
    %2572 = vmatprep.subr.mxu0 0.0
    %2573 = vmatpush1.msra.mxu0 0.0
    %2574 = vmatprep.subr.mxu0 0.0
    %2575 = vmatpush1.msra.mxu0 0.0
    %2576 = vmatprep.subr.mxu0 0.0
    %2577 = vmatpush1.msra.mxu0 0.0
    %2578 = vmatprep.subr.mxu0 0.0
    %2579 = vmatpush1.msra.mxu0 0.0
    %2580 = vmatprep.subr.mxu0 0.0
    %2581 = vmatpush1.msra.mxu0 0.0
    %2582 = vmatprep.subr.mxu0 0.0
    %2583 = vmatpush1.msra.mxu0 0.0
    %2584 = vmatprep.subr.mxu0 0.0
    %2585 = vmatpush1.msra.mxu0 0.0
    %2586 = vmatprep.subr.mxu0 0.0
    %2587 = vmatpush1.msra.mxu0 0.0
    %2588 = vmatprep.subr.mxu0 0.0
    %2589 = vmatpush1.msra.mxu0 0.0
    %2590 = vmatprep.subr.mxu0 0.0
    %2591 = vmatpush1.msra.mxu0 0.0
    %2592 = vmatprep.subr.mxu0 0.0
    %2593 = vmatpush1.msra.mxu0 0.0
    %2594 = vmatprep.subr.mxu0 0.0
    %2595 = vmatpush1.msra.mxu0 0.0
    %2596 = vmatprep.subr.mxu0 0.0
    %2597 = vmatpush1.msra.mxu0 0.0
    %2598 = vmatprep.mubr.f32.mxu0 0.0
    %2599 = vmatmul.mubr.f32.gmra.mrb[0].mxu0 0.0
    %v2600 = vpop.f32.mrb[0].mxu0
    %v2601 = vadd.f32 0.0, %v2600
    %v2602 = vpop.f32.mrb[0].mxu0
    %v2603 = vadd.f32 0.0, %v2602
    %2604 = vdwg.mxu0
    %2605 = vmatprep.subr.mxu0 %v2224
    %2606 = vmatpush1.msra.mxu0 %v2223
    %2607 = vmatprep.subr.mxu0 %v2228
    %2608 = vmatpush1.msra.mxu0 %v2227
    %2609 = vmatprep.subr.mxu0 %v2232
    %2610 = vmatpush1.msra.mxu0 %v2231
    %2611 = vmatprep.subr.mxu0 %v2236
    %2612 = vmatpush1.msra.mxu0 %v2235
    %2613 = vmatprep.subr.mxu0 %v2240
    %2614 = vmatpush1.msra.mxu0 %v2239
    %2615 = vmatprep.subr.mxu0 %v2244
    %2616 = vmatpush1.msra.mxu0 %v2243
    %2617 = vmatprep.subr.mxu0 %v2248
    %2618 = vmatpush1.msra.mxu0 %v2247
    %2619 = vmatprep.subr.mxu0 %v2252
    %2620 = vmatpush1.msra.mxu0 %v2251
    %2621 = vmatprep.subr.mxu0 %v2256
    %2622 = vmatpush1.msra.mxu0 %v2255
    %2623 = vmatprep.subr.mxu0 %v2260
    %2624 = vmatpush1.msra.mxu0 %v2259
    %2625 = vmatprep.subr.mxu0 %v2264
    %2626 = vmatpush1.msra.mxu0 %v2263
    %2627 = vmatprep.subr.mxu0 %v2268
    %2628 = vmatpush1.msra.mxu0 %v2267
    %2629 = vmatprep.subr.mxu0 %v2272
    %2630 = vmatpush1.msra.mxu0 %v2271
    %2631 = vmatprep.subr.mxu0 %v2276
    %2632 = vmatpush1.msra.mxu0 %v2275
    %2633 = vmatprep.subr.mxu0 %v2280
    %2634 = vmatpush1.msra.mxu0 %v2279
    %2635 = vmatprep.subr.mxu0 %v2284
    %2636 = vmatpush1.msra.mxu0 %v2283
    %2637 = vmatprep.subr.mxu0 0.0
    %2638 = vmatpush1.msra.mxu0 0.0
    %2639 = vmatprep.subr.mxu0 0.0
    %2640 = vmatpush1.msra.mxu0 0.0
    %2641 = vmatprep.subr.mxu0 0.0
    %2642 = vmatpush1.msra.mxu0 0.0
    %2643 = vmatprep.subr.mxu0 0.0
    %2644 = vmatpush1.msra.mxu0 0.0
    %2645 = vmatprep.subr.mxu0 0.0
    %2646 = vmatpush1.msra.mxu0 0.0
    %2647 = vmatprep.subr.mxu0 0.0
    %2648 = vmatpush1.msra.mxu0 0.0
    %2649 = vmatprep.subr.mxu0 0.0
    %2650 = vmatpush1.msra.mxu0 0.0
    %2651 = vmatprep.subr.mxu0 0.0
    %2652 = vmatpush1.msra.mxu0 0.0
    %2653 = vmatprep.subr.mxu0 0.0
    %2654 = vmatpush1.msra.mxu0 0.0
    %2655 = vmatprep.subr.mxu0 0.0
    %2656 = vmatpush1.msra.mxu0 0.0
    %2657 = vmatprep.subr.mxu0 0.0
    %2658 = vmatpush1.msra.mxu0 0.0
    %2659 = vmatprep.subr.mxu0 0.0
    %2660 = vmatpush1.msra.mxu0 0.0
    %2661 = vmatprep.subr.mxu0 0.0
    %2662 = vmatpush1.msra.mxu0 0.0
    %2663 = vmatprep.subr.mxu0 0.0
    %2664 = vmatpush1.msra.mxu0 0.0
    %2665 = vmatprep.subr.mxu0 0.0
    %2666 = vmatpush1.msra.mxu0 0.0
    %2667 = vmatprep.subr.mxu0 0.0
    %2668 = vmatpush1.msra.mxu0 0.0
    %2669 = vmatprep.mubr.f32.mxu0 0.0
    %2670 = vmatmul.mubr.f32.gmra.mrb[0].mxu0 0.0
    %v2671 = vpop.f32.mrb[0].mxu0
    %v2672 = vadd.f32 0.0, %v2671
    %v2673 = vpop.f32.mrb[0].mxu0
    %v2674 = vadd.f32 0.0, %v2673
    %2675 = vdwg.mxu0
    %v2676 = vadd.f32 %v2375, %v2601
    %v2677 = vadd.f32 %v2377, %v2603
    %v2678 = vadd.f32 %v2488, %v2672
    %v2679 = vadd.f32 %v2490, %v2674
    %v2680 = vxor.u32 %v2676, 2147483648
    %v2681 = vxor.u32 %v2677, 2147483648
    %v2682 = vxor.u32 %v2678, 2147483648
    %v2683 = vmul.f32 %v2680, 1.442695
    %v2684 = vpow.pop %v2683
    %v2685 = vmul.f32 %v2681, 1.442695
    %v2686 = vpow.pop %v2685
    %v2687 = vmul.f32 %v2682, 1.442695
    %v2688 = vpow.pop %v2687
    %v2689 = vadd.f32 %v2684, 1.0
    %v2690 = vadd.f32 %v2686, 1.0
    %v2691 = vadd.f32 %v2688, 1.0
    %v2692 = vrcp.pop %v2689
    %v2693 = vmul.f32 1.0, %v2692
    %v2694 = vrcp.pop %v2690
    %v2695 = vmul.f32 1.0, %v2694
    %v2696 = vrcp.pop %v2691
    %v2697 = vmul.f32 1.0, %v2696
    %v2698 = vtanh.pop %v2679
    %v2699 = vmul.f32 %v2695, 0.0
    %v2700 = vmul.f32 %v2693, %v2698
    %v2701 = vadd.f32 %v2699, %v2700
    %v2702 = vtanh.pop %v2701
    %v2703 = vmul.f32 %v2697, %v2702
    %2704 = vmatprep.subr.mxu0 %v2222
    %2705 = vmatpush1.msra.mxu0 %v2221
    %2706 = vmatprep.subr.mxu0 %v2226
    %2707 = vmatpush1.msra.mxu0 %v2225
    %2708 = vmatprep.subr.mxu0 %v2230
    %2709 = vmatpush1.msra.mxu0 %v2229
    %2710 = vmatprep.subr.mxu0 %v2234
    %2711 = vmatpush1.msra.mxu0 %v2233
    %2712 = vmatprep.subr.mxu0 %v2238
    %2713 = vmatpush1.msra.mxu0 %v2237
    %2714 = vmatprep.subr.mxu0 %v2242
    %2715 = vmatpush1.msra.mxu0 %v2241
    %2716 = vmatprep.subr.mxu0 %v2246
    %2717 = vmatpush1.msra.mxu0 %v2245
    %2718 = vmatprep.subr.mxu0 %v2250
    %2719 = vmatpush1.msra.mxu0 %v2249
    %2720 = vmatprep.subr.mxu0 %v2254
    %2721 = vmatpush1.msra.mxu0 %v2253
    %2722 = vmatprep.subr.mxu0 %v2258
    %2723 = vmatpush1.msra.mxu0 %v2257
    %2724 = vmatprep.subr.mxu0 %v2262
    %2725 = vmatpush1.msra.mxu0 %v2261
    %2726 = vmatprep.subr.mxu0 %v2266
    %2727 = vmatpush1.msra.mxu0 %v2265
    %2728 = vmatprep.subr.mxu0 %v2270
    %2729 = vmatpush1.msra.mxu0 %v2269
    %2730 = vmatprep.subr.mxu0 %v2274
    %2731 = vmatpush1.msra.mxu0 %v2273
    %2732 = vmatprep.subr.mxu0 %v2278
    %2733 = vmatpush1.msra.mxu0 %v2277
    %2734 = vmatprep.subr.mxu0 %v2282
    %2735 = vmatpush1.msra.mxu0 %v2281
    %2736 = vmatprep.subr.mxu0 0.0
    %2737 = vmatpush1.msra.mxu0 0.0
    %2738 = vmatprep.subr.mxu0 0.0
    %2739 = vmatpush1.msra.mxu0 0.0
    %2740 = vmatprep.subr.mxu0 0.0
    %2741 = vmatpush1.msra.mxu0 0.0
    %2742 = vmatprep.subr.mxu0 0.0
    %2743 = vmatpush1.msra.mxu0 0.0
    %2744 = vmatprep.subr.mxu0 0.0
    %2745 = vmatpush1.msra.mxu0 0.0
    %2746 = vmatprep.subr.mxu0 0.0
    %2747 = vmatpush1.msra.mxu0 0.0
    %2748 = vmatprep.subr.mxu0 0.0
    %2749 = vmatpush1.msra.mxu0 0.0
    %2750 = vmatprep.subr.mxu0 0.0
    %2751 = vmatpush1.msra.mxu0 0.0
    %2752 = vmatprep.subr.mxu0 0.0
    %2753 = vmatpush1.msra.mxu0 0.0
    %2754 = vmatprep.subr.mxu0 0.0
    %2755 = vmatpush1.msra.mxu0 0.0
    %2756 = vmatprep.subr.mxu0 0.0
    %2757 = vmatpush1.msra.mxu0 0.0
    %2758 = vmatprep.subr.mxu0 0.0
    %2759 = vmatpush1.msra.mxu0 0.0
    %2760 = vmatprep.subr.mxu0 0.0
    %2761 = vmatpush1.msra.mxu0 0.0
    %2762 = vmatprep.subr.mxu0 0.0
    %2763 = vmatpush1.msra.mxu0 0.0
    %2764 = vmatprep.subr.mxu0 0.0
    %2765 = vmatpush1.msra.mxu0 0.0
    %2766 = vmatprep.subr.mxu0 0.0
    %2767 = vmatpush1.msra.mxu0 0.0
    %2768 = vmatprep.mubr.f32.mxu0 0.0
    %2769 = vmatmul.mubr.f32.gmra.mrb[0].mxu0 %v2703
    %v2770 = vpop.f32.mrb[0].mxu0
    %v2771 = vadd.f32 0.0, %v2770
    %v2772 = vpop.f32.mrb[0].mxu0
    %v2773 = vadd.f32 0.0, %v2772
    %2774 = vdwg.mxu0
    %2775 = vmatprep.subr.mxu0 %v2224
    %2776 = vmatpush1.msra.mxu0 %v2223
    %2777 = vmatprep.subr.mxu0 %v2228
    %2778 = vmatpush1.msra.mxu0 %v2227
    %2779 = vmatprep.subr.mxu0 %v2232
    %2780 = vmatpush1.msra.mxu0 %v2231
    %2781 = vmatprep.subr.mxu0 %v2236
    %2782 = vmatpush1.msra.mxu0 %v2235
    %2783 = vmatprep.subr.mxu0 %v2240
    %2784 = vmatpush1.msra.mxu0 %v2239
    %2785 = vmatprep.subr.mxu0 %v2244
    %2786 = vmatpush1.msra.mxu0 %v2243
    %2787 = vmatprep.subr.mxu0 %v2248
    %2788 = vmatpush1.msra.mxu0 %v2247
    %2789 = vmatprep.subr.mxu0 %v2252
    %2790 = vmatpush1.msra.mxu0 %v2251
    %2791 = vmatprep.subr.mxu0 %v2256
    %2792 = vmatpush1.msra.mxu0 %v2255
    %2793 = vmatprep.subr.mxu0 %v2260
    %2794 = vmatpush1.msra.mxu0 %v2259
    %2795 = vmatprep.subr.mxu0 %v2264
    %2796 = vmatpush1.msra.mxu0 %v2263
    %2797 = vmatprep.subr.mxu0 %v2268
    %2798 = vmatpush1.msra.mxu0 %v2267
    %2799 = vmatprep.subr.mxu0 %v2272
    %2800 = vmatpush1.msra.mxu0 %v2271
    %2801 = vmatprep.subr.mxu0 %v2276
    %2802 = vmatpush1.msra.mxu0 %v2275
    %2803 = vmatprep.subr.mxu0 %v2280
    %2804 = vmatpush1.msra.mxu0 %v2279
    %2805 = vmatprep.subr.mxu0 %v2284
    %2806 = vmatpush1.msra.mxu0 %v2283
    %2807 = vmatprep.subr.mxu0 0.0
    %2808 = vmatpush1.msra.mxu0 0.0
    %2809 = vmatprep.subr.mxu0 0.0
    %2810 = vmatpush1.msra.mxu0 0.0
    %2811 = vmatprep.subr.mxu0 0.0
    %2812 = vmatpush1.msra.mxu0 0.0
    %2813 = vmatprep.subr.mxu0 0.0
    %2814 = vmatpush1.msra.mxu0 0.0
    %2815 = vmatprep.subr.mxu0 0.0
    %2816 = vmatpush1.msra.mxu0 0.0
    %2817 = vmatprep.subr.mxu0 0.0
    %2818 = vmatpush1.msra.mxu0 0.0
    %2819 = vmatprep.subr.mxu0 0.0
    %2820 = vmatpush1.msra.mxu0 0.0
    %2821 = vmatprep.subr.mxu0 0.0
    %2822 = vmatpush1.msra.mxu0 0.0
    %2823 = vmatprep.subr.mxu0 0.0
    %2824 = vmatpush1.msra.mxu0 0.0
    %2825 = vmatprep.subr.mxu0 0.0
    %2826 = vmatpush1.msra.mxu0 0.0
    %2827 = vmatprep.subr.mxu0 0.0
    %2828 = vmatpush1.msra.mxu0 0.0
    %2829 = vmatprep.subr.mxu0 0.0
    %2830 = vmatpush1.msra.mxu0 0.0
    %2831 = vmatprep.subr.mxu0 0.0
    %2832 = vmatpush1.msra.mxu0 0.0
    %2833 = vmatprep.subr.mxu0 0.0
    %2834 = vmatpush1.msra.mxu0 0.0
    %2835 = vmatprep.subr.mxu0 0.0
    %2836 = vmatpush1.msra.mxu0 0.0
    %2837 = vmatprep.subr.mxu0 0.0
    %2838 = vmatpush1.msra.mxu0 0.0
    %2839 = vmatprep.mubr.f32.mxu0 0.0
    %2840 = vmatmul.mubr.f32.gmra.mrb[0].mxu0 %v2703
    %v2841 = vpop.f32.mrb[0].mxu0
    %v2842 = vadd.f32 0.0, %v2841
    %v2843 = vpop.f32.mrb[0].mxu0
    %v2844 = vadd.f32 0.0, %v2843
    %2845 = vdwg.mxu0
    %v2846 = vadd.f32 %v2381, %v2771
    %v2847 = vadd.f32 %v2383, %v2773
    %v2848 = vadd.f32 %v2494, %v2842
    %v2849 = vadd.f32 %v2496, %v2844
    %v2850 = vxor.u32 %v2846, 2147483648
    %v2851 = vxor.u32 %v2847, 2147483648
    %v2852 = vxor.u32 %v2848, 2147483648
    %v2853 = vmul.f32 %v2850, 1.442695
    %v2854 = vpow.pop %v2853
    %v2855 = vmul.f32 %v2851, 1.442695
    %v2856 = vpow.pop %v2855
    %v2857 = vmul.f32 %v2852, 1.442695
    %v2858 = vpow.pop %v2857
    %v2859 = vadd.f32 %v2854, 1.0
    %v2860 = vadd.f32 %v2856, 1.0
    %v2861 = vadd.f32 %v2858, 1.0
    %v2862 = vrcp.pop %v2859
    %v2863 = vmul.f32 1.0, %v2862
    %v2864 = vrcp.pop %v2860
    %v2865 = vmul.f32 1.0, %v2864
    %v2866 = vrcp.pop %v2861
    %v2867 = vmul.f32 1.0, %v2866
    %v2868 = vtanh.pop %v2849
    %v2869 = vmul.f32 %v2865, %v2701
    %v2870 = vmul.f32 %v2863, %v2868
    %v2871 = vadd.f32 %v2869, %v2870
    %v2872 = vtanh.pop %v2871
    %v2873 = vmul.f32 %v2867, %v2872
    %2874 = vmatprep.subr.mxu0 %v2222
    %2875 = vmatpush1.msra.mxu0 %v2221
    %2876 = vmatprep.subr.mxu0 %v2226
    %2877 = vmatpush1.msra.mxu0 %v2225
    %2878 = vmatprep.subr.mxu0 %v2230
    %2879 = vmatpush1.msra.mxu0 %v2229
    %2880 = vmatprep.subr.mxu0 %v2234
    %2881 = vmatpush1.msra.mxu0 %v2233
    %2882 = vmatprep.subr.mxu0 %v2238
    %2883 = vmatpush1.msra.mxu0 %v2237
    %2884 = vmatprep.subr.mxu0 %v2242
    %2885 = vmatpush1.msra.mxu0 %v2241
    %2886 = vmatprep.subr.mxu0 %v2246
    %2887 = vmatpush1.msra.mxu0 %v2245
    %2888 = vmatprep.subr.mxu0 %v2250
    %2889 = vmatpush1.msra.mxu0 %v2249
    %2890 = vmatprep.subr.mxu0 %v2254
    %2891 = vmatpush1.msra.mxu0 %v2253
    %2892 = vmatprep.subr.mxu0 %v2258
    %2893 = vmatpush1.msra.mxu0 %v2257
    %2894 = vmatprep.subr.mxu0 %v2262
    %2895 = vmatpush1.msra.mxu0 %v2261
    %2896 = vmatprep.subr.mxu0 %v2266
    %2897 = vmatpush1.msra.mxu0 %v2265
    %2898 = vmatprep.subr.mxu0 %v2270
    %2899 = vmatpush1.msra.mxu0 %v2269
    %2900 = vmatprep.subr.mxu0 %v2274
    %2901 = vmatpush1.msra.mxu0 %v2273
    %2902 = vmatprep.subr.mxu0 %v2278
    %2903 = vmatpush1.msra.mxu0 %v2277
    %2904 = vmatprep.subr.mxu0 %v2282
    %2905 = vmatpush1.msra.mxu0 %v2281
    %2906 = vmatprep.subr.mxu0 0.0
    %2907 = vmatpush1.msra.mxu0 0.0
    %2908 = vmatprep.subr.mxu0 0.0
    %2909 = vmatpush1.msra.mxu0 0.0
    %2910 = vmatprep.subr.mxu0 0.0
    %2911 = vmatpush1.msra.mxu0 0.0
    %2912 = vmatprep.subr.mxu0 0.0
    %2913 = vmatpush1.msra.mxu0 0.0
    %2914 = vmatprep.subr.mxu0 0.0
    %2915 = vmatpush1.msra.mxu0 0.0
    %2916 = vmatprep.subr.mxu0 0.0
    %2917 = vmatpush1.msra.mxu0 0.0
    %2918 = vmatprep.subr.mxu0 0.0
    %2919 = vmatpush1.msra.mxu0 0.0
    %2920 = vmatprep.subr.mxu0 0.0
    %2921 = vmatpush1.msra.mxu0 0.0
    %2922 = vmatprep.subr.mxu0 0.0
    %2923 = vmatpush1.msra.mxu0 0.0
    %2924 = vmatprep.subr.mxu0 0.0
    %2925 = vmatpush1.msra.mxu0 0.0
    %2926 = vmatprep.subr.mxu0 0.0
    %2927 = vmatpush1.msra.mxu0 0.0
    %2928 = vmatprep.subr.mxu0 0.0
    %2929 = vmatpush1.msra.mxu0 0.0
    %2930 = vmatprep.subr.mxu0 0.0
    %2931 = vmatpush1.msra.mxu0 0.0
    %2932 = vmatprep.subr.mxu0 0.0
    %2933 = vmatpush1.msra.mxu0 0.0
    %2934 = vmatprep.subr.mxu0 0.0
    %2935 = vmatpush1.msra.mxu0 0.0
    %2936 = vmatprep.subr.mxu0 0.0
    %2937 = vmatpush1.msra.mxu0 0.0
    %2938 = vmatprep.mubr.f32.mxu0 0.0
    %2939 = vmatmul.mubr.f32.gmra.mrb[0].mxu0 %v2873
    %v2940 = vpop.f32.mrb[0].mxu0
    %v2941 = vadd.f32 0.0, %v2940
    %v2942 = vpop.f32.mrb[0].mxu0
    %v2943 = vadd.f32 0.0, %v2942
    %2944 = vdwg.mxu0
    %2945 = vmatprep.subr.mxu0 %v2224
    %2946 = vmatpush1.msra.mxu0 %v2223
    %2947 = vmatprep.subr.mxu0 %v2228
    %2948 = vmatpush1.msra.mxu0 %v2227
    %2949 = vmatprep.subr.mxu0 %v2232
    %2950 = vmatpush1.msra.mxu0 %v2231
    %2951 = vmatprep.subr.mxu0 %v2236
    %2952 = vmatpush1.msra.mxu0 %v2235
    %2953 = vmatprep.subr.mxu0 %v2240
    %2954 = vmatpush1.msra.mxu0 %v2239
    %2955 = vmatprep.subr.mxu0 %v2244
    %2956 = vmatpush1.msra.mxu0 %v2243
    %2957 = vmatprep.subr.mxu0 %v2248
    %2958 = vmatpush1.msra.mxu0 %v2247
    %2959 = vmatprep.subr.mxu0 %v2252
    %2960 = vmatpush1.msra.mxu0 %v2251
    %2961 = vmatprep.subr.mxu0 %v2256
    %2962 = vmatpush1.msra.mxu0 %v2255
    %2963 = vmatprep.subr.mxu0 %v2260
    %2964 = vmatpush1.msra.mxu0 %v2259
    %2965 = vmatprep.subr.mxu0 %v2264
    %2966 = vmatpush1.msra.mxu0 %v2263
    %2967 = vmatprep.subr.mxu0 %v2268
    %2968 = vmatpush1.msra.mxu0 %v2267
    %2969 = vmatprep.subr.mxu0 %v2272
    %2970 = vmatpush1.msra.mxu0 %v2271
    %2971 = vmatprep.subr.mxu0 %v2276
    %2972 = vmatpush1.msra.mxu0 %v2275
    %2973 = vmatprep.subr.mxu0 %v2280
    %2974 = vmatpush1.msra.mxu0 %v2279
    %2975 = vmatprep.subr.mxu0 %v2284
    %2976 = vmatpush1.msra.mxu0 %v2283
    %2977 = vmatprep.subr.mxu0 0.0
    %2978 = vmatpush1.msra.mxu0 0.0
    %2979 = vmatprep.subr.mxu0 0.0
    %2980 = vmatpush1.msra.mxu0 0.0
    %2981 = vmatprep.subr.mxu0 0.0
    %2982 = vmatpush1.msra.mxu0 0.0
    %2983 = vmatprep.subr.mxu0 0.0
    %2984 = vmatpush1.msra.mxu0 0.0
    %2985 = vmatprep.subr.mxu0 0.0
    %2986 = vmatpush1.msra.mxu0 0.0
    %2987 = vmatprep.subr.mxu0 0.0
    %2988 = vmatpush1.msra.mxu0 0.0
    %2989 = vmatprep.subr.mxu0 0.0
    %2990 = vmatpush1.msra.mxu0 0.0
    %2991 = vmatprep.subr.mxu0 0.0
    %2992 = vmatpush1.msra.mxu0 0.0
    %2993 = vmatprep.subr.mxu0 0.0
    %2994 = vmatpush1.msra.mxu0 0.0
    %2995 = vmatprep.subr.mxu0 0.0
    %2996 = vmatpush1.msra.mxu0 0.0
    %2997 = vmatprep.subr.mxu0 0.0
    %2998 = vmatpush1.msra.mxu0 0.0
    %2999 = vmatprep.subr.mxu0 0.0
    %3000 = vmatpush1.msra.mxu0 0.0
    %3001 = vmatprep.subr.mxu0 0.0
    %3002 = vmatpush1.msra.mxu0 0.0
    %3003 = vmatprep.subr.mxu0 0.0
    %3004 = vmatpush1.msra.mxu0 0.0
    %3005 = vmatprep.subr.mxu0 0.0
    %3006 = vmatpush1.msra.mxu0 0.0
    %3007 = vmatprep.subr.mxu0 0.0
    %3008 = vmatpush1.msra.mxu0 0.0
    %3009 = vmatprep.mubr.f32.mxu0 0.0
    %3010 = vmatmul.mubr.f32.gmra.mrb[0].mxu0 %v2873
    %v3011 = vpop.f32.mrb[0].mxu0
    %v3012 = vadd.f32 0.0, %v3011
    %v3013 = vpop.f32.mrb[0].mxu0
    %v3014 = vadd.f32 0.0, %v3013
    %3015 = vdwg.mxu0
    %v3016 = vadd.f32 %v2387, %v2941
    %v3017 = vadd.f32 %v2389, %v2943
    %v3018 = vadd.f32 %v2500, %v3012
    %v3019 = vadd.f32 %v2502, %v3014
    %v3020 = vxor.u32 %v3016, 2147483648
    %v3021 = vxor.u32 %v3017, 2147483648
    %v3022 = vxor.u32 %v3018, 2147483648
    %v3023 = vmul.f32 %v3020, 1.442695
    %v3024 = vpow.pop %v3023
    %v3025 = vmul.f32 %v3021, 1.442695
    %v3026 = vpow.pop %v3025
    %v3027 = vmul.f32 %v3022, 1.442695
    %v3028 = vpow.pop %v3027
    %v3029 = vadd.f32 %v3024, 1.0
    %v3030 = vadd.f32 %v3026, 1.0
    %v3031 = vadd.f32 %v3028, 1.0
    %v3032 = vrcp.pop %v3029
    %v3033 = vmul.f32 1.0, %v3032
    %v3034 = vrcp.pop %v3030
    %v3035 = vmul.f32 1.0, %v3034
    %v3036 = vrcp.pop %v3031
    %v3037 = vmul.f32 1.0, %v3036
    %v3038 = vtanh.pop %v3019
    %v3039 = vmul.f32 %v3035, %v2871
    %v3040 = vmul.f32 %v3033, %v3038
    %v3041 = vadd.f32 %v3039, %v3040
    %v3042 = vtanh.pop %v3041
    %v3043 = vmul.f32 %v3037, %v3042
    %3044 = vmatprep.subr.mxu0 %v2222
    %3045 = vmatpush1.msra.mxu0 %v2221
    %3046 = vmatprep.subr.mxu0 %v2226
    %3047 = vmatpush1.msra.mxu0 %v2225
    %3048 = vmatprep.subr.mxu0 %v2230
    %3049 = vmatpush1.msra.mxu0 %v2229
    %3050 = vmatprep.subr.mxu0 %v2234
    %3051 = vmatpush1.msra.mxu0 %v2233
    %3052 = vmatprep.subr.mxu0 %v2238
    %3053 = vmatpush1.msra.mxu0 %v2237
    %3054 = vmatprep.subr.mxu0 %v2242
    %3055 = vmatpush1.msra.mxu0 %v2241
    %3056 = vmatprep.subr.mxu0 %v2246
    %3057 = vmatpush1.msra.mxu0 %v2245
    %3058 = vmatprep.subr.mxu0 %v2250
    %3059 = vmatpush1.msra.mxu0 %v2249
    %3060 = vmatprep.subr.mxu0 %v2254
    %3061 = vmatpush1.msra.mxu0 %v2253
    %3062 = vmatprep.subr.mxu0 %v2258
    %3063 = vmatpush1.msra.mxu0 %v2257
    %3064 = vmatprep.subr.mxu0 %v2262
    %3065 = vmatpush1.msra.mxu0 %v2261
    %3066 = vmatprep.subr.mxu0 %v2266
    %3067 = vmatpush1.msra.mxu0 %v2265
    %3068 = vmatprep.subr.mxu0 %v2270
    %3069 = vmatpush1.msra.mxu0 %v2269
    %3070 = vmatprep.subr.mxu0 %v2274
    %3071 = vmatpush1.msra.mxu0 %v2273
    %3072 = vmatprep.subr.mxu0 %v2278
    %3073 = vmatpush1.msra.mxu0 %v2277
    %3074 = vmatprep.subr.mxu0 %v2282
    %3075 = vmatpush1.msra.mxu0 %v2281
    %3076 = vmatprep.subr.mxu0 0.0
    %3077 = vmatpush1.msra.mxu0 0.0
    %3078 = vmatprep.subr.mxu0 0.0
    %3079 = vmatpush1.msra.mxu0 0.0
    %3080 = vmatprep.subr.mxu0 0.0
    %3081 = vmatpush1.msra.mxu0 0.0
    %3082 = vmatprep.subr.mxu0 0.0
    %3083 = vmatpush1.msra.mxu0 0.0
    %3084 = vmatprep.subr.mxu0 0.0
    %3085 = vmatpush1.msra.mxu0 0.0
    %3086 = vmatprep.subr.mxu0 0.0
    %3087 = vmatpush1.msra.mxu0 0.0
    %3088 = vmatprep.subr.mxu0 0.0
    %3089 = vmatpush1.msra.mxu0 0.0
    %3090 = vmatprep.subr.mxu0 0.0
    %3091 = vmatpush1.msra.mxu0 0.0
    %3092 = vmatprep.subr.mxu0 0.0
    %3093 = vmatpush1.msra.mxu0 0.0
    %3094 = vmatprep.subr.mxu0 0.0
    %3095 = vmatpush1.msra.mxu0 0.0
    %3096 = vmatprep.subr.mxu0 0.0
    %3097 = vmatpush1.msra.mxu0 0.0
    %3098 = vmatprep.subr.mxu0 0.0
    %3099 = vmatpush1.msra.mxu0 0.0
    %3100 = vmatprep.subr.mxu0 0.0
    %3101 = vmatpush1.msra.mxu0 0.0
    %3102 = vmatprep.subr.mxu0 0.0
    %3103 = vmatpush1.msra.mxu0 0.0
    %3104 = vmatprep.subr.mxu0 0.0
    %3105 = vmatpush1.msra.mxu0 0.0
    %3106 = vmatprep.subr.mxu0 0.0
    %3107 = vmatpush1.msra.mxu0 0.0
    %3108 = vmatprep.mubr.f32.mxu0 0.0
    %3109 = vmatmul.mubr.f32.gmra.mrb[0].mxu0 %v3043
    %v3110 = vpop.f32.mrb[0].mxu0
    %v3111 = vadd.f32 0.0, %v3110
    %v3112 = vpop.f32.mrb[0].mxu0
    %v3113 = vadd.f32 0.0, %v3112
    %3114 = vdwg.mxu0
    %3115 = vmatprep.subr.mxu0 %v2224
    %3116 = vmatpush1.msra.mxu0 %v2223
    %3117 = vmatprep.subr.mxu0 %v2228
    %3118 = vmatpush1.msra.mxu0 %v2227
    %3119 = vmatprep.subr.mxu0 %v2232
    %3120 = vmatpush1.msra.mxu0 %v2231
    %3121 = vmatprep.subr.mxu0 %v2236
    %3122 = vmatpush1.msra.mxu0 %v2235
    %3123 = vmatprep.subr.mxu0 %v2240
    %3124 = vmatpush1.msra.mxu0 %v2239
    %3125 = vmatprep.subr.mxu0 %v2244
    %3126 = vmatpush1.msra.mxu0 %v2243
    %3127 = vmatprep.subr.mxu0 %v2248
    %3128 = vmatpush1.msra.mxu0 %v2247
    %3129 = vmatprep.subr.mxu0 %v2252
    %3130 = vmatpush1.msra.mxu0 %v2251
    %3131 = vmatprep.subr.mxu0 %v2256
    %3132 = vmatpush1.msra.mxu0 %v2255
    %3133 = vmatprep.subr.mxu0 %v2260
    %3134 = vmatpush1.msra.mxu0 %v2259
    %3135 = vmatprep.subr.mxu0 %v2264
    %3136 = vmatpush1.msra.mxu0 %v2263
    %3137 = vmatprep.subr.mxu0 %v2268
    %3138 = vmatpush1.msra.mxu0 %v2267
    %3139 = vmatprep.subr.mxu0 %v2272
    %3140 = vmatpush1.msra.mxu0 %v2271
    %3141 = vmatprep.subr.mxu0 %v2276
    %3142 = vmatpush1.msra.mxu0 %v2275
    %3143 = vmatprep.subr.mxu0 %v2280
    %3144 = vmatpush1.msra.mxu0 %v2279
    %3145 = vmatprep.subr.mxu0 %v2284
    %3146 = vmatpush1.msra.mxu0 %v2283
    %3147 = vmatprep.subr.mxu0 0.0
    %3148 = vmatpush1.msra.mxu0 0.0
    %3149 = vmatprep.subr.mxu0 0.0
    %3150 = vmatpush1.msra.mxu0 0.0
    %3151 = vmatprep.subr.mxu0 0.0
    %3152 = vmatpush1.msra.mxu0 0.0
    %3153 = vmatprep.subr.mxu0 0.0
    %3154 = vmatpush1.msra.mxu0 0.0
    %3155 = vmatprep.subr.mxu0 0.0
    %3156 = vmatpush1.msra.mxu0 0.0
    %3157 = vmatprep.subr.mxu0 0.0
    %3158 = vmatpush1.msra.mxu0 0.0
    %3159 = vmatprep.subr.mxu0 0.0
    %3160 = vmatpush1.msra.mxu0 0.0
    %3161 = vmatprep.subr.mxu0 0.0
    %3162 = vmatpush1.msra.mxu0 0.0
    %3163 = vmatprep.subr.mxu0 0.0
    %3164 = vmatpush1.msra.mxu0 0.0
    %3165 = vmatprep.subr.mxu0 0.0
    %3166 = vmatpush1.msra.mxu0 0.0
    %3167 = vmatprep.subr.mxu0 0.0
    %3168 = vmatpush1.msra.mxu0 0.0
    %3169 = vmatprep.subr.mxu0 0.0
    %3170 = vmatpush1.msra.mxu0 0.0
    %3171 = vmatprep.subr.mxu0 0.0
    %3172 = vmatpush1.msra.mxu0 0.0
    %3173 = vmatprep.subr.mxu0 0.0
    %3174 = vmatpush1.msra.mxu0 0.0
    %3175 = vmatprep.subr.mxu0 0.0
    %3176 = vmatpush1.msra.mxu0 0.0
    %3177 = vmatprep.subr.mxu0 0.0
    %3178 = vmatpush1.msra.mxu0 0.0
    %3179 = vmatprep.mubr.f32.mxu0 0.0
    %3180 = vmatmul.mubr.f32.gmra.mrb[0].mxu0 %v3043
    %v3181 = vpop.f32.mrb[0].mxu0
    %v3182 = vadd.f32 0.0, %v3181
    %v3183 = vpop.f32.mrb[0].mxu0
    %v3184 = vadd.f32 0.0, %v3183
    %3185 = vdwg.mxu0
    %v3186 = vadd.f32 %v2393, %v3111
    %v3187 = vadd.f32 %v2395, %v3113
    %v3188 = vadd.f32 %v2506, %v3182
    %v3189 = vadd.f32 %v2508, %v3184
    %v3190 = vxor.u32 %v3186, 2147483648
    %v3191 = vxor.u32 %v3187, 2147483648
    %v3192 = vxor.u32 %v3188, 2147483648
    %v3193 = vmul.f32 %v3190, 1.442695
    %v3194 = vpow.pop %v3193
    %v3195 = vmul.f32 %v3191, 1.442695
    %v3196 = vpow.pop %v3195
    %v3197 = vmul.f32 %v3192, 1.442695
    %v3198 = vpow.pop %v3197
    %v3199 = vadd.f32 %v3194, 1.0
    %v3200 = vadd.f32 %v3196, 1.0
    %v3201 = vadd.f32 %v3198, 1.0
    %v3202 = vrcp.pop %v3199
    %v3203 = vmul.f32 1.0, %v3202
    %v3204 = vrcp.pop %v3200
    %v3205 = vmul.f32 1.0, %v3204
    %v3206 = vrcp.pop %v3201
    %v3207 = vmul.f32 1.0, %v3206
    %v3208 = vtanh.pop %v3189
    %v3209 = vmul.f32 %v3205, %v3041
    %v3210 = vmul.f32 %v3203, %v3208
    %v3211 = vadd.f32 %v3209, %v3210
    %v3212 = vtanh.pop %v3211
    %v3213 = vmul.f32 %v3207, %v3212
    %3214 = vmatprep.subr.mxu0 %v2222
    %3215 = vmatpush1.msra.mxu0 %v2221
    %3216 = vmatprep.subr.mxu0 %v2226
    %3217 = vmatpush1.msra.mxu0 %v2225
    %3218 = vmatprep.subr.mxu0 %v2230
    %3219 = vmatpush1.msra.mxu0 %v2229
    %3220 = vmatprep.subr.mxu0 %v2234
    %3221 = vmatpush1.msra.mxu0 %v2233
    %3222 = vmatprep.subr.mxu0 %v2238
    %3223 = vmatpush1.msra.mxu0 %v2237
    %3224 = vmatprep.subr.mxu0 %v2242
    %3225 = vmatpush1.msra.mxu0 %v2241
    %3226 = vmatprep.subr.mxu0 %v2246
    %3227 = vmatpush1.msra.mxu0 %v2245
    %3228 = vmatprep.subr.mxu0 %v2250
    %3229 = vmatpush1.msra.mxu0 %v2249
    %3230 = vmatprep.subr.mxu0 %v2254
    %3231 = vmatpush1.msra.mxu0 %v2253
    %3232 = vmatprep.subr.mxu0 %v2258
    %3233 = vmatpush1.msra.mxu0 %v2257
    %3234 = vmatprep.subr.mxu0 %v2262
    %3235 = vmatpush1.msra.mxu0 %v2261
    %3236 = vmatprep.subr.mxu0 %v2266
    %3237 = vmatpush1.msra.mxu0 %v2265
    %3238 = vmatprep.subr.mxu0 %v2270
    %3239 = vmatpush1.msra.mxu0 %v2269
    %3240 = vmatprep.subr.mxu0 %v2274
    %3241 = vmatpush1.msra.mxu0 %v2273
    %3242 = vmatprep.subr.mxu0 %v2278
    %3243 = vmatpush1.msra.mxu0 %v2277
    %3244 = vmatprep.subr.mxu0 %v2282
    %3245 = vmatpush1.msra.mxu0 %v2281
    %3246 = vmatprep.subr.mxu0 0.0
    %3247 = vmatpush1.msra.mxu0 0.0
    %3248 = vmatprep.subr.mxu0 0.0
    %3249 = vmatpush1.msra.mxu0 0.0
    %3250 = vmatprep.subr.mxu0 0.0
    %3251 = vmatpush1.msra.mxu0 0.0
    %3252 = vmatprep.subr.mxu0 0.0
    %3253 = vmatpush1.msra.mxu0 0.0
    %3254 = vmatprep.subr.mxu0 0.0
    %3255 = vmatpush1.msra.mxu0 0.0
    %3256 = vmatprep.subr.mxu0 0.0
    %3257 = vmatpush1.msra.mxu0 0.0
    %3258 = vmatprep.subr.mxu0 0.0
    %3259 = vmatpush1.msra.mxu0 0.0
    %3260 = vmatprep.subr.mxu0 0.0
    %3261 = vmatpush1.msra.mxu0 0.0
    %3262 = vmatprep.subr.mxu0 0.0
    %3263 = vmatpush1.msra.mxu0 0.0
    %3264 = vmatprep.subr.mxu0 0.0
    %3265 = vmatpush1.msra.mxu0 0.0
    %3266 = vmatprep.subr.mxu0 0.0
    %3267 = vmatpush1.msra.mxu0 0.0
    %3268 = vmatprep.subr.mxu0 0.0
    %3269 = vmatpush1.msra.mxu0 0.0
    %3270 = vmatprep.subr.mxu0 0.0
    %3271 = vmatpush1.msra.mxu0 0.0
    %3272 = vmatprep.subr.mxu0 0.0
    %3273 = vmatpush1.msra.mxu0 0.0
    %3274 = vmatprep.subr.mxu0 0.0
    %3275 = vmatpush1.msra.mxu0 0.0
    %3276 = vmatprep.subr.mxu0 0.0
    %3277 = vmatpush1.msra.mxu0 0.0
    %3278 = vmatprep.mubr.f32.mxu0 0.0
    %3279 = vmatmul.mubr.f32.gmra.mrb[0].mxu0 %v3213
    %v3280 = vpop.f32.mrb[0].mxu0
    %v3281 = vadd.f32 0.0, %v3280
    %v3282 = vpop.f32.mrb[0].mxu0
    %v3283 = vadd.f32 0.0, %v3282
    %3284 = vdwg.mxu0
    %3285 = vmatprep.subr.mxu0 %v2224
    %3286 = vmatpush1.msra.mxu0 %v2223
    %3287 = vmatprep.subr.mxu0 %v2228
    %3288 = vmatpush1.msra.mxu0 %v2227
    %3289 = vmatprep.subr.mxu0 %v2232
    %3290 = vmatpush1.msra.mxu0 %v2231
    %3291 = vmatprep.subr.mxu0 %v2236
    %3292 = vmatpush1.msra.mxu0 %v2235
    %3293 = vmatprep.subr.mxu0 %v2240
    %3294 = vmatpush1.msra.mxu0 %v2239
    %3295 = vmatprep.subr.mxu0 %v2244
    %3296 = vmatpush1.msra.mxu0 %v2243
    %3297 = vmatprep.subr.mxu0 %v2248
    %3298 = vmatpush1.msra.mxu0 %v2247
    %3299 = vmatprep.subr.mxu0 %v2252
    %3300 = vmatpush1.msra.mxu0 %v2251
    %3301 = vmatprep.subr.mxu0 %v2256
    %3302 = vmatpush1.msra.mxu0 %v2255
    %3303 = vmatprep.subr.mxu0 %v2260
    %3304 = vmatpush1.msra.mxu0 %v2259
    %3305 = vmatprep.subr.mxu0 %v2264
    %3306 = vmatpush1.msra.mxu0 %v2263
    %3307 = vmatprep.subr.mxu0 %v2268
    %3308 = vmatpush1.msra.mxu0 %v2267
    %3309 = vmatprep.subr.mxu0 %v2272
    %3310 = vmatpush1.msra.mxu0 %v2271
    %3311 = vmatprep.subr.mxu0 %v2276
    %3312 = vmatpush1.msra.mxu0 %v2275
    %3313 = vmatprep.subr.mxu0 %v2280
    %3314 = vmatpush1.msra.mxu0 %v2279
    %3315 = vmatprep.subr.mxu0 %v2284
    %3316 = vmatpush1.msra.mxu0 %v2283
    %3317 = vmatprep.subr.mxu0 0.0
    %3318 = vmatpush1.msra.mxu0 0.0
    %3319 = vmatprep.subr.mxu0 0.0
    %3320 = vmatpush1.msra.mxu0 0.0
    %3321 = vmatprep.subr.mxu0 0.0
    %3322 = vmatpush1.msra.mxu0 0.0
    %3323 = vmatprep.subr.mxu0 0.0
    %3324 = vmatpush1.msra.mxu0 0.0
    %3325 = vmatprep.subr.mxu0 0.0
    %3326 = vmatpush1.msra.mxu0 0.0
    %3327 = vmatprep.subr.mxu0 0.0
    %3328 = vmatpush1.msra.mxu0 0.0
    %3329 = vmatprep.subr.mxu0 0.0
    %3330 = vmatpush1.msra.mxu0 0.0
    %3331 = vmatprep.subr.mxu0 0.0
    %3332 = vmatpush1.msra.mxu0 0.0
    %3333 = vmatprep.subr.mxu0 0.0
    %3334 = vmatpush1.msra.mxu0 0.0
    %3335 = vmatprep.subr.mxu0 0.0
    %3336 = vmatpush1.msra.mxu0 0.0
    %3337 = vmatprep.subr.mxu0 0.0
    %3338 = vmatpush1.msra.mxu0 0.0
    %3339 = vmatprep.subr.mxu0 0.0
    %3340 = vmatpush1.msra.mxu0 0.0
    %3341 = vmatprep.subr.mxu0 0.0
    %3342 = vmatpush1.msra.mxu0 0.0
    %3343 = vmatprep.subr.mxu0 0.0
    %3344 = vmatpush1.msra.mxu0 0.0
    %3345 = vmatprep.subr.mxu0 0.0
    %3346 = vmatpush1.msra.mxu0 0.0
    %3347 = vmatprep.subr.mxu0 0.0
    %3348 = vmatpush1.msra.mxu0 0.0
    %3349 = vmatprep.mubr.f32.mxu0 0.0
    %3350 = vmatmul.mubr.f32.gmra.mrb[0].mxu0 %v3213
    %v3351 = vpop.f32.mrb[0].mxu0
    %v3352 = vadd.f32 0.0, %v3351
    %v3353 = vpop.f32.mrb[0].mxu0
    %v3354 = vadd.f32 0.0, %v3353
    %3355 = vdwg.mxu0
    %v3356 = vadd.f32 %v2399, %v3281
    %v3357 = vadd.f32 %v2401, %v3283
    %v3358 = vadd.f32 %v2512, %v3352
    %v3359 = vadd.f32 %v2514, %v3354
    %v3360 = vxor.u32 %v3356, 2147483648
    %v3361 = vxor.u32 %v3357, 2147483648
    %v3362 = vxor.u32 %v3358, 2147483648
    %v3363 = vmul.f32 %v3360, 1.442695
    %v3364 = vpow.pop %v3363
    %v3365 = vmul.f32 %v3361, 1.442695
    %v3366 = vpow.pop %v3365
    %v3367 = vmul.f32 %v3362, 1.442695
    %v3368 = vpow.pop %v3367
    %v3369 = vadd.f32 %v3364, 1.0
    %v3370 = vadd.f32 %v3366, 1.0
    %v3371 = vadd.f32 %v3368, 1.0
    %v3372 = vrcp.pop %v3369
    %v3373 = vmul.f32 1.0, %v3372
    %v3374 = vrcp.pop %v3370
    %v3375 = vmul.f32 1.0, %v3374
    %v3376 = vrcp.pop %v3371
    %v3377 = vmul.f32 1.0, %v3376
    %v3378 = vtanh.pop %v3359
    %v3379 = vmul.f32 %v3375, %v3211
    %v3380 = vmul.f32 %v3373, %v3378
    %v3381 = vadd.f32 %v3379, %v3380
    %v3382 = vtanh.pop %v3381
    %v3383 = vmul.f32 %v3377, %v3382
    %3384 = vmatprep.subr.mxu0 %v2222
    %3385 = vmatpush1.msra.mxu0 %v2221
    %3386 = vmatprep.subr.mxu0 %v2226
    %3387 = vmatpush1.msra.mxu0 %v2225
    %3388 = vmatprep.subr.mxu0 %v2230
    %3389 = vmatpush1.msra.mxu0 %v2229
    %3390 = vmatprep.subr.mxu0 %v2234
    %3391 = vmatpush1.msra.mxu0 %v2233
    %3392 = vmatprep.subr.mxu0 %v2238
    %3393 = vmatpush1.msra.mxu0 %v2237
    %3394 = vmatprep.subr.mxu0 %v2242
    %3395 = vmatpush1.msra.mxu0 %v2241
    %3396 = vmatprep.subr.mxu0 %v2246
    %3397 = vmatpush1.msra.mxu0 %v2245
    %3398 = vmatprep.subr.mxu0 %v2250
    %3399 = vmatpush1.msra.mxu0 %v2249
    %3400 = vmatprep.subr.mxu0 %v2254
    %3401 = vmatpush1.msra.mxu0 %v2253
    %3402 = vmatprep.subr.mxu0 %v2258
    %3403 = vmatpush1.msra.mxu0 %v2257
    %3404 = vmatprep.subr.mxu0 %v2262
    %3405 = vmatpush1.msra.mxu0 %v2261
    %3406 = vmatprep.subr.mxu0 %v2266
    %3407 = vmatpush1.msra.mxu0 %v2265
    %3408 = vmatprep.subr.mxu0 %v2270
    %3409 = vmatpush1.msra.mxu0 %v2269
    %3410 = vmatprep.subr.mxu0 %v2274
    %3411 = vmatpush1.msra.mxu0 %v2273
    %3412 = vmatprep.subr.mxu0 %v2278
    %3413 = vmatpush1.msra.mxu0 %v2277
    %3414 = vmatprep.subr.mxu0 %v2282
    %3415 = vmatpush1.msra.mxu0 %v2281
    %3416 = vmatprep.subr.mxu0 0.0
    %3417 = vmatpush1.msra.mxu0 0.0
    %3418 = vmatprep.subr.mxu0 0.0
    %3419 = vmatpush1.msra.mxu0 0.0
    %3420 = vmatprep.subr.mxu0 0.0
    %3421 = vmatpush1.msra.mxu0 0.0
    %3422 = vmatprep.subr.mxu0 0.0
    %3423 = vmatpush1.msra.mxu0 0.0
    %3424 = vmatprep.subr.mxu0 0.0
    %3425 = vmatpush1.msra.mxu0 0.0
    %3426 = vmatprep.subr.mxu0 0.0
    %3427 = vmatpush1.msra.mxu0 0.0
    %3428 = vmatprep.subr.mxu0 0.0
    %3429 = vmatpush1.msra.mxu0 0.0
    %3430 = vmatprep.subr.mxu0 0.0
    %3431 = vmatpush1.msra.mxu0 0.0
    %3432 = vmatprep.subr.mxu0 0.0
    %3433 = vmatpush1.msra.mxu0 0.0
    %3434 = vmatprep.subr.mxu0 0.0
    %3435 = vmatpush1.msra.mxu0 0.0
    %3436 = vmatprep.subr.mxu0 0.0
    %3437 = vmatpush1.msra.mxu0 0.0
    %3438 = vmatprep.subr.mxu0 0.0
    %3439 = vmatpush1.msra.mxu0 0.0
    %3440 = vmatprep.subr.mxu0 0.0
    %3441 = vmatpush1.msra.mxu0 0.0
    %3442 = vmatprep.subr.mxu0 0.0
    %3443 = vmatpush1.msra.mxu0 0.0
    %3444 = vmatprep.subr.mxu0 0.0
    %3445 = vmatpush1.msra.mxu0 0.0
    %3446 = vmatprep.subr.mxu0 0.0
    %3447 = vmatpush1.msra.mxu0 0.0
    %3448 = vmatprep.mubr.f32.mxu0 0.0
    %3449 = vmatmul.mubr.f32.gmra.mrb[0].mxu0 %v3383
    %v3450 = vpop.f32.mrb[0].mxu0
    %v3451 = vadd.f32 0.0, %v3450
    %v3452 = vpop.f32.mrb[0].mxu0
    %v3453 = vadd.f32 0.0, %v3452
    %3454 = vdwg.mxu0
    %3455 = vmatprep.subr.mxu0 %v2224
    %3456 = vmatpush1.msra.mxu0 %v2223
    %3457 = vmatprep.subr.mxu0 %v2228
    %3458 = vmatpush1.msra.mxu0 %v2227
    %3459 = vmatprep.subr.mxu0 %v2232
    %3460 = vmatpush1.msra.mxu0 %v2231
    %3461 = vmatprep.subr.mxu0 %v2236
    %3462 = vmatpush1.msra.mxu0 %v2235
    %3463 = vmatprep.subr.mxu0 %v2240
    %3464 = vmatpush1.msra.mxu0 %v2239
    %3465 = vmatprep.subr.mxu0 %v2244
    %3466 = vmatpush1.msra.mxu0 %v2243
    %3467 = vmatprep.subr.mxu0 %v2248
    %3468 = vmatpush1.msra.mxu0 %v2247
    %3469 = vmatprep.subr.mxu0 %v2252
    %3470 = vmatpush1.msra.mxu0 %v2251
    %3471 = vmatprep.subr.mxu0 %v2256
    %3472 = vmatpush1.msra.mxu0 %v2255
    %3473 = vmatprep.subr.mxu0 %v2260
    %3474 = vmatpush1.msra.mxu0 %v2259
    %3475 = vmatprep.subr.mxu0 %v2264
    %3476 = vmatpush1.msra.mxu0 %v2263
    %3477 = vmatprep.subr.mxu0 %v2268
    %3478 = vmatpush1.msra.mxu0 %v2267
    %3479 = vmatprep.subr.mxu0 %v2272
    %3480 = vmatpush1.msra.mxu0 %v2271
    %3481 = vmatprep.subr.mxu0 %v2276
    %3482 = vmatpush1.msra.mxu0 %v2275
    %3483 = vmatprep.subr.mxu0 %v2280
    %3484 = vmatpush1.msra.mxu0 %v2279
    %3485 = vmatprep.subr.mxu0 %v2284
    %3486 = vmatpush1.msra.mxu0 %v2283
    %3487 = vmatprep.subr.mxu0 0.0
    %3488 = vmatpush1.msra.mxu0 0.0
    %3489 = vmatprep.subr.mxu0 0.0
    %3490 = vmatpush1.msra.mxu0 0.0
    %3491 = vmatprep.subr.mxu0 0.0
    %3492 = vmatpush1.msra.mxu0 0.0
    %3493 = vmatprep.subr.mxu0 0.0
    %3494 = vmatpush1.msra.mxu0 0.0
    %3495 = vmatprep.subr.mxu0 0.0
    %3496 = vmatpush1.msra.mxu0 0.0
    %3497 = vmatprep.subr.mxu0 0.0
    %3498 = vmatpush1.msra.mxu0 0.0
    %3499 = vmatprep.subr.mxu0 0.0
    %3500 = vmatpush1.msra.mxu0 0.0
    %3501 = vmatprep.subr.mxu0 0.0
    %3502 = vmatpush1.msra.mxu0 0.0
    %3503 = vmatprep.subr.mxu0 0.0
    %3504 = vmatpush1.msra.mxu0 0.0
    %3505 = vmatprep.subr.mxu0 0.0
    %3506 = vmatpush1.msra.mxu0 0.0
    %3507 = vmatprep.subr.mxu0 0.0
    %3508 = vmatpush1.msra.mxu0 0.0
    %3509 = vmatprep.subr.mxu0 0.0
    %3510 = vmatpush1.msra.mxu0 0.0
    %3511 = vmatprep.subr.mxu0 0.0
    %3512 = vmatpush1.msra.mxu0 0.0
    %3513 = vmatprep.subr.mxu0 0.0
    %3514 = vmatpush1.msra.mxu0 0.0
    %3515 = vmatprep.subr.mxu0 0.0
    %3516 = vmatpush1.msra.mxu0 0.0
    %3517 = vmatprep.subr.mxu0 0.0
    %3518 = vmatpush1.msra.mxu0 0.0
    %3519 = vmatprep.mubr.f32.mxu0 0.0
    %3520 = vmatmul.mubr.f32.gmra.mrb[0].mxu0 %v3383
    %v3521 = vpop.f32.mrb[0].mxu0
    %v3522 = vadd.f32 0.0, %v3521
    %v3523 = vpop.f32.mrb[0].mxu0
    %v3524 = vadd.f32 0.0, %v3523
    %3525 = vdwg.mxu0
    %v3526 = vadd.f32 %v2405, %v3451
    %v3527 = vadd.f32 %v2407, %v3453
    %v3528 = vadd.f32 %v2518, %v3522
    %v3529 = vadd.f32 %v2520, %v3524
    %v3530 = vxor.u32 %v3526, 2147483648
    %v3531 = vxor.u32 %v3527, 2147483648
    %v3532 = vxor.u32 %v3528, 2147483648
    %v3533 = vmul.f32 %v3530, 1.442695
    %v3534 = vpow.pop %v3533
    %v3535 = vmul.f32 %v3531, 1.442695
    %v3536 = vpow.pop %v3535
    %v3537 = vmul.f32 %v3532, 1.442695
    %v3538 = vpow.pop %v3537
    %v3539 = vadd.f32 %v3534, 1.0
    %v3540 = vadd.f32 %v3536, 1.0
    %v3541 = vadd.f32 %v3538, 1.0
    %v3542 = vrcp.pop %v3539
    %v3543 = vmul.f32 1.0, %v3542
    %v3544 = vrcp.pop %v3540
    %v3545 = vmul.f32 1.0, %v3544
    %v3546 = vrcp.pop %v3541
    %v3547 = vmul.f32 1.0, %v3546
    %v3548 = vtanh.pop %v3529
    %v3549 = vmul.f32 %v3545, %v3381
    %v3550 = vmul.f32 %v3543, %v3548
    %v3551 = vadd.f32 %v3549, %v3550
    %v3552 = vtanh.pop %v3551
    %v3553 = vmul.f32 %v3547, %v3552
    %3554 = vmatprep.subr.mxu0 %v2222
    %3555 = vmatpush1.msra.mxu0 %v2221
    %3556 = vmatprep.subr.mxu0 %v2226
    %3557 = vmatpush1.msra.mxu0 %v2225
    %3558 = vmatprep.subr.mxu0 %v2230
    %3559 = vmatpush1.msra.mxu0 %v2229
    %3560 = vmatprep.subr.mxu0 %v2234
    %3561 = vmatpush1.msra.mxu0 %v2233
    %3562 = vmatprep.subr.mxu0 %v2238
    %3563 = vmatpush1.msra.mxu0 %v2237
    %3564 = vmatprep.subr.mxu0 %v2242
    %3565 = vmatpush1.msra.mxu0 %v2241
    %3566 = vmatprep.subr.mxu0 %v2246
    %3567 = vmatpush1.msra.mxu0 %v2245
    %3568 = vmatprep.subr.mxu0 %v2250
    %3569 = vmatpush1.msra.mxu0 %v2249
    %3570 = vmatprep.subr.mxu0 %v2254
    %3571 = vmatpush1.msra.mxu0 %v2253
    %3572 = vmatprep.subr.mxu0 %v2258
    %3573 = vmatpush1.msra.mxu0 %v2257
    %3574 = vmatprep.subr.mxu0 %v2262
    %3575 = vmatpush1.msra.mxu0 %v2261
    %3576 = vmatprep.subr.mxu0 %v2266
    %3577 = vmatpush1.msra.mxu0 %v2265
    %3578 = vmatprep.subr.mxu0 %v2270
    %3579 = vmatpush1.msra.mxu0 %v2269
    %3580 = vmatprep.subr.mxu0 %v2274
    %3581 = vmatpush1.msra.mxu0 %v2273
    %3582 = vmatprep.subr.mxu0 %v2278
    %3583 = vmatpush1.msra.mxu0 %v2277
    %3584 = vmatprep.subr.mxu0 %v2282
    %3585 = vmatpush1.msra.mxu0 %v2281
    %3586 = vmatprep.subr.mxu0 0.0
    %3587 = vmatpush1.msra.mxu0 0.0
    %3588 = vmatprep.subr.mxu0 0.0
    %3589 = vmatpush1.msra.mxu0 0.0
    %3590 = vmatprep.subr.mxu0 0.0
    %3591 = vmatpush1.msra.mxu0 0.0
    %3592 = vmatprep.subr.mxu0 0.0
    %3593 = vmatpush1.msra.mxu0 0.0
    %3594 = vmatprep.subr.mxu0 0.0
    %3595 = vmatpush1.msra.mxu0 0.0
    %3596 = vmatprep.subr.mxu0 0.0
    %3597 = vmatpush1.msra.mxu0 0.0
    %3598 = vmatprep.subr.mxu0 0.0
    %3599 = vmatpush1.msra.mxu0 0.0
    %3600 = vmatprep.subr.mxu0 0.0
    %3601 = vmatpush1.msra.mxu0 0.0
    %3602 = vmatprep.subr.mxu0 0.0
    %3603 = vmatpush1.msra.mxu0 0.0
    %3604 = vmatprep.subr.mxu0 0.0
    %3605 = vmatpush1.msra.mxu0 0.0
    %3606 = vmatprep.subr.mxu0 0.0
    %3607 = vmatpush1.msra.mxu0 0.0
    %3608 = vmatprep.subr.mxu0 0.0
    %3609 = vmatpush1.msra.mxu0 0.0
    %3610 = vmatprep.subr.mxu0 0.0
    %3611 = vmatpush1.msra.mxu0 0.0
    %3612 = vmatprep.subr.mxu0 0.0
    %3613 = vmatpush1.msra.mxu0 0.0
    %3614 = vmatprep.subr.mxu0 0.0
    %3615 = vmatpush1.msra.mxu0 0.0
    %3616 = vmatprep.subr.mxu0 0.0
    %3617 = vmatpush1.msra.mxu0 0.0
    %3618 = vmatprep.mubr.f32.mxu0 0.0
    %3619 = vmatmul.mubr.f32.gmra.mrb[0].mxu0 %v3553
    %v3620 = vpop.f32.mrb[0].mxu0
    %v3621 = vadd.f32 0.0, %v3620
    %v3622 = vpop.f32.mrb[0].mxu0
    %v3623 = vadd.f32 0.0, %v3622
    %3624 = vdwg.mxu0
    %3625 = vmatprep.subr.mxu0 %v2224
    %3626 = vmatpush1.msra.mxu0 %v2223
    %3627 = vmatprep.subr.mxu0 %v2228
    %3628 = vmatpush1.msra.mxu0 %v2227
    %3629 = vmatprep.subr.mxu0 %v2232
    %3630 = vmatpush1.msra.mxu0 %v2231
    %3631 = vmatprep.subr.mxu0 %v2236
    %3632 = vmatpush1.msra.mxu0 %v2235
    %3633 = vmatprep.subr.mxu0 %v2240
    %3634 = vmatpush1.msra.mxu0 %v2239
    %3635 = vmatprep.subr.mxu0 %v2244
    %3636 = vmatpush1.msra.mxu0 %v2243
    %3637 = vmatprep.subr.mxu0 %v2248
    %3638 = vmatpush1.msra.mxu0 %v2247
    %3639 = vmatprep.subr.mxu0 %v2252
    %3640 = vmatpush1.msra.mxu0 %v2251
    %3641 = vmatprep.subr.mxu0 %v2256
    %3642 = vmatpush1.msra.mxu0 %v2255
    %3643 = vmatprep.subr.mxu0 %v2260
    %3644 = vmatpush1.msra.mxu0 %v2259
    %3645 = vmatprep.subr.mxu0 %v2264
    %3646 = vmatpush1.msra.mxu0 %v2263
    %3647 = vmatprep.subr.mxu0 %v2268
    %3648 = vmatpush1.msra.mxu0 %v2267
    %3649 = vmatprep.subr.mxu0 %v2272
    %3650 = vmatpush1.msra.mxu0 %v2271
    %3651 = vmatprep.subr.mxu0 %v2276
    %3652 = vmatpush1.msra.mxu0 %v2275
    %3653 = vmatprep.subr.mxu0 %v2280
    %3654 = vmatpush1.msra.mxu0 %v2279
    %3655 = vmatprep.subr.mxu0 %v2284
    %3656 = vmatpush1.msra.mxu0 %v2283
    %3657 = vmatprep.subr.mxu0 0.0
    %3658 = vmatpush1.msra.mxu0 0.0
    %3659 = vmatprep.subr.mxu0 0.0
    %3660 = vmatpush1.msra.mxu0 0.0
    %3661 = vmatprep.subr.mxu0 0.0
    %3662 = vmatpush1.msra.mxu0 0.0
    %3663 = vmatprep.subr.mxu0 0.0
    %3664 = vmatpush1.msra.mxu0 0.0
    %3665 = vmatprep.subr.mxu0 0.0
    %3666 = vmatpush1.msra.mxu0 0.0
    %3667 = vmatprep.subr.mxu0 0.0
    %3668 = vmatpush1.msra.mxu0 0.0
    %3669 = vmatprep.subr.mxu0 0.0
    %3670 = vmatpush1.msra.mxu0 0.0
    %3671 = vmatprep.subr.mxu0 0.0
    %3672 = vmatpush1.msra.mxu0 0.0
    %3673 = vmatprep.subr.mxu0 0.0
    %3674 = vmatpush1.msra.mxu0 0.0
    %3675 = vmatprep.subr.mxu0 0.0
    %3676 = vmatpush1.msra.mxu0 0.0
    %3677 = vmatprep.subr.mxu0 0.0
    %3678 = vmatpush1.msra.mxu0 0.0
    %3679 = vmatprep.subr.mxu0 0.0
    %3680 = vmatpush1.msra.mxu0 0.0
    %3681 = vmatprep.subr.mxu0 0.0
    %3682 = vmatpush1.msra.mxu0 0.0
    %3683 = vmatprep.subr.mxu0 0.0
    %3684 = vmatpush1.msra.mxu0 0.0
    %3685 = vmatprep.subr.mxu0 0.0
    %3686 = vmatpush1.msra.mxu0 0.0
    %3687 = vmatprep.subr.mxu0 0.0
    %3688 = vmatpush1.msra.mxu0 0.0
    %3689 = vmatprep.mubr.f32.mxu0 0.0
    %3690 = vmatmul.mubr.f32.gmra.mrb[0].mxu0 %v3553
    %v3691 = vpop.f32.mrb[0].mxu0
    %v3692 = vadd.f32 0.0, %v3691
    %v3693 = vpop.f32.mrb[0].mxu0
    %v3694 = vadd.f32 0.0, %v3693
    %3695 = vdwg.mxu0
    %v3696 = vadd.f32 %v2411, %v3621
    %v3697 = vadd.f32 %v2413, %v3623
    %v3698 = vadd.f32 %v2524, %v3692
    %v3699 = vadd.f32 %v2526, %v3694
    %v3700 = vxor.u32 %v3696, 2147483648
    %v3701 = vxor.u32 %v3697, 2147483648
    %v3702 = vxor.u32 %v3698, 2147483648
    %v3703 = vmul.f32 %v3700, 1.442695
    %v3704 = vpow.pop %v3703
    %v3705 = vmul.f32 %v3701, 1.442695
    %v3706 = vpow.pop %v3705
    %v3707 = vmul.f32 %v3702, 1.442695
    %v3708 = vpow.pop %v3707
    %v3709 = vadd.f32 %v3704, 1.0
    %v3710 = vadd.f32 %v3706, 1.0
    %v3711 = vadd.f32 %v3708, 1.0
    %v3712 = vrcp.pop %v3709
    %v3713 = vmul.f32 1.0, %v3712
    %v3714 = vrcp.pop %v3710
    %v3715 = vmul.f32 1.0, %v3714
    %v3716 = vrcp.pop %v3711
    %v3717 = vmul.f32 1.0, %v3716
    %v3718 = vtanh.pop %v3699
    %v3719 = vmul.f32 %v3715, %v3551
    %v3720 = vmul.f32 %v3713, %v3718
    %v3721 = vadd.f32 %v3719, %v3720
    %v3722 = vtanh.pop %v3721
    %v3723 = vmul.f32 %v3717, %v3722
    %3724 = vmatprep.subr.mxu0 %v2222
    %3725 = vmatpush1.msra.mxu0 %v2221
    %3726 = vmatprep.subr.mxu0 %v2226
    %3727 = vmatpush1.msra.mxu0 %v2225
    %3728 = vmatprep.subr.mxu0 %v2230
    %3729 = vmatpush1.msra.mxu0 %v2229
    %3730 = vmatprep.subr.mxu0 %v2234
    %3731 = vmatpush1.msra.mxu0 %v2233
    %3732 = vmatprep.subr.mxu0 %v2238
    %3733 = vmatpush1.msra.mxu0 %v2237
    %3734 = vmatprep.subr.mxu0 %v2242
    %3735 = vmatpush1.msra.mxu0 %v2241
    %3736 = vmatprep.subr.mxu0 %v2246
    %3737 = vmatpush1.msra.mxu0 %v2245
    %3738 = vmatprep.subr.mxu0 %v2250
    %3739 = vmatpush1.msra.mxu0 %v2249
    %3740 = vmatprep.subr.mxu0 %v2254
    %3741 = vmatpush1.msra.mxu0 %v2253
    %3742 = vmatprep.subr.mxu0 %v2258
    %3743 = vmatpush1.msra.mxu0 %v2257
    %3744 = vmatprep.subr.mxu0 %v2262
    %3745 = vmatpush1.msra.mxu0 %v2261
    %3746 = vmatprep.subr.mxu0 %v2266
    %3747 = vmatpush1.msra.mxu0 %v2265
    %3748 = vmatprep.subr.mxu0 %v2270
    %3749 = vmatpush1.msra.mxu0 %v2269
    %3750 = vmatprep.subr.mxu0 %v2274
    %3751 = vmatpush1.msra.mxu0 %v2273
    %3752 = vmatprep.subr.mxu0 %v2278
    %3753 = vmatpush1.msra.mxu0 %v2277
    %3754 = vmatprep.subr.mxu0 %v2282
    %3755 = vmatpush1.msra.mxu0 %v2281
    %3756 = vmatprep.subr.mxu0 0.0
    %3757 = vmatpush1.msra.mxu0 0.0
    %3758 = vmatprep.subr.mxu0 0.0
    %3759 = vmatpush1.msra.mxu0 0.0
    %3760 = vmatprep.subr.mxu0 0.0
    %3761 = vmatpush1.msra.mxu0 0.0
    %3762 = vmatprep.subr.mxu0 0.0
    %3763 = vmatpush1.msra.mxu0 0.0
    %3764 = vmatprep.subr.mxu0 0.0
    %3765 = vmatpush1.msra.mxu0 0.0
    %3766 = vmatprep.subr.mxu0 0.0
    %3767 = vmatpush1.msra.mxu0 0.0
    %3768 = vmatprep.subr.mxu0 0.0
    %3769 = vmatpush1.msra.mxu0 0.0
    %3770 = vmatprep.subr.mxu0 0.0
    %3771 = vmatpush1.msra.mxu0 0.0
    %3772 = vmatprep.subr.mxu0 0.0
    %3773 = vmatpush1.msra.mxu0 0.0
    %3774 = vmatprep.subr.mxu0 0.0
    %3775 = vmatpush1.msra.mxu0 0.0
    %3776 = vmatprep.subr.mxu0 0.0
    %3777 = vmatpush1.msra.mxu0 0.0
    %3778 = vmatprep.subr.mxu0 0.0
    %3779 = vmatpush1.msra.mxu0 0.0
    %3780 = vmatprep.subr.mxu0 0.0
    %3781 = vmatpush1.msra.mxu0 0.0
    %3782 = vmatprep.subr.mxu0 0.0
    %3783 = vmatpush1.msra.mxu0 0.0
    %3784 = vmatprep.subr.mxu0 0.0
    %3785 = vmatpush1.msra.mxu0 0.0
    %3786 = vmatprep.subr.mxu0 0.0
    %3787 = vmatpush1.msra.mxu0 0.0
    %3788 = vmatprep.mubr.f32.mxu0 0.0
    %3789 = vmatmul.mubr.f32.gmra.mrb[0].mxu0 %v3723
    %v3790 = vpop.f32.mrb[0].mxu0
    %v3791 = vadd.f32 0.0, %v3790
    %v3792 = vpop.f32.mrb[0].mxu0
    %v3793 = vadd.f32 0.0, %v3792
    %3794 = vdwg.mxu0
    %3795 = vmatprep.subr.mxu0 %v2224
    %3796 = vmatpush1.msra.mxu0 %v2223
    %3797 = vmatprep.subr.mxu0 %v2228
    %3798 = vmatpush1.msra.mxu0 %v2227
    %3799 = vmatprep.subr.mxu0 %v2232
    %3800 = vmatpush1.msra.mxu0 %v2231
    %3801 = vmatprep.subr.mxu0 %v2236
    %3802 = vmatpush1.msra.mxu0 %v2235
    %3803 = vmatprep.subr.mxu0 %v2240
    %3804 = vmatpush1.msra.mxu0 %v2239
    %3805 = vmatprep.subr.mxu0 %v2244
    %3806 = vmatpush1.msra.mxu0 %v2243
    %3807 = vmatprep.subr.mxu0 %v2248
    %3808 = vmatpush1.msra.mxu0 %v2247
    %3809 = vmatprep.subr.mxu0 %v2252
    %3810 = vmatpush1.msra.mxu0 %v2251
    %3811 = vmatprep.subr.mxu0 %v2256
    %3812 = vmatpush1.msra.mxu0 %v2255
    %3813 = vmatprep.subr.mxu0 %v2260
    %3814 = vmatpush1.msra.mxu0 %v2259
    %3815 = vmatprep.subr.mxu0 %v2264
    %3816 = vmatpush1.msra.mxu0 %v2263
    %3817 = vmatprep.subr.mxu0 %v2268
    %3818 = vmatpush1.msra.mxu0 %v2267
    %3819 = vmatprep.subr.mxu0 %v2272
    %3820 = vmatpush1.msra.mxu0 %v2271
    %3821 = vmatprep.subr.mxu0 %v2276
    %3822 = vmatpush1.msra.mxu0 %v2275
    %3823 = vmatprep.subr.mxu0 %v2280
    %3824 = vmatpush1.msra.mxu0 %v2279
    %3825 = vmatprep.subr.mxu0 %v2284
    %3826 = vmatpush1.msra.mxu0 %v2283
    %3827 = vmatprep.subr.mxu0 0.0
    %3828 = vmatpush1.msra.mxu0 0.0
    %3829 = vmatprep.subr.mxu0 0.0
    %3830 = vmatpush1.msra.mxu0 0.0
    %3831 = vmatprep.subr.mxu0 0.0
    %3832 = vmatpush1.msra.mxu0 0.0
    %3833 = vmatprep.subr.mxu0 0.0
    %3834 = vmatpush1.msra.mxu0 0.0
    %3835 = vmatprep.subr.mxu0 0.0
    %3836 = vmatpush1.msra.mxu0 0.0
    %3837 = vmatprep.subr.mxu0 0.0
    %3838 = vmatpush1.msra.mxu0 0.0
    %3839 = vmatprep.subr.mxu0 0.0
    %3840 = vmatpush1.msra.mxu0 0.0
    %3841 = vmatprep.subr.mxu0 0.0
    %3842 = vmatpush1.msra.mxu0 0.0
    %3843 = vmatprep.subr.mxu0 0.0
    %3844 = vmatpush1.msra.mxu0 0.0
    %3845 = vmatprep.subr.mxu0 0.0
    %3846 = vmatpush1.msra.mxu0 0.0
    %3847 = vmatprep.subr.mxu0 0.0
    %3848 = vmatpush1.msra.mxu0 0.0
    %3849 = vmatprep.subr.mxu0 0.0
    %3850 = vmatpush1.msra.mxu0 0.0
    %3851 = vmatprep.subr.mxu0 0.0
    %3852 = vmatpush1.msra.mxu0 0.0
    %3853 = vmatprep.subr.mxu0 0.0
    %3854 = vmatpush1.msra.mxu0 0.0
    %3855 = vmatprep.subr.mxu0 0.0
    %3856 = vmatpush1.msra.mxu0 0.0
    %3857 = vmatprep.subr.mxu0 0.0
    %3858 = vmatpush1.msra.mxu0 0.0
    %3859 = vmatprep.mubr.f32.mxu0 0.0
    %3860 = vmatmul.mubr.f32.gmra.mrb[0].mxu0 %v3723
    %v3861 = vpop.f32.mrb[0].mxu0
    %v3862 = vadd.f32 0.0, %v3861
    %v3863 = vpop.f32.mrb[0].mxu0
    %v3864 = vadd.f32 0.0, %v3863
    %3865 = vdwg.mxu0
    %v3866 = vadd.f32 %v2417, %v3791
    %v3867 = vadd.f32 %v2419, %v3793
    %v3868 = vadd.f32 %v2530, %v3862
    %v3869 = vadd.f32 %v2532, %v3864
    %v3870 = vxor.u32 %v3866, 2147483648
    %v3871 = vxor.u32 %v3867, 2147483648
    %v3872 = vxor.u32 %v3868, 2147483648
    %v3873 = vmul.f32 %v3870, 1.442695
    %v3874 = vpow.pop %v3873
    %v3875 = vmul.f32 %v3871, 1.442695
    %v3876 = vpow.pop %v3875
    %v3877 = vmul.f32 %v3872, 1.442695
    %v3878 = vpow.pop %v3877
    %v3879 = vadd.f32 %v3874, 1.0
    %v3880 = vadd.f32 %v3876, 1.0
    %v3881 = vadd.f32 %v3878, 1.0
    %v3882 = vrcp.pop %v3879
    %v3883 = vmul.f32 1.0, %v3882
    %v3884 = vrcp.pop %v3880
    %v3885 = vmul.f32 1.0, %v3884
    %v3886 = vrcp.pop %v3881
    %v3887 = vmul.f32 1.0, %v3886
    %v3888 = vtanh.pop %v3869
    %v3889 = vmul.f32 %v3885, %v3721
    %v3890 = vmul.f32 %v3883, %v3888
    %v3891 = vadd.f32 %v3889, %v3890
    %v3892 = vtanh.pop %v3891
    %v3893 = vmul.f32 %v3887, %v3892
    %v3894 = vld [vmem:[#allocation2 + $0x200] sm:$0xff]
    %v3895 = vld [vmem:[#allocation2 + $0x208] sm:$0xff]
    %v3896 = vld [vmem:[#allocation2 + $0x210] sm:$0xff]
    %v3897 = vld [vmem:[#allocation2 + $0x218] sm:$0xff]
    %v3898 = vld [vmem:[#allocation2 + $0x220] sm:$0xff]
    %v3899 = vld [vmem:[#allocation2 + $0x228] sm:$0xff]
    %v3900 = vld [vmem:[#allocation2 + $0x230] sm:$0xff]
    %v3901 = vld [vmem:[#allocation2 + $0x238] sm:$0xff]
    %v3902 = vld [vmem:[#allocation2 + $0x240] sm:$0xff]
    %v3903 = vld [vmem:[#allocation2 + $0x248] sm:$0xff]
    %v3904 = vld [vmem:[#allocation2 + $0x250] sm:$0xff]
    %v3905 = vld [vmem:[#allocation2 + $0x258] sm:$0xff]
    %v3906 = vld [vmem:[#allocation2 + $0x260] sm:$0xff]
    %v3907 = vld [vmem:[#allocation2 + $0x268] sm:$0xff]
    %v3908 = vld [vmem:[#allocation2 + $0x270] sm:$0xff]
    %v3909 = vld [vmem:[#allocation2 + $0x278] sm:$0xff]
    %v3910 = vld [vmem:[#allocation2 + $0x280] sm:$0xff]
    %v3911 = vld [vmem:[#allocation2 + $0x288] sm:$0xff]
    %v3912 = vld [vmem:[#allocation2 + $0x290] sm:$0xff]
    %v3913 = vld [vmem:[#allocation2 + $0x298] sm:$0xff]
    %v3914 = vld [vmem:[#allocation2 + $0x2a0] sm:$0xff]
    %v3915 = vld [vmem:[#allocation2 + $0x2a8] sm:$0xff]
    %v3916 = vld [vmem:[#allocation2 + $0x2b0] sm:$0xff]
    %v3917 = vld [vmem:[#allocation2 + $0x2b8] sm:$0xff]
    %v3918 = vld [vmem:[#allocation2 + $0x2c0] sm:$0xff]
    %v3919 = vld [vmem:[#allocation2 + $0x2c8] sm:$0xff]
    %v3920 = vld [vmem:[#allocation2 + $0x2d0] sm:$0xff]
    %v3921 = vld [vmem:[#allocation2 + $0x2d8] sm:$0xff]
    %v3922 = vld [vmem:[#allocation2 + $0x2e0] sm:$0xff]
    %v3923 = vld [vmem:[#allocation2 + $0x2e8] sm:$0xff]
    %v3924 = vld [vmem:[#allocation2 + $0x2f0] sm:$0xff]
    %v3925 = vld [vmem:[#allocation2 + $0x2f8] sm:$0xff]
    %3926 = vmatprep.subr.mxu0 0.0
    %3927 = vmatpush1.msra.mxu0 %v3910
    %3928 = vmatprep.subr.mxu0 0.0
    %3929 = vmatpush1.msra.mxu0 %v3911
    %3930 = vmatprep.subr.mxu0 0.0
    %3931 = vmatpush1.msra.mxu0 %v3912
    %3932 = vmatprep.subr.mxu0 0.0
    %3933 = vmatpush1.msra.mxu0 %v3913
    %3934 = vmatprep.subr.mxu0 0.0
    %3935 = vmatpush1.msra.mxu0 %v3914
    %3936 = vmatprep.subr.mxu0 0.0
    %3937 = vmatpush1.msra.mxu0 %v3915
    %3938 = vmatprep.subr.mxu0 0.0
    %3939 = vmatpush1.msra.mxu0 %v3916
    %3940 = vmatprep.subr.mxu0 0.0
    %3941 = vmatpush1.msra.mxu0 %v3917
    %3942 = vmatprep.subr.mxu0 0.0
    %3943 = vmatpush1.msra.mxu0 %v3918
    %3944 = vmatprep.subr.mxu0 0.0
    %3945 = vmatpush1.msra.mxu0 %v3919
    %3946 = vmatprep.subr.mxu0 0.0
    %3947 = vmatpush1.msra.mxu0 %v3920
    %3948 = vmatprep.subr.mxu0 0.0
    %3949 = vmatpush1.msra.mxu0 %v3921
    %3950 = vmatprep.subr.mxu0 0.0
    %3951 = vmatpush1.msra.mxu0 %v3922
    %3952 = vmatprep.subr.mxu0 0.0
    %3953 = vmatpush1.msra.mxu0 %v3923
    %3954 = vmatprep.subr.mxu0 0.0
    %3955 = vmatpush1.msra.mxu0 %v3924
    %3956 = vmatprep.subr.mxu0 0.0
    %3957 = vmatpush1.msra.mxu0 %v3925
    %3958 = vmatprep.subr.mxu0 0.0
    %3959 = vmatpush1.msra.mxu0 0.0
    %3960 = vmatprep.subr.mxu0 0.0
    %3961 = vmatpush1.msra.mxu0 0.0
    %3962 = vmatprep.subr.mxu0 0.0
    %3963 = vmatpush1.msra.mxu0 0.0
    %3964 = vmatprep.subr.mxu0 0.0
    %3965 = vmatpush1.msra.mxu0 0.0
    %3966 = vmatprep.subr.mxu0 0.0
    %3967 = vmatpush1.msra.mxu0 0.0
    %3968 = vmatprep.subr.mxu0 0.0
    %3969 = vmatpush1.msra.mxu0 0.0
    %3970 = vmatprep.subr.mxu0 0.0
    %3971 = vmatpush1.msra.mxu0 0.0
    %3972 = vmatprep.subr.mxu0 0.0
    %3973 = vmatpush1.msra.mxu0 0.0
    %3974 = vmatprep.subr.mxu0 0.0
    %3975 = vmatpush1.msra.mxu0 0.0
    %3976 = vmatprep.subr.mxu0 0.0
    %3977 = vmatpush1.msra.mxu0 0.0
    %3978 = vmatprep.subr.mxu0 0.0
    %3979 = vmatpush1.msra.mxu0 0.0
    %3980 = vmatprep.subr.mxu0 0.0
    %3981 = vmatpush1.msra.mxu0 0.0
    %3982 = vmatprep.subr.mxu0 0.0
    %3983 = vmatpush1.msra.mxu0 0.0
    %3984 = vmatprep.subr.mxu0 0.0
    %3985 = vmatpush1.msra.mxu0 0.0
    %3986 = vmatprep.subr.mxu0 0.0
    %3987 = vmatpush1.msra.mxu0 0.0
    %3988 = vmatprep.subr.mxu0 0.0
    %3989 = vmatpush1.msra.mxu0 0.0
    %3990 = vmatprep.mubr.f32.mxu0 0.0
    %3991 = vmatmul.mubr.f32.gmra.mrb[0].mxu0 %v411
    %v3992 = vpop.f32.mrb[0].mxu0
    %v3993 = vadd.f32 0.0, %v3992
    %v3994 = vpop.f32.mrb[0].mxu0
    %3995 = vdwg.mxu0
    %3996 = vmatprep.subr.mxu0 0.0
    %3997 = vmatpush1.msra.mxu0 %v3894
    %3998 = vmatprep.subr.mxu0 0.0
    %3999 = vmatpush1.msra.mxu0 %v3895
    %4000 = vmatprep.subr.mxu0 0.0
    %4001 = vmatpush1.msra.mxu0 %v3896
    %4002 = vmatprep.subr.mxu0 0.0
    %4003 = vmatpush1.msra.mxu0 %v3897
    %4004 = vmatprep.subr.mxu0 0.0
    %4005 = vmatpush1.msra.mxu0 %v3898
    %4006 = vmatprep.subr.mxu0 0.0
    %4007 = vmatpush1.msra.mxu0 %v3899
    %4008 = vmatprep.subr.mxu0 0.0
    %4009 = vmatpush1.msra.mxu0 %v3900
    %4010 = vmatprep.subr.mxu0 0.0
    %4011 = vmatpush1.msra.mxu0 %v3901
    %4012 = vmatprep.subr.mxu0 0.0
    %4013 = vmatpush1.msra.mxu0 %v3902
    %4014 = vmatprep.subr.mxu0 0.0
    %4015 = vmatpush1.msra.mxu0 %v3903
    %4016 = vmatprep.subr.mxu0 0.0
    %4017 = vmatpush1.msra.mxu0 %v3904
    %4018 = vmatprep.subr.mxu0 0.0
    %4019 = vmatpush1.msra.mxu0 %v3905
    %4020 = vmatprep.subr.mxu0 0.0
    %4021 = vmatpush1.msra.mxu0 %v3906
    %4022 = vmatprep.subr.mxu0 0.0
    %4023 = vmatpush1.msra.mxu0 %v3907
    %4024 = vmatprep.subr.mxu0 0.0
    %4025 = vmatpush1.msra.mxu0 %v3908
    %4026 = vmatprep.subr.mxu0 0.0
    %4027 = vmatpush1.msra.mxu0 %v3909
    %4028 = vmatprep.subr.mxu0 0.0
    %4029 = vmatpush1.msra.mxu0 0.0
    %4030 = vmatprep.subr.mxu0 0.0
    %4031 = vmatpush1.msra.mxu0 0.0
    %4032 = vmatprep.subr.mxu0 0.0
    %4033 = vmatpush1.msra.mxu0 0.0
    %4034 = vmatprep.subr.mxu0 0.0
    %4035 = vmatpush1.msra.mxu0 0.0
    %4036 = vmatprep.subr.mxu0 0.0
    %4037 = vmatpush1.msra.mxu0 0.0
    %4038 = vmatprep.subr.mxu0 0.0
    %4039 = vmatpush1.msra.mxu0 0.0
    %4040 = vmatprep.subr.mxu0 0.0
    %4041 = vmatpush1.msra.mxu0 0.0
    %4042 = vmatprep.subr.mxu0 0.0
    %4043 = vmatpush1.msra.mxu0 0.0
    %4044 = vmatprep.subr.mxu0 0.0
    %4045 = vmatpush1.msra.mxu0 0.0
    %4046 = vmatprep.subr.mxu0 0.0
    %4047 = vmatpush1.msra.mxu0 0.0
    %4048 = vmatprep.subr.mxu0 0.0
    %4049 = vmatpush1.msra.mxu0 0.0
    %4050 = vmatprep.subr.mxu0 0.0
    %4051 = vmatpush1.msra.mxu0 0.0
    %4052 = vmatprep.subr.mxu0 0.0
    %4053 = vmatpush1.msra.mxu0 0.0
    %4054 = vmatprep.subr.mxu0 0.0
    %4055 = vmatpush1.msra.mxu0 0.0
    %4056 = vmatprep.subr.mxu0 0.0
    %4057 = vmatpush1.msra.mxu0 0.0
    %4058 = vmatprep.subr.mxu0 0.0
    %4059 = vmatpush1.msra.mxu0 0.0
    %4060 = vmatprep.mubr.f32.mxu0 0.0
    %4061 = vmatmul.mubr.f32.gmra.mrb[0].mxu0 %v226
    %v4062 = vpop.f32.mrb[0].mxu0
    %v4063 = vadd.f32 %v3993, %v4062
    %v4064 = vpop.f32.mrb[0].mxu0
    %4065 = vdwg.mxu0
    %v4066 = vld [vmem:[#allocation2 + $0x300] sm:$0xff]
    %v4067 = vld [vmem:[#allocation2 + $0x308] sm:$0xff]
    %v4068 = vld [vmem:[#allocation2 + $0x310] sm:$0xff]
    %v4069 = vld [vmem:[#allocation2 + $0x318] sm:$0xff]
    %v4070 = vld [vmem:[#allocation2 + $0x320] sm:$0xff]
    %v4071 = vld [vmem:[#allocation2 + $0x328] sm:$0xff]
    %v4072 = vld [vmem:[#allocation2 + $0x330] sm:$0xff]
    %v4073 = vld [vmem:[#allocation2 + $0x338] sm:$0xff]
    %v4074 = vld [vmem:[#allocation2 + $0x340] sm:$0xff]
    %v4075 = vld [vmem:[#allocation2 + $0x348] sm:$0xff]
    %v4076 = vld [vmem:[#allocation2 + $0x350] sm:$0xff]
    %v4077 = vld [vmem:[#allocation2 + $0x358] sm:$0xff]
    %v4078 = vld [vmem:[#allocation2 + $0x360] sm:$0xff]
    %v4079 = vld [vmem:[#allocation2 + $0x368] sm:$0xff]
    %v4080 = vld [vmem:[#allocation2 + $0x370] sm:$0xff]
    %v4081 = vld [vmem:[#allocation2 + $0x378] sm:$0xff]
    %4082 = vmatprep.subr.mxu0 0.0
    %4083 = vmatpush1.msra.mxu0 %v4066
    %4084 = vmatprep.subr.mxu0 0.0
    %4085 = vmatpush1.msra.mxu0 %v4067
    %4086 = vmatprep.subr.mxu0 0.0
    %4087 = vmatpush1.msra.mxu0 %v4068
    %4088 = vmatprep.subr.mxu0 0.0
    %4089 = vmatpush1.msra.mxu0 %v4069
    %4090 = vmatprep.subr.mxu0 0.0
    %4091 = vmatpush1.msra.mxu0 %v4070
    %4092 = vmatprep.subr.mxu0 0.0
    %4093 = vmatpush1.msra.mxu0 %v4071
    %4094 = vmatprep.subr.mxu0 0.0
    %4095 = vmatpush1.msra.mxu0 %v4072
    %4096 = vmatprep.subr.mxu0 0.0
    %4097 = vmatpush1.msra.mxu0 %v4073
    %4098 = vmatprep.subr.mxu0 0.0
    %4099 = vmatpush1.msra.mxu0 %v4074
    %4100 = vmatprep.subr.mxu0 0.0
    %4101 = vmatpush1.msra.mxu0 %v4075
    %4102 = vmatprep.subr.mxu0 0.0
    %4103 = vmatpush1.msra.mxu0 %v4076
    %4104 = vmatprep.subr.mxu0 0.0
    %4105 = vmatpush1.msra.mxu0 %v4077
    %4106 = vmatprep.subr.mxu0 0.0
    %4107 = vmatpush1.msra.mxu0 %v4078
    %4108 = vmatprep.subr.mxu0 0.0
    %4109 = vmatpush1.msra.mxu0 %v4079
    %4110 = vmatprep.subr.mxu0 0.0
    %4111 = vmatpush1.msra.mxu0 %v4080
    %4112 = vmatprep.subr.mxu0 0.0
    %4113 = vmatpush1.msra.mxu0 %v4081
    %4114 = vmatprep.subr.mxu0 0.0
    %4115 = vmatpush1.msra.mxu0 0.0
    %4116 = vmatprep.subr.mxu0 0.0
    %4117 = vmatpush1.msra.mxu0 0.0
    %4118 = vmatprep.subr.mxu0 0.0
    %4119 = vmatpush1.msra.mxu0 0.0
    %4120 = vmatprep.subr.mxu0 0.0
    %4121 = vmatpush1.msra.mxu0 0.0
    %4122 = vmatprep.subr.mxu0 0.0
    %4123 = vmatpush1.msra.mxu0 0.0
    %4124 = vmatprep.subr.mxu0 0.0
    %4125 = vmatpush1.msra.mxu0 0.0
    %4126 = vmatprep.subr.mxu0 0.0
    %4127 = vmatpush1.msra.mxu0 0.0
    %4128 = vmatprep.subr.mxu0 0.0
    %4129 = vmatpush1.msra.mxu0 0.0
    %4130 = vmatprep.subr.mxu0 0.0
    %4131 = vmatpush1.msra.mxu0 0.0
    %4132 = vmatprep.subr.mxu0 0.0
    %4133 = vmatpush1.msra.mxu0 0.0
    %4134 = vmatprep.subr.mxu0 0.0
    %4135 = vmatpush1.msra.mxu0 0.0
    %4136 = vmatprep.subr.mxu0 0.0
    %4137 = vmatpush1.msra.mxu0 0.0
    %4138 = vmatprep.subr.mxu0 0.0
    %4139 = vmatpush1.msra.mxu0 0.0
    %4140 = vmatprep.subr.mxu0 0.0
    %4141 = vmatpush1.msra.mxu0 0.0
    %4142 = vmatprep.subr.mxu0 0.0
    %4143 = vmatpush1.msra.mxu0 0.0
    %4144 = vmatprep.subr.mxu0 0.0
    %4145 = vmatpush1.msra.mxu0 0.0
    %4146 = vmatprep.mubr.f32.mxu0 0.0
    %4147 = vmatmul.mubr.f32.gmra.mrb[0].mxu0 %v3893
    %v4148 = vpop.f32.mrb[0].mxu0
    %v4149 = vadd.f32 0.0, %v4148
    %v4150 = vpop.f32.mrb[0].mxu0
    %4151 = vdwg.mxu0
    %v4152 = vadd.f32 %v4063, %v4149
    %v4153 = vld [vmem:[#allocation2 + $0x584] sm:$0x1]
    %v4154 = vlaneseq
    %v4155 = vshrl.u32 %v4154, 7
    %v4156 = vsub.s32 0, %v4155
    %v4157 = vrot.slane %v4153, %v4156
    %v4158 = vadd.f32 %v4152, %v4157
    %v4159 = vmax.f32 %v4158, 0.0
    %v4160 = vld [vmem:[#allocation2 + $0x380] sm:$0xff]
    %v4161 = vld [vmem:[#allocation2 + $0x388] sm:$0xff]
    %v4162 = vld [vmem:[#allocation2 + $0x390] sm:$0xff]
    %v4163 = vld [vmem:[#allocation2 + $0x398] sm:$0xff]
    %v4164 = vld [vmem:[#allocation2 + $0x3a0] sm:$0xff]
    %v4165 = vld [vmem:[#allocation2 + $0x3a8] sm:$0xff]
    %v4166 = vld [vmem:[#allocation2 + $0x3b0] sm:$0xff]
    %v4167 = vld [vmem:[#allocation2 + $0x3b8] sm:$0xff]
    %v4168 = vld [vmem:[#allocation2 + $0x3c0] sm:$0xff]
    %v4169 = vld [vmem:[#allocation2 + $0x3c8] sm:$0xff]
    %v4170 = vld [vmem:[#allocation2 + $0x3d0] sm:$0xff]
    %v4171 = vld [vmem:[#allocation2 + $0x3d8] sm:$0xff]
    %v4172 = vld [vmem:[#allocation2 + $0x3e0] sm:$0xff]
    %v4173 = vld [vmem:[#allocation2 + $0x3e8] sm:$0xff]
    %v4174 = vld [vmem:[#allocation2 + $0x3f0] sm:$0xff]
    %v4175 = vld [vmem:[#allocation2 + $0x3f8] sm:$0xff]
    %v4176 = vld [vmem:[#allocation2 + $0x585] sm:$0x1]
    %v4177 = vlaneseq
    %v4178 = vshrl.u32 %v4177, 7
    %v4179 = vsub.s32 0, %v4178
    %v4180 = vrot.slane %v4176, %v4179
    %4181 = vmatprep.subr.mxu0 0.0
    %4182 = vmatpush1.msra.mxu0 %v4160
    %4183 = vmatprep.subr.mxu0 0.0
    %4184 = vmatpush1.msra.mxu0 %v4161
    %4185 = vmatprep.subr.mxu0 0.0
    %4186 = vmatpush1.msra.mxu0 %v4162
    %4187 = vmatprep.subr.mxu0 0.0
    %4188 = vmatpush1.msra.mxu0 %v4163
    %4189 = vmatprep.subr.mxu0 0.0
    %4190 = vmatpush1.msra.mxu0 %v4164
    %4191 = vmatprep.subr.mxu0 0.0
    %4192 = vmatpush1.msra.mxu0 %v4165
    %4193 = vmatprep.subr.mxu0 0.0
    %4194 = vmatpush1.msra.mxu0 %v4166
    %4195 = vmatprep.subr.mxu0 0.0
    %4196 = vmatpush1.msra.mxu0 %v4167
    %4197 = vmatprep.subr.mxu0 0.0
    %4198 = vmatpush1.msra.mxu0 %v4168
    %4199 = vmatprep.subr.mxu0 0.0
    %4200 = vmatpush1.msra.mxu0 %v4169
    %4201 = vmatprep.subr.mxu0 0.0
    %4202 = vmatpush1.msra.mxu0 %v4170
    %4203 = vmatprep.subr.mxu0 0.0
    %4204 = vmatpush1.msra.mxu0 %v4171
    %4205 = vmatprep.subr.mxu0 0.0
    %4206 = vmatpush1.msra.mxu0 %v4172
    %4207 = vmatprep.subr.mxu0 0.0
    %4208 = vmatpush1.msra.mxu0 %v4173
    %4209 = vmatprep.subr.mxu0 0.0
    %4210 = vmatpush1.msra.mxu0 %v4174
    %4211 = vmatprep.subr.mxu0 0.0
    %4212 = vmatpush1.msra.mxu0 %v4175
    %4213 = vmatprep.subr.mxu0 0.0
    %4214 = vmatpush1.msra.mxu0 0.0
    %4215 = vmatprep.subr.mxu0 0.0
    %4216 = vmatpush1.msra.mxu0 0.0
    %4217 = vmatprep.subr.mxu0 0.0
    %4218 = vmatpush1.msra.mxu0 0.0
    %4219 = vmatprep.subr.mxu0 0.0
    %4220 = vmatpush1.msra.mxu0 0.0
    %4221 = vmatprep.subr.mxu0 0.0
    %4222 = vmatpush1.msra.mxu0 0.0
    %4223 = vmatprep.subr.mxu0 0.0
    %4224 = vmatpush1.msra.mxu0 0.0
    %4225 = vmatprep.subr.mxu0 0.0
    %4226 = vmatpush1.msra.mxu0 0.0
    %4227 = vmatprep.subr.mxu0 0.0
    %4228 = vmatpush1.msra.mxu0 0.0
    %4229 = vmatprep.subr.mxu0 0.0
    %4230 = vmatpush1.msra.mxu0 0.0
    %4231 = vmatprep.subr.mxu0 0.0
    %4232 = vmatpush1.msra.mxu0 0.0
    %4233 = vmatprep.subr.mxu0 0.0
    %4234 = vmatpush1.msra.mxu0 0.0
    %4235 = vmatprep.subr.mxu0 0.0
    %4236 = vmatpush1.msra.mxu0 0.0
    %4237 = vmatprep.subr.mxu0 0.0
    %4238 = vmatpush1.msra.mxu0 0.0
    %4239 = vmatprep.subr.mxu0 0.0
    %4240 = vmatpush1.msra.mxu0 0.0
    %4241 = vmatprep.subr.mxu0 0.0
    %4242 = vmatpush1.msra.mxu0 0.0
    %4243 = vmatprep.subr.mxu0 0.0
    %4244 = vmatpush1.msra.mxu0 0.0
    %4245 = vmatprep.mubr.f32.mxu0 0.0
    %4246 = vmatmul.mubr.f32.gmra.mrb[0].mxu0 %v4159
    %v4247 = vpop.f32.mrb[0].mxu0
    %v4248 = vadd.f32 %v4180, %v4247
    %v4249 = vpop.f32.mrb[0].mxu0
    %4250 = vdwg.mxu0
    %v4251 = vmax.f32 %v4248, 0.0
    %v4252 = vld [vmem:[#allocation2 + $0x400] sm:$0xff]
    %v4253 = vld [vmem:[#allocation2 + $0x408] sm:$0xff]
    %v4254 = vld [vmem:[#allocation2 + $0x410] sm:$0xff]
    %v4255 = vld [vmem:[#allocation2 + $0x418] sm:$0xff]
    %v4256 = vld [vmem:[#allocation2 + $0x420] sm:$0xff]
    %v4257 = vld [vmem:[#allocation2 + $0x428] sm:$0xff]
    %v4258 = vld [vmem:[#allocation2 + $0x430] sm:$0xff]
    %v4259 = vld [vmem:[#allocation2 + $0x438] sm:$0xff]
    %v4260 = vld [vmem:[#allocation2 + $0x440] sm:$0xff]
    %v4261 = vld [vmem:[#allocation2 + $0x448] sm:$0xff]
    %v4262 = vld [vmem:[#allocation2 + $0x450] sm:$0xff]
    %v4263 = vld [vmem:[#allocation2 + $0x458] sm:$0xff]
    %v4264 = vld [vmem:[#allocation2 + $0x460] sm:$0xff]
    %v4265 = vld [vmem:[#allocation2 + $0x468] sm:$0xff]
    %v4266 = vld [vmem:[#allocation2 + $0x470] sm:$0xff]
    %v4267 = vld [vmem:[#allocation2 + $0x478] sm:$0xff]
    %v4268 = vld [vmem:[#allocation2 + $0x586] sm:$0x1]
    %v4269 = vlaneseq
    %v4270 = vshrl.u32 %v4269, 7
    %v4271 = vsub.s32 0, %v4270
    %v4272 = vrot.slane %v4268, %v4271
    %4273 = vmatprep.subr.mxu0 0.0
    %4274 = vmatpush1.msra.mxu0 %v4252
    %4275 = vmatprep.subr.mxu0 0.0
    %4276 = vmatpush1.msra.mxu0 %v4253
    %4277 = vmatprep.subr.mxu0 0.0
    %4278 = vmatpush1.msra.mxu0 %v4254
    %4279 = vmatprep.subr.mxu0 0.0
    %4280 = vmatpush1.msra.mxu0 %v4255
    %4281 = vmatprep.subr.mxu0 0.0
    %4282 = vmatpush1.msra.mxu0 %v4256
    %4283 = vmatprep.subr.mxu0 0.0
    %4284 = vmatpush1.msra.mxu0 %v4257
    %4285 = vmatprep.subr.mxu0 0.0
    %4286 = vmatpush1.msra.mxu0 %v4258
    %4287 = vmatprep.subr.mxu0 0.0
    %4288 = vmatpush1.msra.mxu0 %v4259
    %4289 = vmatprep.subr.mxu0 0.0
    %4290 = vmatpush1.msra.mxu0 %v4260
    %4291 = vmatprep.subr.mxu0 0.0
    %4292 = vmatpush1.msra.mxu0 %v4261
    %4293 = vmatprep.subr.mxu0 0.0
    %4294 = vmatpush1.msra.mxu0 %v4262
    %4295 = vmatprep.subr.mxu0 0.0
    %4296 = vmatpush1.msra.mxu0 %v4263
    %4297 = vmatprep.subr.mxu0 0.0
    %4298 = vmatpush1.msra.mxu0 %v4264
    %4299 = vmatprep.subr.mxu0 0.0
    %4300 = vmatpush1.msra.mxu0 %v4265
    %4301 = vmatprep.subr.mxu0 0.0
    %4302 = vmatpush1.msra.mxu0 %v4266
    %4303 = vmatprep.subr.mxu0 0.0
    %4304 = vmatpush1.msra.mxu0 %v4267
    %4305 = vmatprep.subr.mxu0 0.0
    %4306 = vmatpush1.msra.mxu0 0.0
    %4307 = vmatprep.subr.mxu0 0.0
    %4308 = vmatpush1.msra.mxu0 0.0
    %4309 = vmatprep.subr.mxu0 0.0
    %4310 = vmatpush1.msra.mxu0 0.0
    %4311 = vmatprep.subr.mxu0 0.0
    %4312 = vmatpush1.msra.mxu0 0.0
    %4313 = vmatprep.subr.mxu0 0.0
    %4314 = vmatpush1.msra.mxu0 0.0
    %4315 = vmatprep.subr.mxu0 0.0
    %4316 = vmatpush1.msra.mxu0 0.0
    %4317 = vmatprep.subr.mxu0 0.0
    %4318 = vmatpush1.msra.mxu0 0.0
    %4319 = vmatprep.subr.mxu0 0.0
    %4320 = vmatpush1.msra.mxu0 0.0
    %4321 = vmatprep.subr.mxu0 0.0
    %4322 = vmatpush1.msra.mxu0 0.0
    %4323 = vmatprep.subr.mxu0 0.0
    %4324 = vmatpush1.msra.mxu0 0.0
    %4325 = vmatprep.subr.mxu0 0.0
    %4326 = vmatpush1.msra.mxu0 0.0
    %4327 = vmatprep.subr.mxu0 0.0
    %4328 = vmatpush1.msra.mxu0 0.0
    %4329 = vmatprep.subr.mxu0 0.0
    %4330 = vmatpush1.msra.mxu0 0.0
    %4331 = vmatprep.subr.mxu0 0.0
    %4332 = vmatpush1.msra.mxu0 0.0
    %4333 = vmatprep.subr.mxu0 0.0
    %4334 = vmatpush1.msra.mxu0 0.0
    %4335 = vmatprep.subr.mxu0 0.0
    %4336 = vmatpush1.msra.mxu0 0.0
    %4337 = vmatprep.mubr.f32.mxu0 0.0
    %4338 = vmatmul.mubr.f32.gmra.mrb[0].mxu0 %v4251
    %v4339 = vpop.f32.mrb[0].mxu0
    %v4340 = vadd.f32 %v4272, %v4339
    %v4341 = vpop.f32.mrb[0].mxu0
    %4342 = vdwg.mxu0
    %v4343 = vmax.f32 %v4340, 0.0
    %v4344 = vld [vmem:[#allocation2 + $0x480] sm:$0xff]
    %v4345 = vld [vmem:[#allocation2 + $0x488] sm:$0xff]
    %v4346 = vld [vmem:[#allocation2 + $0x490] sm:$0xff]
    %v4347 = vld [vmem:[#allocation2 + $0x498] sm:$0xff]
    %v4348 = vld [vmem:[#allocation2 + $0x4a0] sm:$0xff]
    %v4349 = vld [vmem:[#allocation2 + $0x4a8] sm:$0xff]
    %v4350 = vld [vmem:[#allocation2 + $0x4b0] sm:$0xff]
    %v4351 = vld [vmem:[#allocation2 + $0x4b8] sm:$0xff]
    %v4352 = vld [vmem:[#allocation2 + $0x4c0] sm:$0xff]
    %v4353 = vld [vmem:[#allocation2 + $0x4c8] sm:$0xff]
    %v4354 = vld [vmem:[#allocation2 + $0x4d0] sm:$0xff]
    %v4355 = vld [vmem:[#allocation2 + $0x4d8] sm:$0xff]
    %v4356 = vld [vmem:[#allocation2 + $0x4e0] sm:$0xff]
    %v4357 = vld [vmem:[#allocation2 + $0x4e8] sm:$0xff]
    %v4358 = vld [vmem:[#allocation2 + $0x4f0] sm:$0xff]
    %v4359 = vld [vmem:[#allocation2 + $0x4f8] sm:$0xff]
    %v4360 = vld [vmem:[#allocation2 + $0x587] sm:$0x1]
    %v4361 = vlaneseq
    %v4362 = vshrl.u32 %v4361, 7
    %v4363 = vsub.s32 0, %v4362
    %v4364 = vrot.slane %v4360, %v4363
    %4365 = vmatprep.subr.mxu0 0.0
    %4366 = vmatpush1.msra.mxu0 %v4344
    %4367 = vmatprep.subr.mxu0 0.0
    %4368 = vmatpush1.msra.mxu0 %v4345
    %4369 = vmatprep.subr.mxu0 0.0
    %4370 = vmatpush1.msra.mxu0 %v4346
    %4371 = vmatprep.subr.mxu0 0.0
    %4372 = vmatpush1.msra.mxu0 %v4347
    %4373 = vmatprep.subr.mxu0 0.0
    %4374 = vmatpush1.msra.mxu0 %v4348
    %4375 = vmatprep.subr.mxu0 0.0
    %4376 = vmatpush1.msra.mxu0 %v4349
    %4377 = vmatprep.subr.mxu0 0.0
    %4378 = vmatpush1.msra.mxu0 %v4350
    %4379 = vmatprep.subr.mxu0 0.0
    %4380 = vmatpush1.msra.mxu0 %v4351
    %4381 = vmatprep.subr.mxu0 0.0
    %4382 = vmatpush1.msra.mxu0 %v4352
    %4383 = vmatprep.subr.mxu0 0.0
    %4384 = vmatpush1.msra.mxu0 %v4353
    %4385 = vmatprep.subr.mxu0 0.0
    %4386 = vmatpush1.msra.mxu0 %v4354
    %4387 = vmatprep.subr.mxu0 0.0
    %4388 = vmatpush1.msra.mxu0 %v4355
    %4389 = vmatprep.subr.mxu0 0.0
    %4390 = vmatpush1.msra.mxu0 %v4356
    %4391 = vmatprep.subr.mxu0 0.0
    %4392 = vmatpush1.msra.mxu0 %v4357
    %4393 = vmatprep.subr.mxu0 0.0
    %4394 = vmatpush1.msra.mxu0 %v4358
    %4395 = vmatprep.subr.mxu0 0.0
    %4396 = vmatpush1.msra.mxu0 %v4359
    %4397 = vmatprep.subr.mxu0 0.0
    %4398 = vmatpush1.msra.mxu0 0.0
    %4399 = vmatprep.subr.mxu0 0.0
    %4400 = vmatpush1.msra.mxu0 0.0
    %4401 = vmatprep.subr.mxu0 0.0
    %4402 = vmatpush1.msra.mxu0 0.0
    %4403 = vmatprep.subr.mxu0 0.0
    %4404 = vmatpush1.msra.mxu0 0.0
    %4405 = vmatprep.subr.mxu0 0.0
    %4406 = vmatpush1.msra.mxu0 0.0
    %4407 = vmatprep.subr.mxu0 0.0
    %4408 = vmatpush1.msra.mxu0 0.0
    %4409 = vmatprep.subr.mxu0 0.0
    %4410 = vmatpush1.msra.mxu0 0.0
    %4411 = vmatprep.subr.mxu0 0.0
    %4412 = vmatpush1.msra.mxu0 0.0
    %4413 = vmatprep.subr.mxu0 0.0
    %4414 = vmatpush1.msra.mxu0 0.0
    %4415 = vmatprep.subr.mxu0 0.0
    %4416 = vmatpush1.msra.mxu0 0.0
    %4417 = vmatprep.subr.mxu0 0.0
    %4418 = vmatpush1.msra.mxu0 0.0
    %4419 = vmatprep.subr.mxu0 0.0
    %4420 = vmatpush1.msra.mxu0 0.0
    %4421 = vmatprep.subr.mxu0 0.0
    %4422 = vmatpush1.msra.mxu0 0.0
    %4423 = vmatprep.subr.mxu0 0.0
    %4424 = vmatpush1.msra.mxu0 0.0
    %4425 = vmatprep.subr.mxu0 0.0
    %4426 = vmatpush1.msra.mxu0 0.0
    %4427 = vmatprep.subr.mxu0 0.0
    %4428 = vmatpush1.msra.mxu0 0.0
    %4429 = vmatprep.mubr.f32.mxu0 0.0
    %4430 = vmatmul.mubr.f32.gmra.mrb[0].mxu0 %v4343
    %v4431 = vpop.f32.mrb[0].mxu0
    %v4432 = vadd.f32 %v4364, %v4431
    %v4433 = vpop.f32.mrb[0].mxu0
    %4434 = vdwg.mxu0
    %v4435 = vmax.f32 %v4432, 0.0
    %v4436 = vld [vmem:[#allocation2 + $0x500] sm:$0xff]
    %v4437 = vld [vmem:[#allocation2 + $0x508] sm:$0xff]
    %v4438 = vld [vmem:[#allocation2 + $0x510] sm:$0xff]
    %v4439 = vld [vmem:[#allocation2 + $0x518] sm:$0xff]
    %v4440 = vld [vmem:[#allocation2 + $0x520] sm:$0xff]
    %v4441 = vld [vmem:[#allocation2 + $0x528] sm:$0xff]
    %v4442 = vld [vmem:[#allocation2 + $0x530] sm:$0xff]
    %v4443 = vld [vmem:[#allocation2 + $0x538] sm:$0xff]
    %v4444 = vld [vmem:[#allocation2 + $0x540] sm:$0xff]
    %v4445 = vld [vmem:[#allocation2 + $0x548] sm:$0xff]
    %v4446 = vld [vmem:[#allocation2 + $0x550] sm:$0xff]
    %v4447 = vld [vmem:[#allocation2 + $0x558] sm:$0xff]
    %v4448 = vld [vmem:[#allocation2 + $0x560] sm:$0xff]
    %v4449 = vld [vmem:[#allocation2 + $0x568] sm:$0xff]
    %v4450 = vld [vmem:[#allocation2 + $0x570] sm:$0xff]
    %v4451 = vld [vmem:[#allocation2 + $0x578] sm:$0xff]
    %v4452 = vld [vmem:[#allocation2 + $0x588] sm:$0x1]
    %v4453 = vlaneseq
    %v4454 = vshrl.u32 %v4453, 7
    %v4455 = vsub.s32 0, %v4454
    %v4456 = vrot.slane %v4452, %v4455
    %4457 = vmatprep.subr.mxu0 0.0
    %4458 = vmatpush1.msra.mxu0 %v4436
    %4459 = vmatprep.subr.mxu0 0.0
    %4460 = vmatpush1.msra.mxu0 %v4437
    %4461 = vmatprep.subr.mxu0 0.0
    %4462 = vmatpush1.msra.mxu0 %v4438
    %4463 = vmatprep.subr.mxu0 0.0
    %4464 = vmatpush1.msra.mxu0 %v4439
    %4465 = vmatprep.subr.mxu0 0.0
    %4466 = vmatpush1.msra.mxu0 %v4440
    %4467 = vmatprep.subr.mxu0 0.0
    %4468 = vmatpush1.msra.mxu0 %v4441
    %4469 = vmatprep.subr.mxu0 0.0
    %4470 = vmatpush1.msra.mxu0 %v4442
    %4471 = vmatprep.subr.mxu0 0.0
    %4472 = vmatpush1.msra.mxu0 %v4443
    %4473 = vmatprep.subr.mxu0 0.0
    %4474 = vmatpush1.msra.mxu0 %v4444
    %4475 = vmatprep.subr.mxu0 0.0
    %4476 = vmatpush1.msra.mxu0 %v4445
    %4477 = vmatprep.subr.mxu0 0.0
    %4478 = vmatpush1.msra.mxu0 %v4446
    %4479 = vmatprep.subr.mxu0 0.0
    %4480 = vmatpush1.msra.mxu0 %v4447
    %4481 = vmatprep.subr.mxu0 0.0
    %4482 = vmatpush1.msra.mxu0 %v4448
    %4483 = vmatprep.subr.mxu0 0.0
    %4484 = vmatpush1.msra.mxu0 %v4449
    %4485 = vmatprep.subr.mxu0 0.0
    %4486 = vmatpush1.msra.mxu0 %v4450
    %4487 = vmatprep.subr.mxu0 0.0
    %4488 = vmatpush1.msra.mxu0 %v4451
    %4489 = vmatprep.subr.mxu0 0.0
    %4490 = vmatpush1.msra.mxu0 0.0
    %4491 = vmatprep.subr.mxu0 0.0
    %4492 = vmatpush1.msra.mxu0 0.0
    %4493 = vmatprep.subr.mxu0 0.0
    %4494 = vmatpush1.msra.mxu0 0.0
    %4495 = vmatprep.subr.mxu0 0.0
    %4496 = vmatpush1.msra.mxu0 0.0
    %4497 = vmatprep.subr.mxu0 0.0
    %4498 = vmatpush1.msra.mxu0 0.0
    %4499 = vmatprep.subr.mxu0 0.0
    %4500 = vmatpush1.msra.mxu0 0.0
    %4501 = vmatprep.subr.mxu0 0.0
    %4502 = vmatpush1.msra.mxu0 0.0
    %4503 = vmatprep.subr.mxu0 0.0
    %4504 = vmatpush1.msra.mxu0 0.0
    %4505 = vmatprep.subr.mxu0 0.0
    %4506 = vmatpush1.msra.mxu0 0.0
    %4507 = vmatprep.subr.mxu0 0.0
    %4508 = vmatpush1.msra.mxu0 0.0
    %4509 = vmatprep.subr.mxu0 0.0
    %4510 = vmatpush1.msra.mxu0 0.0
    %4511 = vmatprep.subr.mxu0 0.0
    %4512 = vmatpush1.msra.mxu0 0.0
    %4513 = vmatprep.subr.mxu0 0.0
    %4514 = vmatpush1.msra.mxu0 0.0
    %4515 = vmatprep.subr.mxu0 0.0
    %4516 = vmatpush1.msra.mxu0 0.0
    %4517 = vmatprep.subr.mxu0 0.0
    %4518 = vmatpush1.msra.mxu0 0.0
    %4519 = vmatprep.subr.mxu0 0.0
    %4520 = vmatpush1.msra.mxu0 0.0
    %4521 = vmatprep.mubr.f32.mxu0 0.0
    %4522 = vmatmul.mubr.f32.gmra.mrb[0].mxu0 %v4435
    %v4523 = vpop.f32.mrb[0].mxu0
    %v4524 = vadd.f32 %v4456, %v4523
    %v4525 = vpop.f32.mrb[0].mxu0
    %4526 = vdwg.mxu0
    %v4527 = vxor.u32 %v4524, 2147483648
    %v4528 = vmul.f32 %v4527, 1.442695
    %v4529 = vpow.pop %v4528
    %v4530 = vadd.f32 %v4529, 1.0
    %v4531 = vrcp.pop %v4530
    %v4532 = vmul.f32 1.0, %v4531
    %4533 = vst [vmem:[%s3] sm:$0xff] %v4532
    // Predicated region
    $region22: #{recommender_forward.1} parent=1 // pred_check
      _
    $region23: #{recommender_forward.1} parent=1 // pred_check_branch
      %4535 = sbr.rel (0) target = $region25
    $region24: #{recommender_forward.1} parent=1 // pred_region
      _
    $region25: #{recommender_forward.1} parent=1 // pred_fallthru
      _
    // Predicated region
    $region26: #{recommender_forward.1} parent=1 // pred_check
      _
    $region27: #{recommender_forward.1} parent=1 // pred_check_branch
      %4537 = sbr.rel (0) target = $region29
    $region28: #{recommender_forward.1} parent=1 // pred_region
      _
    $region29: #{recommender_forward.1} parent=1 // pred_fallthru
      _
    %4538 = vsyncpa [#allocation3], 1
    %4539 = vsyncpa [#allocation5], 1

</llo_original>
